<compile_context>
chip_gen: v7x
topology: tpu7x:2x2x1
jax: 0.10.0
libtpu: 0.0.40
codegen_flags: <defaults>
</compile_context>

<pallas_src>
import functools
import math

import jax
import jax.numpy as jnp
from jax import lax
from jax.experimental import pallas as pl
from jax.experimental.pallas import tpu as pltpu


# ----------------------------- Pallas kernel ---------------------------------
def _attention_kernel(x_ref, xp_ref, wq_ref, wk_ref, wv_ref, wsr_ref, wp_ref,
                      pv_ref, o_ref, k_scr, v_scr, *, num_heads):
    qt = pl.program_id(1)
    pv = pv_ref[...]                                   # (4, C) f32: bsr/gamma/beta/bproj

    # ---- K/V path: run once per batch element (first query tile only) ----
    @pl.when(qt == 0)
    def _compute_kv():
        # sr conv (kernel_size == stride) lowered to one patch matmul
        # (contraction dim = s*s*C), + bias, then LayerNorm(eps=1e-5) in f32.
        xk = jnp.dot(xp_ref[0], wsr_ref[...],
                     preferred_element_type=jnp.float32)            # (Nk, C)
        xk = xk + pv[0:1, :]
        mu = jnp.mean(xk, axis=-1, keepdims=True)
        var = jnp.mean((xk - mu) * (xk - mu), axis=-1, keepdims=True)
        xk = (xk - mu) * lax.rsqrt(var + 1e-5)
        xk = xk * pv[1:2, :] + pv[2:3, :]
        # Per-head K/V projections as head-batched bf16 matmuls (no lane slicing).
        xk_b = jnp.broadcast_to(xk.astype(jnp.bfloat16)[None],
                                (num_heads,) + xk.shape)            # (nh, Nk, C)
        k_scr[...] = jnp.einsum('hnc,hcd->hnd', xk_b, wk_ref[...],
                                preferred_element_type=jnp.float32
                                ).astype(k_scr.dtype)               # (nh, Nk, hd)
        v_scr[...] = jnp.einsum('hnc,hcd->hnd', xk_b, wv_ref[...],
                                preferred_element_type=jnp.float32
                                ).astype(v_scr.dtype)               # (nh, Nk, hd)

    # ---- query tile ----
    xq = x_ref[0].astype(jnp.bfloat16)                              # (tq, C)
    xq_b = jnp.broadcast_to(xq[None], (num_heads,) + xq.shape)      # (nh, tq, C)
    q = jnp.einsum('htc,hcd->htd', xq_b, wq_ref[...],
                   preferred_element_type=jnp.float32)              # scale folded in Wq

    # scores + softmax (f32 statistics, bf16 MXU operands)
    s = jnp.einsum('htd,hnd->htn', q.astype(jnp.bfloat16), k_scr[...],
                   preferred_element_type=jnp.float32)              # (nh, tq, Nk)
    s = s - jnp.max(s, axis=-1, keepdims=True)
    p = jnp.exp(s)
    p = p * pl.reciprocal(jnp.sum(p, axis=-1, keepdims=True), approx=True)

    o_h = jnp.einsum('htn,hnd->htd', p.astype(jnp.bfloat16), v_scr[...],
                     preferred_element_type=jnp.float32)            # (nh, tq, hd)
    # Output projection with per-head row blocks of Wproj, summed over heads
    # (replaces the lane-dim concatenate).
    o_hc = jnp.einsum('htd,hdc->htc', o_h.astype(jnp.bfloat16), wp_ref[...],
                      preferred_element_type=jnp.float32)           # (nh, tq, C)
    o = jnp.sum(o_hc, axis=0) + pv[3:4, :]                          # (tq, C)
    o_ref[0] = o.astype(o_ref.dtype)


# ------------------------------ wrapper ---------------------------------------
def attention_forward(x, H, W, params, *, num_heads, sr_ratio, tq=128):
    """x: (B, N, C) with N == H*W (row-major over H, W). Returns (B, N, C) f32."""
    B, N, C = x.shape
    assert N == H * W and C % num_heads == 0
    assert sr_ratio > 1, "sr_ratio == 1 (no sr conv / LayerNorm) path not wired up"
    hd = C // num_heads
    scale = hd ** (-0.5)
    s = sr_ratio
    Hk, Wk = H // s, W // s
    Nk = Hk * Wk
    P = s * s * C
    tq = min(tq, N)
    assert N % tq == 0
    n_qt = N // tq
    bf16 = jnp.bfloat16

    # sr patch extraction (Conv2d with kernel_size == stride): (B,N,C) -> (B,Nk,s*s*C),
    # emitted in bf16 (halves this path's HBM traffic).
    # NOTE: fusing this rearrangement into the kernel (strided DMA) would save one
    # extra HBM round-trip of x on bandwidth-limited chips; kept in XLA here.
    xp = x.reshape(B, Hk, s, Wk, s, C).transpose(0, 1, 3, 2, 4, 5)
    xp = xp.reshape(B, Nk, P).astype(bf16)

    # Per-head weight views (built once; weights are tiny).  The attention scale is
    # folded into Wq -- exact because qkv_bias=False.
    wq_h = ((params["wq"] * scale).reshape(C, num_heads, hd)
            .transpose(1, 0, 2).astype(bf16))                       # (nh, C, hd)
    wk_h = (params["wkv"][:, :C].reshape(C, num_heads, hd)
            .transpose(1, 0, 2).astype(bf16))                       # (nh, C, hd)
    wv_h = (params["wkv"][:, C:].reshape(C, num_heads, hd)
            .transpose(1, 0, 2).astype(bf16))                       # (nh, C, hd)
    wsr = params["wsr"].reshape(P, C).astype(bf16)                  # (P, C)
    wp_h = params["wproj"].reshape(num_heads, hd, C).astype(bf16)   # (nh, hd, C)
    # Small per-channel params stacked into one (4, C) f32 tile.
    pvec = jnp.concatenate([params["bsr"], params["gamma"],
                            params["beta"], params["bproj"]], axis=0
                           ).astype(jnp.float32)

    kern = functools.partial(_attention_kernel, num_heads=num_heads)
    full = lambda shp: pl.BlockSpec(shp, lambda b, t: (0,) * len(shp))

    out = pl.pallas_call(
        kern,
        out_shape=jax.ShapeDtypeStruct((B, N, C), jnp.float32),
        grid_spec=pltpu.PrefetchScalarGridSpec(
            num_scalar_prefetch=0,
            grid=(B, n_qt),
            in_specs=[
                pl.BlockSpec((1, tq, C), lambda b, t: (b, t, 0)),   # x  (query tile)
                pl.BlockSpec((1, Nk, P), lambda b, t: (b, 0, 0)),   # xp (once per b)
                full((num_heads, C, hd)),                           # Wq  (per-head)
                full((num_heads, C, hd)),                           # Wk
                full((num_heads, C, hd)),                           # Wv
                full((P, C)),                                       # Wsr (conv as matmul)
                full((num_heads, hd, C)),                           # Wproj (per-head)
                full((4, C)),                                       # bsr/gamma/beta/bproj
            ],
            out_specs=pl.BlockSpec((1, tq, C), lambda b, t: (b, t, 0)),
            scratch_shapes=[
                pltpu.VMEM((num_heads, Nk, hd), bf16),              # K (per batch elem)
                pltpu.VMEM((num_heads, Nk, hd), bf16),              # V (per batch elem)
            ],
        ),
        compiler_params=pltpu.CompilerParams(
            # B is megacore-parallel (>=2 parallel iterations for v7x's 2 TCs);
            # the query-tile axis must stay "arbitrary" because K/V scratch is
            # computed at qt==0 and reused across qt.
            dimension_semantics=("parallel", "arbitrary")),
    )(x, xp, wq_h, wk_h, wv_h, wsr, wp_h, pvec)
    return out


# ---------------------------- pure-JAX reference ------------------------------
def attention_reference(x, H, W, params, *, num_heads, sr_ratio):
    B, N, C = x.shape
    head_dim = C // num_heads
    scale = head_dim ** (-0.5)
    s = sr_ratio

    q = x @ params["wq"]                                            # (B,N,C)

    # sr conv with a true conv op to validate the patch-matmul lowering
    x_ = jnp.transpose(x, (0, 2, 1)).reshape(B, C, H, W)
    w_oihw = jnp.transpose(params["wsr"], (3, 2, 0, 1))             # (out,in,kh,kw)
    x_ = lax.conv_general_dilated(
        x_, w_oihw, window_strides=(s, s), padding="VALID",
        dimension_numbers=("NCHW", "OIHW", "NCHW"))
    x_ = x_ + params["bsr"].reshape(1, C, 1, 1)
    x_ = x_.reshape(B, C, -1).transpose(0, 2, 1)                    # (B,Nk,C)

    mu = x_.mean(-1, keepdims=True)
    var = ((x_ - mu) ** 2).mean(-1, keepdims=True)
    x_ = (x_ - mu) / jnp.sqrt(var + 1e-5) * params["gamma"] + params["beta"]

    kv = x_ @ params["wkv"]                                         # (B,Nk,2C)
    k, v = kv[..., :C], kv[..., C:]

    qh = q.reshape(B, N, num_heads, head_dim).transpose(0, 2, 1, 3)
    kh = k.reshape(B, -1, num_heads, head_dim).transpose(0, 2, 1, 3)
    vh = v.reshape(B, -1, num_heads, head_dim).transpose(0, 2, 1, 3)

    attn = jnp.einsum("bhnd,bhmd->bhnm", qh, kh) * scale
    attn = jax.nn.softmax(attn, axis=-1)
    o = jnp.einsum("bhnm,bhmd->bhnd", attn, vh)
    o = o.transpose(0, 2, 1, 3).reshape(B, N, C)
    return o @ params["wproj"] + params["bproj"]


# --------------------------------- main ---------------------------------------
if __name__ == "__main__":
    # Small but lane-realistic config: dim=128, heads=4 (head_dim=32), H=W=16,
    # sr_ratio=2 -> N=256 tokens, Nk=64 keys, two query tiles per batch element.
    B, H, W, C = 2, 16, 16, 128
    num_heads, sr_ratio = 4, 2
    N = H * W
    s = sr_ratio

    key = jax.random.PRNGKey(0)
    ks = jax.random.split(key, 9)
    init = lambda k, shp, fan_in: (jax.random.normal(k, shp, jnp.float32)
                                   / math.sqrt(fan_in))

    # Deterministic synthetic parameters (linear weights stored as (in, out)).
    params = {
        "wq":    init(ks[0], (C, C), C),
        "wsr":   init(ks[1], (s, s, C, C), s * s * C),   # (kh, kw, in, out)
        "bsr":   0.01 * jax.random.normal(ks[2], (1, C), jnp.float32),
        "gamma": 1.0 + 0.05 * jax.random.normal(ks[3], (1, C), jnp.float32),
        "beta":  0.05 * jax.random.normal(ks[4], (1, C), jnp.float32),
        "wkv":   init(ks[5], (C, 2 * C), C),
        "wproj": init(ks[6], (C, C), C),
        "bproj": 0.01 * jax.random.normal(ks[7], (1, C), jnp.float32),
    }
    x = jax.random.normal(ks[8], (B, N, C), jnp.float32)

    out = attention_forward(x, H, W, params, num_heads=num_heads,
                            sr_ratio=sr_ratio)
    out = jax.block_until_ready(out)
    assert out.shape == (B, N, C)

    ref = attention_reference(x, H, W, params, num_heads=num_heads,
                              sr_ratio=sr_ratio)
    # bf16 MXU operands + EUP approx reciprocal -> ~1e-2-level agreement vs f32 ref.
    rel = float(jnp.linalg.norm(out - ref) / jnp.linalg.norm(ref))
    err = float(jnp.max(jnp.abs(out - ref)))
    assert rel < 5e-2 and err < 2e-1, f"rel={rel:.5f} max_abs={err:.5f}"

    print("KERNEL_OK")
</pallas_src>

<mosaic_0001>
module attributes {stable_mosaic.version = 11 : i64} {
  func.func @_attention_kernel(%arg0: i32, %arg1: i32, %arg2: memref<1x128x128xf32, #tpu.memory_space<vmem>>, %arg3: memref<1x64x512xbf16, #tpu.memory_space<vmem>>, %arg4: memref<4x128x32xbf16, #tpu.memory_space<vmem>>, %arg5: memref<4x128x32xbf16, #tpu.memory_space<vmem>>, %arg6: memref<4x128x32xbf16, #tpu.memory_space<vmem>>, %arg7: memref<512x128xbf16, #tpu.memory_space<vmem>>, %arg8: memref<4x32x128xbf16, #tpu.memory_space<vmem>>, %arg9: memref<4x128xf32, #tpu.memory_space<vmem>>, %arg10: memref<1x128x128xf32, #tpu.memory_space<vmem>>, %arg11: memref<4x64x32xbf16, #tpu.memory_space<vmem>>, %arg12: memref<4x64x32xbf16, #tpu.memory_space<vmem>>) attributes {dimension_semantics = [#tpu.dimension_semantics<parallel>, #tpu.dimension_semantics<arbitrary>], iteration_bounds = array<i64: 2, 2>, scalar_prefetch = 0 : i64, scratch_operands = 2 : i64, tpu.core_type = #tpu.core_type<tc>, window_params = [{transform_indices = @transform_0, window_bounds = array<i64: 1, 128, 128>}, {transform_indices = @transform_1, window_bounds = array<i64: 1, 64, 512>}, {pipeline_mode = #tpu.pipeline_mode<synchronous>, transform_indices = @transform_2, window_bounds = array<i64: 4, 128, 32>}, {pipeline_mode = #tpu.pipeline_mode<synchronous>, transform_indices = @transform_3, window_bounds = array<i64: 4, 128, 32>}, {pipeline_mode = #tpu.pipeline_mode<synchronous>, transform_indices = @transform_4, window_bounds = array<i64: 4, 128, 32>}, {pipeline_mode = #tpu.pipeline_mode<synchronous>, transform_indices = @transform_5, window_bounds = array<i64: 512, 128>}, {pipeline_mode = #tpu.pipeline_mode<synchronous>, transform_indices = @transform_6, window_bounds = array<i64: 4, 32, 128>}, {pipeline_mode = #tpu.pipeline_mode<synchronous>, transform_indices = @transform_7, window_bounds = array<i64: 4, 128>}, {transform_indices = @transform_8, window_bounds = array<i64: 1, 128, 128>}]} {
    %c0 = arith.constant 0 : index
    %c0_0 = arith.constant 0 : index
    %0 = vector.load %arg9[%c0, %c0_0] : memref<4x128xf32, #tpu.memory_space<vmem>>, vector<4x128xf32>
    %c0_i32 = arith.constant 0 : i32
    %1 = arith.cmpi eq, %arg1, %c0_i32 : i32
    %2 = arith.extui %1 : i1 to i32
    %c0_i32_1 = arith.constant 0 : i32
    %3 = arith.cmpi ne, %2, %c0_i32_1 : i32
    scf.if %3 {
      %c0_26 = arith.constant 0 : index
      %c0_27 = arith.constant 0 : index
      %c0_28 = arith.constant 0 : index
      %38 = vector.load %arg3[%c0_26, %c0_27, %c0_28] : memref<1x64x512xbf16, #tpu.memory_space<vmem>>, vector<1x64x512xbf16>
      %39 = vector.shape_cast %38 : vector<1x64x512xbf16> to vector<64x512xbf16>
      %c0_29 = arith.constant 0 : index
      %c0_30 = arith.constant 0 : index
      %40 = vector.load %arg7[%c0_29, %c0_30] : memref<512x128xbf16, #tpu.memory_space<vmem>>, vector<512x128xbf16>
      %cst_31 = arith.constant dense<0.000000e+00> : vector<64x128xf32>
      %41 = tpu.matmul %39, %40, %cst_31 {dimension_numbers = #tpu.dot_dimension_numbers<[1], [0], [0], [1], [0, 0, 1, 1], [], []>} : vector<64x512xbf16>, vector<512x128xbf16>, vector<64x128xf32> -> vector<64x128xf32>
      %42 = vector.extract_strided_slice %0 {offsets = [0, 0], sizes = [1, 128], strides = [1, 1]} : vector<4x128xf32> to vector<1x128xf32>
      %43 = vector.broadcast %42 : vector<1x128xf32> to vector<64x128xf32>
      %44 = arith.addf %41, %43 : vector<64x128xf32>
      %cst_32 = arith.constant dense<0.000000e+00> : vector<64xf32>
      %45 = vector.multi_reduction <add>, %44, %cst_32 [1] : vector<64x128xf32> to vector<64xf32>
      %46 = vector.shape_cast %45 : vector<64xf32> to vector<64x1xf32>
      %cst_33 = arith.constant 1.280000e+02 : f32
      %47 = vector.broadcast %cst_33 : f32 to vector<64x1xf32>
      %48 = arith.divf %46, %47 : vector<64x1xf32>
      %49 = vector.broadcast %48 : vector<64x1xf32> to vector<64x128xf32>
      %50 = arith.subf %44, %49 : vector<64x128xf32>
      %51 = vector.broadcast %48 : vector<64x1xf32> to vector<64x128xf32>
      %52 = arith.subf %44, %51 : vector<64x128xf32>
      %53 = arith.mulf %50, %52 : vector<64x128xf32>
      %cst_34 = arith.constant dense<0.000000e+00> : vector<64xf32>
      %54 = vector.multi_reduction <add>, %53, %cst_34 [1] : vector<64x128xf32> to vector<64xf32>
      %55 = vector.shape_cast %54 : vector<64xf32> to vector<64x1xf32>
      %cst_35 = arith.constant 1.280000e+02 : f32
      %56 = vector.broadcast %cst_35 : f32 to vector<64x1xf32>
      %57 = arith.divf %55, %56 : vector<64x1xf32>
      %58 = vector.broadcast %48 : vector<64x1xf32> to vector<64x128xf32>
      %59 = arith.subf %44, %58 : vector<64x128xf32>
      %cst_36 = arith.constant 9.99999974E-6 : f32
      %60 = vector.broadcast %cst_36 : f32 to vector<64x1xf32>
      %61 = arith.addf %57, %60 : vector<64x1xf32>
      %62 = math.rsqrt %61 : vector<64x1xf32>
      %63 = vector.broadcast %62 : vector<64x1xf32> to vector<64x128xf32>
      %64 = arith.mulf %59, %63 : vector<64x128xf32>
      %65 = vector.extract_strided_slice %0 {offsets = [1, 0], sizes = [1, 128], strides = [1, 1]} : vector<4x128xf32> to vector<1x128xf32>
      %66 = vector.broadcast %65 : vector<1x128xf32> to vector<64x128xf32>
      %67 = arith.mulf %64, %66 : vector<64x128xf32>
      %68 = vector.extract_strided_slice %0 {offsets = [2, 0], sizes = [1, 128], strides = [1, 1]} : vector<4x128xf32> to vector<1x128xf32>
      %69 = vector.broadcast %68 : vector<1x128xf32> to vector<64x128xf32>
      %70 = arith.addf %67, %69 : vector<64x128xf32>
      %71 = arith.truncf %70 : vector<64x128xf32> to vector<64x128xbf16>
      %72 = vector.shape_cast %71 : vector<64x128xbf16> to vector<1x64x128xbf16>
      %73 = vector.shape_cast %72 : vector<1x64x128xbf16> to vector<1x64x128xbf16>
      %74 = vector.broadcast %73 : vector<1x64x128xbf16> to vector<4x64x128xbf16>
      %c0_37 = arith.constant 0 : index
      %c0_38 = arith.constant 0 : index
      %c0_39 = arith.constant 0 : index
      %75 = vector.load %arg5[%c0_37, %c0_38, %c0_39] : memref<4x128x32xbf16, #tpu.memory_space<vmem>>, vector<4x128x32xbf16>
      "tpu.trace_start"() <{level = 10 : i32, message = "hnc,hcd->hnd"}> : () -> ()
      %cst_40 = arith.constant dense<0.000000e+00> : vector<4x64x32xf32>
      %76 = tpu.matmul %74, %75, %cst_40 {dimension_numbers = #tpu.dot_dimension_numbers<[2], [1], [1], [2], [0, 0, 0, 1, 1, 2], [0], [0]>} : vector<4x64x128xbf16>, vector<4x128x32xbf16>, vector<4x64x32xf32> -> vector<4x64x32xf32>
      "tpu.trace_stop"() : () -> ()
      %77 = arith.truncf %76 : vector<4x64x32xf32> to vector<4x64x32xbf16>
      %c0_41 = arith.constant 0 : index
      %c0_42 = arith.constant 0 : index
      %c0_43 = arith.constant 0 : index
      %78 = vector.load %arg11[%c0_41, %c0_42, %c0_43] : memref<4x64x32xbf16, #tpu.memory_space<vmem>>, vector<4x64x32xbf16>
      tpu.vector_store %arg11[%c0_41, %c0_42, %c0_43], %77 {strides = array<i32>} : memref<4x64x32xbf16, #tpu.memory_space<vmem>>, vector<4x64x32xbf16>,
      %c0_44 = arith.constant 0 : index
      %c0_45 = arith.constant 0 : index
      %c0_46 = arith.constant 0 : index
      %79 = vector.load %arg6[%c0_44, %c0_45, %c0_46] : memref<4x128x32xbf16, #tpu.memory_space<vmem>>, vector<4x128x32xbf16>
      "tpu.trace_start"() <{level = 10 : i32, message = "hnc,hcd->hnd"}> : () -> ()
      %cst_47 = arith.constant dense<0.000000e+00> : vector<4x64x32xf32>
      %80 = tpu.matmul %74, %79, %cst_47 {dimension_numbers = #tpu.dot_dimension_numbers<[2], [1], [1], [2], [0, 0, 0, 1, 1, 2], [0], [0]>} : vector<4x64x128xbf16>, vector<4x128x32xbf16>, vector<4x64x32xf32> -> vector<4x64x32xf32>
      "tpu.trace_stop"() : () -> ()
      %81 = arith.truncf %80 : vector<4x64x32xf32> to vector<4x64x32xbf16>
      %c0_48 = arith.constant 0 : index
      %c0_49 = arith.constant 0 : index
      %c0_50 = arith.constant 0 : index
      %82 = vector.load %arg12[%c0_48, %c0_49, %c0_50] : memref<4x64x32xbf16, #tpu.memory_space<vmem>>, vector<4x64x32xbf16>
      tpu.vector_store %arg12[%c0_48, %c0_49, %c0_50], %81 {strides = array<i32>} : memref<4x64x32xbf16, #tpu.memory_space<vmem>>, vector<4x64x32xbf16>,
    } else {
    }
    %c0_2 = arith.constant 0 : index
    %c0_3 = arith.constant 0 : index
    %c0_4 = arith.constant 0 : index
    %4 = vector.load %arg2[%c0_2, %c0_3, %c0_4] : memref<1x128x128xf32, #tpu.memory_space<vmem>>, vector<1x128x128xf32>
    %5 = vector.shape_cast %4 : vector<1x128x128xf32> to vector<128x128xf32>
    %6 = arith.truncf %5 : vector<128x128xf32> to vector<128x128xbf16>
    %7 = vector.shape_cast %6 : vector<128x128xbf16> to vector<1x128x128xbf16>
    %8 = vector.shape_cast %7 : vector<1x128x128xbf16> to vector<1x128x128xbf16>
    %9 = vector.broadcast %8 : vector<1x128x128xbf16> to vector<4x128x128xbf16>
    %c0_5 = arith.constant 0 : index
    %c0_6 = arith.constant 0 : index
    %c0_7 = arith.constant 0 : index
    %10 = vector.load %arg4[%c0_5, %c0_6, %c0_7] : memref<4x128x32xbf16, #tpu.memory_space<vmem>>, vector<4x128x32xbf16>
    "tpu.trace_start"() <{level = 10 : i32, message = "htc,hcd->htd"}> : () -> ()
    %cst = arith.constant dense<0.000000e+00> : vector<4x128x32xf32>
    %11 = tpu.matmul %9, %10, %cst {dimension_numbers = #tpu.dot_dimension_numbers<[2], [1], [1], [2], [0, 0, 0, 1, 1, 2], [0], [0]>} : vector<4x128x128xbf16>, vector<4x128x32xbf16>, vector<4x128x32xf32> -> vector<4x128x32xf32>
    "tpu.trace_stop"() : () -> ()
    %12 = arith.truncf %11 : vector<4x128x32xf32> to vector<4x128x32xbf16>
    %c0_8 = arith.constant 0 : index
    %c0_9 = arith.constant 0 : index
    %c0_10 = arith.constant 0 : index
    %13 = vector.load %arg11[%c0_8, %c0_9, %c0_10] : memref<4x64x32xbf16, #tpu.memory_space<vmem>>, vector<4x64x32xbf16>
    "tpu.trace_start"() <{level = 10 : i32, message = "htd,hnd->htn"}> : () -> ()
    %cst_11 = arith.constant dense<0.000000e+00> : vector<4x128x64xf32>
    %14 = tpu.matmul %12, %13, %cst_11 {dimension_numbers = #tpu.dot_dimension_numbers<[2], [2], [1], [1], [0, 0, 0, 1, 1, 1], [0], [0]>} : vector<4x128x32xbf16>, vector<4x64x32xbf16>, vector<4x128x64xf32> -> vector<4x128x64xf32>
    "tpu.trace_stop"() : () -> ()
    %cst_12 = arith.constant dense<0xFF800000> : vector<4x128xf32>
    %15 = vector.multi_reduction <maximumf>, %14, %cst_12 [2] : vector<4x128x64xf32> to vector<4x128xf32>
    %16 = vector.shape_cast %15 : vector<4x128xf32> to vector<4x128x1xf32>
    %17 = vector.broadcast %16 : vector<4x128x1xf32> to vector<4x128x64xf32>
    %18 = arith.subf %14, %17 : vector<4x128x64xf32>
    %19 = math.exp %18 : vector<4x128x64xf32>
    %cst_13 = arith.constant dense<0.000000e+00> : vector<4x128xf32>
    %20 = vector.multi_reduction <add>, %19, %cst_13 [2] : vector<4x128x64xf32> to vector<4x128xf32>
    %21 = vector.shape_cast %20 : vector<4x128xf32> to vector<4x128x1xf32>
    %22 = tpu.reciprocal %21 {approx = true} : vector<4x128x1xf32> -> vector<4x128x1xf32>
    %23 = vector.broadcast %22 : vector<4x128x1xf32> to vector<4x128x64xf32>
    %24 = arith.mulf %19, %23 : vector<4x128x64xf32>
    %25 = arith.truncf %24 : vector<4x128x64xf32> to vector<4x128x64xbf16>
    %c0_14 = arith.constant 0 : index
    %c0_15 = arith.constant 0 : index
    %c0_16 = arith.constant 0 : index
    %26 = vector.load %arg12[%c0_14, %c0_15, %c0_16] : memref<4x64x32xbf16, #tpu.memory_space<vmem>>, vector<4x64x32xbf16>
    "tpu.trace_start"() <{level = 10 : i32, message = "htn,hnd->htd"}> : () -> ()
    %cst_17 = arith.constant dense<0.000000e+00> : vector<4x128x32xf32>
    %27 = tpu.matmul %25, %26, %cst_17 {dimension_numbers = #tpu.dot_dimension_numbers<[2], [1], [1], [2], [0, 0, 0, 1, 1, 2], [0], [0]>} : vector<4x128x64xbf16>, vector<4x64x32xbf16>, vector<4x128x32xf32> -> vector<4x128x32xf32>
    "tpu.trace_stop"() : () -> ()
    %28 = arith.truncf %27 : vector<4x128x32xf32> to vector<4x128x32xbf16>
    %c0_18 = arith.constant 0 : index
    %c0_19 = arith.constant 0 : index
    %c0_20 = arith.constant 0 : index
    %29 = vector.load %arg8[%c0_18, %c0_19, %c0_20] : memref<4x32x128xbf16, #tpu.memory_space<vmem>>, vector<4x32x128xbf16>
    "tpu.trace_start"() <{level = 10 : i32, message = "htd,hdc->htc"}> : () -> ()
    %cst_21 = arith.constant dense<0.000000e+00> : vector<4x128x128xf32>
    %30 = tpu.matmul %28, %29, %cst_21 {dimension_numbers = #tpu.dot_dimension_numbers<[2], [1], [1], [2], [0, 0, 0, 1, 1, 2], [0], [0]>} : vector<4x128x32xbf16>, vector<4x32x128xbf16>, vector<4x128x128xf32> -> vector<4x128x128xf32>
    "tpu.trace_stop"() : () -> ()
    %cst_22 = arith.constant dense<0.000000e+00> : vector<128x128xf32>
    %31 = vector.multi_reduction <add>, %30, %cst_22 [0] : vector<4x128x128xf32> to vector<128x128xf32>
    %32 = vector.extract_strided_slice %0 {offsets = [3, 0], sizes = [1, 128], strides = [1, 1]} : vector<4x128xf32> to vector<1x128xf32>
    %33 = vector.broadcast %32 : vector<1x128xf32> to vector<128x128xf32>
    %34 = arith.addf %31, %33 : vector<128x128xf32>
    %c0_23 = arith.constant 0 : index
    %c0_24 = arith.constant 0 : index
    %c0_25 = arith.constant 0 : index
    %35 = vector.load %arg10[%c0_23, %c0_24, %c0_25] : memref<1x128x128xf32, #tpu.memory_space<vmem>>, vector<1x128x128xf32>
    %36 = vector.shape_cast %35 : vector<1x128x128xf32> to vector<128x128xf32>
    %37 = vector.shape_cast %34 : vector<128x128xf32> to vector<1x128x128xf32>
    tpu.vector_store %arg10[%c0_23, %c0_24, %c0_25], %37 {strides = array<i32>} : memref<1x128x128xf32, #tpu.memory_space<vmem>>, vector<1x128x128xf32>,
    return
  }
  func.func @transform_0(%arg0: i32, %arg1: i32) -> (i32, i32, i32) {
    %c0_i32 = arith.constant 0 : i32
    %c0_i32_0 = arith.constant 0 : i32
    return %arg0, %arg1, %c0_i32 : i32, i32, i32
  }
  func.func @transform_1(%arg0: i32, %arg1: i32) -> (i32, i32, i32) {
    %c0_i32 = arith.constant 0 : i32
    %c0_i32_0 = arith.constant 0 : i32
    %c0_i32_1 = arith.constant 0 : i32
    return %arg0, %c0_i32, %c0_i32_0 : i32, i32, i32
  }
  func.func @transform_2(%arg0: i32, %arg1: i32) -> (i32, i32, i32) {
    %c0_i32 = arith.constant 0 : i32
    %c0_i32_0 = arith.constant 0 : i32
    %c0_i32_1 = arith.constant 0 : i32
    %c0_i32_2 = arith.constant 0 : i32
    return %c0_i32, %c0_i32_0, %c0_i32_1 : i32, i32, i32
  }
  func.func @transform_3(%arg0: i32, %arg1: i32) -> (i32, i32, i32) {
    %c0_i32 = arith.constant 0 : i32
    %c0_i32_0 = arith.constant 0 : i32
    %c0_i32_1 = arith.constant 0 : i32
    %c0_i32_2 = arith.constant 0 : i32
    return %c0_i32, %c0_i32_0, %c0_i32_1 : i32, i32, i32
  }
  func.func @transform_4(%arg0: i32, %arg1: i32) -> (i32, i32, i32) {
    %c0_i32 = arith.constant 0 : i32
    %c0_i32_0 = arith.constant 0 : i32
    %c0_i32_1 = arith.constant 0 : i32
    %c0_i32_2 = arith.constant 0 : i32
    return %c0_i32, %c0_i32_0, %c0_i32_1 : i32, i32, i32
  }
  func.func @transform_5(%arg0: i32, %arg1: i32) -> (i32, i32) {
    %c0_i32 = arith.constant 0 : i32
    %c0_i32_0 = arith.constant 0 : i32
    %c0_i32_1 = arith.constant 0 : i32
    return %c0_i32, %c0_i32_0 : i32, i32
  }
  func.func @transform_6(%arg0: i32, %arg1: i32) -> (i32, i32, i32) {
    %c0_i32 = arith.constant 0 : i32
    %c0_i32_0 = arith.constant 0 : i32
    %c0_i32_1 = arith.constant 0 : i32
    %c0_i32_2 = arith.constant 0 : i32
    return %c0_i32, %c0_i32_0, %c0_i32_1 : i32, i32, i32
  }
  func.func @transform_7(%arg0: i32, %arg1: i32) -> (i32, i32) {
    %c0_i32 = arith.constant 0 : i32
    %c0_i32_0 = arith.constant 0 : i32
    %c0_i32_1 = arith.constant 0 : i32
    return %c0_i32, %c0_i32_0 : i32, i32
  }
  func.func @transform_8(%arg0: i32, %arg1: i32) -> (i32, i32, i32) {
    %c0_i32 = arith.constant 0 : i32
    %c0_i32_0 = arith.constant 0 : i32
    return %arg0, %arg1, %c0_i32 : i32, i32, i32
  }
}

</mosaic_0001>

<llo_original>
// kernel: tpu_custom_call.1
$region0: #{tpu_custom_call.1}
  #allocation0 [shape = 'u32[]', space=smem, size = 0x4, offset = 0x4, fixed_abs, tag = 'smem constant byte address 0x4 - core index']
  #allocation1 [shape = 'u32[144,128]{1,0:T(1,128)}', space=vmem, size = 0x12000, scoped, tag = 'internal scratch']
  #allocation2 [shape = 'bf16[4,64,32]{2,1,0:T(16,128)(2,1)}', space=vmem, size = 0x10000, scoped, tag = 'scratch operand']
  #allocation3 [shape = 'bf16[4,64,32]{2,1,0:T(16,128)(2,1)}', space=vmem, size = 0x10000, scoped, tag = 'scratch operand']
  %s0 = inlined_call_operand.vmem [shape: f32[2,256,128], index: 0, kind: input, shape index: {}]
  %s1 = inlined_call_operand.vmem [shape: bf16[2,64,512], index: 1, kind: input, shape index: {}]
  %s2 = inlined_call_operand.vmem [shape: bf16[4,128,32], index: 2, kind: input, shape index: {}]
  %s3 = inlined_call_operand.vmem [shape: bf16[4,128,32], index: 3, kind: input, shape index: {}]
  %s4 = inlined_call_operand.vmem [shape: bf16[4,128,32], index: 4, kind: input, shape index: {}]
  %s5 = inlined_call_operand.hbm [shape: bf16[512,128], index: 5, kind: input, shape index: {}]
  %s6 = inlined_call_operand.vmem [shape: bf16[4,32,128], index: 6, kind: input, shape index: {}]
  %s7 = inlined_call_operand.vmem [shape: f32[4,128], index: 7, kind: input, shape index: {}]
  %s8 = inlined_call_operand.hbm [shape: f32[2,256,128], index: 8, kind: output, shape index: {}]
  %s9 = sld [smem:[#allocation0]]
  $region73: #{tpu_custom_call.1} parent=0
    _
  %s11 = ssub.s32 1, %s9
  %s12 = scalar_select 0, %s11, %s9
  $region1: #{tpu_custom_call.1} parent=0
    #allocation4 [shape = 'u8[131072]{0}', space=vmem, size = 0x20000, scoped, tag = 'input window, operand 5, single buffered']
    #allocation5 [shape = 's32[2]{0}', space=sflag, size = 0x8, scoped, tag = 'scoped memory for tpu_custom_call.1']
    #allocation6 [shape = 's32[2]{0}', space=sflag, size = 0x8, scoped, tag = 'scoped memory for tpu_custom_call.1']
    #allocation7 [shape = 'u8[131072]{0}', space=vmem, size = 0x20000, scoped, tag = 'output window, operand 0']
    %13 = vsyncpa [#allocation5], 0
    %14 = vsyncpa [#allocation6], 0
    %s15 = scalar_lea.sflag [#allocation6], 1
    %16 = vsyncpa %s15, 0
    loop: start=0, step=1, limit=6
    $region2: #{tpu_custom_call.1} parent=1 // loop_pre_header
      _
    $region3: #{tpu_custom_call.1} parent=1 // loop_header
      %s18 = sphi 0, %s22
      %p19 = scmp.ge.s32.totalorder %s18, 6
      %s25 = sphi 0, %s37
      %s26 = sphi 0, %s33
      %s27 = sphi 0, %s25
      %s28 = sphi 0, %s26
      %s29 = sphi 0, %s27
      %s30 = sphi 0, %s28
      %s42 = sphi 0, %s44
      %s45 = sphi 0, %s42
      %s46 = sphi 0, %s45
      %s62 = sphi 0, %s46
      %s68 = sphi 0, %s70
      %s71 = sphi 0, %s68
      %s72 = sphi 0, %s71
      %s88 = sphi 0, %s72
      %s92 = sphi 0, %s92
      %s94 = sphi 0, %s92
      %s95 = sphi 0, %s94
      %s109 = sphi 0, %s95
      %s113 = sphi 0, %s113
      %s115 = sphi 0, %s113
      %s116 = sphi 0, %s115
      %s130 = sphi 0, %s116
      %s134 = sphi 0, %s134
      %s136 = sphi 0, %s134
      %s137 = sphi 0, %s136
      %s151 = sphi 0, %s137
      %s155 = sphi 0, %s155
      %s157 = sphi 0, %s155
      %s158 = sphi 0, %s157
      %s172 = sphi 0, %s158
      %s176 = sphi 0, %s176
      %s178 = sphi 0, %s176
      %s179 = sphi 0, %s178
      %s193 = sphi 0, %s179
      %s197 = sphi 0, %s197
      %s199 = sphi 0, %s197
      %s200 = sphi 0, %s199
      %s214 = sphi 0, %s200
      %s222 = sphi 0, %s224
      %s225 = sphi 0, %s222
      %s226 = sphi 0, %s225
      %s242 = sphi 0, %s226
    $region4: #{tpu_custom_call.1} parent=1 // loop_header_branch
      %21 = sbr.rel (%p19) target = $region8
    $region5: #{tpu_custom_call.1} parent=1 // loop_body
      %s23 = ssub.s32 %s18, 1
      %s24 = ssub.s32 %s18, 2
      %s31 = sadd.s32 1, %s26
      %p32 = scmp.ge.s32.totalorder %s31, 2
      %s33 = scalar_select %p32, 0, %s31
      %s34 = sadd.s32 1, %s25
      %s35 = scalar_select %p32, %s34, %s25
      %p36 = scmp.ge.s32.totalorder %s35, 2
      %s37 = scalar_select %p36, 0, %s35
      %s38 = ssub.s32 %s25, %s37
      %s39 = ssub.s32 %s26, %s33
      %s40 = sor.u32 %s38, %s39
      %p41 = scmp.eq.s32.totalorder %s40, 0
      %s43 = sadd.s32 %s42, 1
      %s44 = scalar_select %p41, %s42, %s43
      %p47 = pneg %p41
      %p48 = scmp.eq.s32.totalorder %s18, 3
      %p49 = por %p47, %p48
      %p50 = scmp.ne.s32.totalorder %s42, %s45
      %p51 = scmp.eq.s32.totalorder %s18, 0
      %p52 = por %p50, %p51
      %p53 = scmp.ne.s32.totalorder %s42, %s45
      %p54 = scmp.eq.s32.totalorder %s23, 3
      %p55 = por %p53, %p54
      %p56 = scmp.ne.s32.totalorder %s45, %s46
      %p57 = scmp.eq.s32.totalorder %s23, 0
      %p58 = por %p56, %p57
      %p59 = scmp.ne.s32.totalorder %s45, %s46
      %p60 = scmp.eq.s32.totalorder %s24, 3
      %p61 = por %p59, %p60
      %p63 = scmp.ne.s32.totalorder %s46, %s62
      %p64 = scmp.eq.s32.totalorder %s24, 0
      %p65 = por %p63, %p64
      %s66 = ssub.s32 %s25, %s37
      %p67 = scmp.eq.s32.totalorder %s66, 0
      %s69 = sadd.s32 %s68, 1
      %s70 = scalar_select %p67, %s68, %s69
      %p73 = pneg %p67
      %p74 = scmp.eq.s32.totalorder %s18, 3
      %p75 = por %p73, %p74
      %p76 = scmp.ne.s32.totalorder %s68, %s71
      %p77 = scmp.eq.s32.totalorder %s18, 0
      %p78 = por %p76, %p77
      %p79 = scmp.ne.s32.totalorder %s68, %s71
      %p80 = scmp.eq.s32.totalorder %s23, 3
      %p81 = por %p79, %p80
      %p82 = scmp.ne.s32.totalorder %s71, %s72
      %p83 = scmp.eq.s32.totalorder %s23, 0
      %p84 = por %p82, %p83
      %p85 = scmp.ne.s32.totalorder %s71, %s72
      %p86 = scmp.eq.s32.totalorder %s24, 3
      %p87 = por %p85, %p86
      %p89 = scmp.ne.s32.totalorder %s72, %s88
      %p90 = scmp.eq.s32.totalorder %s24, 0
      %p91 = por %p89, %p90
      %s93 = sadd.s32 %s92, 1
      %p96 = scmp.eq.s32.totalorder %s18, 3
      %p97 = scmp.ne.s32.totalorder %s92, %s94
      %p98 = scmp.eq.s32.totalorder %s18, 0
      %p99 = por %p97, %p98
      %p100 = scmp.ne.s32.totalorder %s92, %s94
      %p101 = scmp.eq.s32.totalorder %s23, 3
      %p102 = por %p100, %p101
      %p103 = scmp.ne.s32.totalorder %s94, %s95
      %p104 = scmp.eq.s32.totalorder %s23, 0
      %p105 = por %p103, %p104
      %p106 = scmp.ne.s32.totalorder %s94, %s95
      %p107 = scmp.eq.s32.totalorder %s24, 3
      %p108 = por %p106, %p107
      %p110 = scmp.ne.s32.totalorder %s95, %s109
      %p111 = scmp.eq.s32.totalorder %s24, 0
      %p112 = por %p110, %p111
      %s114 = sadd.s32 %s113, 1
      %p117 = scmp.eq.s32.totalorder %s18, 3
      %p118 = scmp.ne.s32.totalorder %s113, %s115
      %p119 = scmp.eq.s32.totalorder %s18, 0
      %p120 = por %p118, %p119
      %p121 = scmp.ne.s32.totalorder %s113, %s115
      %p122 = scmp.eq.s32.totalorder %s23, 3
      %p123 = por %p121, %p122
      %p124 = scmp.ne.s32.totalorder %s115, %s116
      %p125 = scmp.eq.s32.totalorder %s23, 0
      %p126 = por %p124, %p125
      %p127 = scmp.ne.s32.totalorder %s115, %s116
      %p128 = scmp.eq.s32.totalorder %s24, 3
      %p129 = por %p127, %p128
      %p131 = scmp.ne.s32.totalorder %s116, %s130
      %p132 = scmp.eq.s32.totalorder %s24, 0
      %p133 = por %p131, %p132
      %s135 = sadd.s32 %s134, 1
      %p138 = scmp.eq.s32.totalorder %s18, 3
      %p139 = scmp.ne.s32.totalorder %s134, %s136
      %p140 = scmp.eq.s32.totalorder %s18, 0
      %p141 = por %p139, %p140
      %p142 = scmp.ne.s32.totalorder %s134, %s136
      %p143 = scmp.eq.s32.totalorder %s23, 3
      %p144 = por %p142, %p143
      %p145 = scmp.ne.s32.totalorder %s136, %s137
      %p146 = scmp.eq.s32.totalorder %s23, 0
      %p147 = por %p145, %p146
      %p148 = scmp.ne.s32.totalorder %s136, %s137
      %p149 = scmp.eq.s32.totalorder %s24, 3
      %p150 = por %p148, %p149
      %p152 = scmp.ne.s32.totalorder %s137, %s151
      %p153 = scmp.eq.s32.totalorder %s24, 0
      %p154 = por %p152, %p153
      %s156 = sadd.s32 %s155, 1
      %p159 = scmp.eq.s32.totalorder %s18, 3
      %p160 = scmp.ne.s32.totalorder %s155, %s157
      %p161 = scmp.eq.s32.totalorder %s18, 0
      %p162 = por %p160, %p161
      %p163 = scmp.ne.s32.totalorder %s155, %s157
      %p164 = scmp.eq.s32.totalorder %s23, 3
      %p165 = por %p163, %p164
      %p166 = scmp.ne.s32.totalorder %s157, %s158
      %p167 = scmp.eq.s32.totalorder %s23, 0
      %p168 = por %p166, %p167
      %p169 = scmp.ne.s32.totalorder %s157, %s158
      %p170 = scmp.eq.s32.totalorder %s24, 3
      %p171 = por %p169, %p170
      %p173 = scmp.ne.s32.totalorder %s158, %s172
      %p174 = scmp.eq.s32.totalorder %s24, 0
      %p175 = por %p173, %p174
      %s177 = sadd.s32 %s176, 1
      %p180 = scmp.eq.s32.totalorder %s18, 3
      %p181 = scmp.ne.s32.totalorder %s176, %s178
      %p182 = scmp.eq.s32.totalorder %s18, 0
      %p183 = por %p181, %p182
      %p184 = scmp.ne.s32.totalorder %s176, %s178
      %p185 = scmp.eq.s32.totalorder %s23, 3
      %p186 = por %p184, %p185
      %p187 = scmp.ne.s32.totalorder %s178, %s179
      %p188 = scmp.eq.s32.totalorder %s23, 0
      %p189 = por %p187, %p188
      %p190 = scmp.ne.s32.totalorder %s178, %s179
      %p191 = scmp.eq.s32.totalorder %s24, 3
      %p192 = por %p190, %p191
      %p194 = scmp.ne.s32.totalorder %s179, %s193
      %p195 = scmp.eq.s32.totalorder %s24, 0
      %p196 = por %p194, %p195
      %s198 = sadd.s32 %s197, 1
      %p201 = scmp.eq.s32.totalorder %s18, 3
      %p202 = scmp.ne.s32.totalorder %s197, %s199
      %p203 = scmp.eq.s32.totalorder %s18, 0
      %p204 = por %p202, %p203
      %p205 = scmp.ne.s32.totalorder %s197, %s199
      %p206 = scmp.eq.s32.totalorder %s23, 3
      %p207 = por %p205, %p206
      %p208 = scmp.ne.s32.totalorder %s199, %s200
      %p209 = scmp.eq.s32.totalorder %s23, 0
      %p210 = por %p208, %p209
      %p211 = scmp.ne.s32.totalorder %s199, %s200
      %p212 = scmp.eq.s32.totalorder %s24, 3
      %p213 = por %p211, %p212
      %p215 = scmp.ne.s32.totalorder %s200, %s214
      %p216 = scmp.eq.s32.totalorder %s24, 0
      %p217 = por %p215, %p216
      %s218 = ssub.s32 %s25, %s37
      %s219 = ssub.s32 %s26, %s33
      %s220 = sor.u32 %s218, %s219
      %p221 = scmp.eq.s32.totalorder %s220, 0
      %s223 = sadd.s32 %s222, 1
      %s224 = scalar_select %p221, %s222, %s223
      %p227 = pneg %p221
      %p228 = scmp.eq.s32.totalorder %s18, 3
      %p229 = por %p227, %p228
      %p230 = scmp.ne.s32.totalorder %s222, %s225
      %p231 = scmp.eq.s32.totalorder %s18, 0
      %p232 = por %p230, %p231
      %p233 = scmp.ne.s32.totalorder %s222, %s225
      %p234 = scmp.eq.s32.totalorder %s23, 3
      %p235 = por %p233, %p234
      %p236 = scmp.ne.s32.totalorder %s225, %s226
      %p237 = scmp.eq.s32.totalorder %s23, 0
      %p238 = por %p236, %p237
      %p239 = scmp.ne.s32.totalorder %s225, %s226
      %p240 = scmp.eq.s32.totalorder %s24, 3
      %p241 = por %p239, %p240
      %p243 = scmp.ne.s32.totalorder %s226, %s242
      %p244 = scmp.eq.s32.totalorder %s24, 0
      %p245 = por %p243, %p244
      %p246 = scmp.le.s32.totalorder 1, %s18
      %p247 = scmp.lt.s32.totalorder %s18, 5
      %p248 = pnand %p246, %p247
      %p249 = pneg %p248
      // Predicated region
      $region9: #{tpu_custom_call.1} parent=5 // pred_check
        _
      $region10: #{tpu_custom_call.1} parent=5 // pred_check_branch
        %251 = sbr.rel (%p248) target = $region12
      $region11: #{tpu_custom_call.1} parent=5 // pred_region
        %s252 = ssub.s32 %s18, 1
        // Predicated region
        $region13: #{tpu_custom_call.1} parent=11 // pred_check
          %p253 = pneg %p105
        $region14: #{tpu_custom_call.1} parent=11 // pred_check_branch
          %255 = sbr.rel (%p253) target = $region16
        $region15: #{tpu_custom_call.1} parent=11 // pred_region
          _
        $region16: #{tpu_custom_call.1} parent=11 // pred_fallthru
          _
        // Predicated region
        $region17: #{tpu_custom_call.1} parent=11 // pred_check
          %p256 = pneg %p126
        $region18: #{tpu_custom_call.1} parent=11 // pred_check_branch
          %258 = sbr.rel (%p256) target = $region20
        $region19: #{tpu_custom_call.1} parent=11 // pred_region
          _
        $region20: #{tpu_custom_call.1} parent=11 // pred_fallthru
          _
        // Predicated region
        $region21: #{tpu_custom_call.1} parent=11 // pred_check
          %p259 = pneg %p147
        $region22: #{tpu_custom_call.1} parent=11 // pred_check_branch
          %261 = sbr.rel (%p259) target = $region24
        $region23: #{tpu_custom_call.1} parent=11 // pred_region
          _
        $region24: #{tpu_custom_call.1} parent=11 // pred_fallthru
          _
        // Predicated region
        $region25: #{tpu_custom_call.1} parent=11 // pred_check
          %p262 = pneg %p168
        $region26: #{tpu_custom_call.1} parent=11 // pred_check_branch
          %264 = sbr.rel (%p262) target = $region28
        $region27: #{tpu_custom_call.1} parent=11 // pred_region
          %s266 = ssub.s32 4096, 4096
          %267 = vsyncadd [#allocation5], %s266
          %s268 = sshll.u32 [#allocation4], 4
          %s269 = int_to_ptr.vmem [resolvable:$true] %s268
          %274 = dma.hbm_to_vmem [thread:$0]  %s5, 4096, %s269, [#allocation5], 64, 64, 4
        $region28: #{tpu_custom_call.1} parent=11 // pred_fallthru
          _
        // Predicated region
        $region29: #{tpu_custom_call.1} parent=11 // pred_check
          %p275 = pneg %p189
        $region30: #{tpu_custom_call.1} parent=11 // pred_check_branch
          %277 = sbr.rel (%p275) target = $region32
        $region31: #{tpu_custom_call.1} parent=11 // pred_region
          _
        $region32: #{tpu_custom_call.1} parent=11 // pred_fallthru
          _
        // Predicated region
        $region33: #{tpu_custom_call.1} parent=11 // pred_check
          %p278 = pneg %p210
        $region34: #{tpu_custom_call.1} parent=11 // pred_check_branch
          %280 = sbr.rel (%p278) target = $region36
        $region35: #{tpu_custom_call.1} parent=11 // pred_region
          _
        $region36: #{tpu_custom_call.1} parent=11 // pred_fallthru
          _
      $region12: #{tpu_custom_call.1} parent=5 // pred_fallthru
        _
      %p281 = scmp.lt.s32.totalorder %s18, 4
      // Predicated region
      $region37: #{tpu_custom_call.1} parent=5 // pred_check
        %p282 = pneg %p281
      $region38: #{tpu_custom_call.1} parent=5 // pred_check_branch
        %284 = sbr.rel (%p282) target = $region40
      $region39: #{tpu_custom_call.1} parent=5 // pred_region
        // Predicated region
        $region41: #{tpu_custom_call.1} parent=39 // pred_check
          %p285 = pneg %p52
        $region42: #{tpu_custom_call.1} parent=39 // pred_check_branch
          %287 = sbr.rel (%p285) target = $region44
        $region43: #{tpu_custom_call.1} parent=39 // pred_region
          %s288 = smul.u32 16, %s26
          %p289 = scmp.lt.s32.totalorder %s25, 1
          %s290 = scalar_select %p289, %s25, 1
          %p291 = scmp.lt.s32.totalorder %s288, 31
          %s292 = scalar_select %p291, %s288, 31
          %s293 = smul.addr %s290, 32
          %s294 = sadd.s32 %s292, %s293
          %s295 = smul.addr %s294, 8
          %s296 = scalar_lea.vmem %s0, %s295
          %s297 = smul.u32 16, %s26
        $region44: #{tpu_custom_call.1} parent=39 // pred_fallthru
          _
        // Predicated region
        $region45: #{tpu_custom_call.1} parent=39 // pred_check
          %p298 = pneg %p78
        $region46: #{tpu_custom_call.1} parent=39 // pred_check_branch
          %300 = sbr.rel (%p298) target = $region48
        $region47: #{tpu_custom_call.1} parent=39 // pred_region
          %p301 = scmp.lt.s32.totalorder %s25, 1
          %s302 = scalar_select %p301, %s25, 1
          %s303 = smul.addr %s302, 32
          %s304 = smul.addr %s303, 4
          %s305 = scalar_lea.vmem %s1, %s304
        $region48: #{tpu_custom_call.1} parent=39 // pred_fallthru
          _
      $region40: #{tpu_custom_call.1} parent=5 // pred_fallthru
        _
      %p306 = scmp.le.s32.totalorder 1, %s18
      %p307 = scmp.lt.s32.totalorder %s18, 5
      %p308 = pnand %p306, %p307
      %p309 = pneg %p308
      // Predicated region
      $region49: #{tpu_custom_call.1} parent=5 // pred_check
        _
      $region50: #{tpu_custom_call.1} parent=5 // pred_check_branch
        %311 = sbr.rel (%p308) target = $region52
      $region51: #{tpu_custom_call.1} parent=5 // pred_region
        %s312 = ssub.s32 %s18, 1
        // Predicated region
        $region53: #{tpu_custom_call.1} parent=51 // pred_check
          %p313 = pneg %p168
        $region54: #{tpu_custom_call.1} parent=51 // pred_check_branch
          %315 = sbr.rel (%p313) target = $region56
        $region55: #{tpu_custom_call.1} parent=51 // pred_region
          %316 = dma.done [#allocation5], 4096
        $region56: #{tpu_custom_call.1} parent=51 // pred_fallthru
          _
        %s317 = smul.u32 16, %s28
        %p318 = scmp.lt.s32.totalorder %s27, 1
        %s319 = scalar_select %p318, %s27, 1
        %p320 = scmp.lt.s32.totalorder %s317, 31
        %s321 = scalar_select %p320, %s317, 31
        %s322 = smul.addr %s319, 32
        %s323 = sadd.s32 %s321, %s322
        %s324 = smul.addr %s323, 8
        %s325 = scalar_lea.vmem %s0, %s324
        %p326 = pneg %p58
        %p327 = pneg %p55
        %p328 = scmp.lt.s32.totalorder %s27, 1
        %s329 = scalar_select %p328, %s27, 1
        %s330 = smul.addr %s329, 32
        %s331 = smul.addr %s330, 4
        %s332 = scalar_lea.vmem %s1, %s331
        %p333 = pneg %p84
        %p334 = pneg %p81
        %p335 = pneg %p105
        %p336 = pneg %p102
        %p337 = pneg %p126
        %p338 = pneg %p123
        %p339 = pneg %p147
        %p340 = pneg %p144
        %p341 = pneg %p168
        %p342 = pneg %p165
        %p343 = pneg %p189
        %p344 = pneg %p186
        %p345 = pneg %p210
        %p346 = pneg %p207
        %p347 = pneg %p238
        %p348 = pneg %p235
        %s349 = sand.u32 %s225, 1
        %s350 = scalar_lea.sflag [#allocation6], %s349
        %s351 = sand.u32 %s225, 1
        %s352 = smul.addr %s351, 128
        %s353 = scalar_lea.vmem [#allocation7], %s352
        %s354 = smul.u32 16, %s28
        %p355 = scmp.lt.s32.totalorder %s27, 1
        %s356 = scalar_select %p355, %s27, 1
        %p357 = scmp.lt.s32.totalorder %s354, 31
        %s358 = scalar_select %p357, %s354, 31
        %s359 = smul.addr %s356, 32
        %s360 = sadd.s32 %s358, %s359
        %s361 = smul.addr %s360, 8
        %s362 = scalar_lea.vmem %s0, %s361
        %s363 = smul.u32 16, %s28
        %p364 = scmp.lt.s32.totalorder %s27, 1
        %s365 = scalar_select %p364, %s27, 1
        %s366 = smul.addr %s365, 32
        %s367 = smul.addr %s366, 4
        %s368 = scalar_lea.vmem %s1, %s367
        %s369 = smul.u32 16, %s28
        %v371 = vld [vmem:[%s7] sm:$0xf]
        %p372 = scmp.eq.s32.totalorder %s28, 0
        // Predicated region
        $region57: #{tpu_custom_call.1} parent=51 // pred_check
          %p373 = pneg %p372
        $region58: #{tpu_custom_call.1} parent=51 // pred_check_branch
          %375 = sbr.rel (%p373) target = $region60
        $region59: #{tpu_custom_call.1} parent=51 // pred_region
          %v376 = vld [vmem:[%s368] sm:$0xff]
          %v377 = vld [vmem:[%s368 + $0x8] sm:$0xff]
          %v378 = vld [vmem:[%s368 + $0x10] sm:$0xff]
          %v379 = vld [vmem:[%s368 + $0x18] sm:$0xff]
          %v380 = vld [vmem:[%s368 + $0x20] sm:$0xff]
          %v381 = vld [vmem:[%s368 + $0x28] sm:$0xff]
          %v382 = vld [vmem:[%s368 + $0x30] sm:$0xff]
          %v383 = vld [vmem:[%s368 + $0x38] sm:$0xff]
          %v384 = vld [vmem:[%s368 + $0x40] sm:$0xff]
          %v385 = vld [vmem:[%s368 + $0x48] sm:$0xff]
          %v386 = vld [vmem:[%s368 + $0x50] sm:$0xff]
          %v387 = vld [vmem:[%s368 + $0x58] sm:$0xff]
          %v388 = vld [vmem:[%s368 + $0x60] sm:$0xff]
          %v389 = vld [vmem:[%s368 + $0x68] sm:$0xff]
          %v390 = vld [vmem:[%s368 + $0x70] sm:$0xff]
          %v391 = vld [vmem:[%s368 + $0x78] sm:$0xff]
          %v392 = vld [vmem:[#allocation4] sm:$0xf]
          %v393 = vld [vmem:[#allocation4 + $0x4] sm:$0xf]
          %v394 = vld [vmem:[#allocation4 + $0x8] sm:$0xf]
          %v395 = vld [vmem:[#allocation4 + $0xc] sm:$0xf]
          %v396 = vld [vmem:[#allocation4 + $0x10] sm:$0xf]
          %v397 = vld [vmem:[#allocation4 + $0x14] sm:$0xf]
          %v398 = vld [vmem:[#allocation4 + $0x18] sm:$0xf]
          %v399 = vld [vmem:[#allocation4 + $0x1c] sm:$0xf]
          %v400 = vld [vmem:[#allocation4 + $0x20] sm:$0xf]
          %v401 = vld [vmem:[#allocation4 + $0x24] sm:$0xf]
          %v402 = vld [vmem:[#allocation4 + $0x28] sm:$0xf]
          %v403 = vld [vmem:[#allocation4 + $0x2c] sm:$0xf]
          %v404 = vld [vmem:[#allocation4 + $0x30] sm:$0xf]
          %v405 = vld [vmem:[#allocation4 + $0x34] sm:$0xf]
          %v406 = vld [vmem:[#allocation4 + $0x38] sm:$0xf]
          %v407 = vld [vmem:[#allocation4 + $0x3c] sm:$0xf]
          %v408 = vld [vmem:[#allocation4 + $0x40] sm:$0xf]
          %v409 = vld [vmem:[#allocation4 + $0x44] sm:$0xf]
          %v410 = vld [vmem:[#allocation4 + $0x48] sm:$0xf]
          %v411 = vld [vmem:[#allocation4 + $0x4c] sm:$0xf]
          %v412 = vld [vmem:[#allocation4 + $0x50] sm:$0xf]
          %v413 = vld [vmem:[#allocation4 + $0x54] sm:$0xf]
          %v414 = vld [vmem:[#allocation4 + $0x58] sm:$0xf]
          %v415 = vld [vmem:[#allocation4 + $0x5c] sm:$0xf]
          %v416 = vld [vmem:[#allocation4 + $0x60] sm:$0xf]
          %v417 = vld [vmem:[#allocation4 + $0x64] sm:$0xf]
          %v418 = vld [vmem:[#allocation4 + $0x68] sm:$0xf]
          %v419 = vld [vmem:[#allocation4 + $0x6c] sm:$0xf]
          %v420 = vld [vmem:[#allocation4 + $0x70] sm:$0xf]
          %v421 = vld [vmem:[#allocation4 + $0x74] sm:$0xf]
          %v422 = vld [vmem:[#allocation4 + $0x78] sm:$0xf]
          %v423 = vld [vmem:[#allocation4 + $0x7c] sm:$0xf]
          %v424 = vld [vmem:[#allocation4 + $0x80] sm:$0xf]
          %v425 = vld [vmem:[#allocation4 + $0x84] sm:$0xf]
          %v426 = vld [vmem:[#allocation4 + $0x88] sm:$0xf]
          %v427 = vld [vmem:[#allocation4 + $0x8c] sm:$0xf]
          %v428 = vld [vmem:[#allocation4 + $0x90] sm:$0xf]
          %v429 = vld [vmem:[#allocation4 + $0x94] sm:$0xf]
          %v430 = vld [vmem:[#allocation4 + $0x98] sm:$0xf]
          %v431 = vld [vmem:[#allocation4 + $0x9c] sm:$0xf]
          %v432 = vld [vmem:[#allocation4 + $0xa0] sm:$0xf]
          %v433 = vld [vmem:[#allocation4 + $0xa4] sm:$0xf]
          %v434 = vld [vmem:[#allocation4 + $0xa8] sm:$0xf]
          %v435 = vld [vmem:[#allocation4 + $0xac] sm:$0xf]
          %v436 = vld [vmem:[#allocation4 + $0xb0] sm:$0xf]
          %v437 = vld [vmem:[#allocation4 + $0xb4] sm:$0xf]
          %v438 = vld [vmem:[#allocation4 + $0xb8] sm:$0xf]
          %v439 = vld [vmem:[#allocation4 + $0xbc] sm:$0xf]
          %v440 = vld [vmem:[#allocation4 + $0xc0] sm:$0xf]
          %v441 = vld [vmem:[#allocation4 + $0xc4] sm:$0xf]
          %v442 = vld [vmem:[#allocation4 + $0xc8] sm:$0xf]
          %v443 = vld [vmem:[#allocation4 + $0xcc] sm:$0xf]
          %v444 = vld [vmem:[#allocation4 + $0xd0] sm:$0xf]
          %v445 = vld [vmem:[#allocation4 + $0xd4] sm:$0xf]
          %v446 = vld [vmem:[#allocation4 + $0xd8] sm:$0xf]
          %v447 = vld [vmem:[#allocation4 + $0xdc] sm:$0xf]
          %v448 = vld [vmem:[#allocation4 + $0xe0] sm:$0xf]
          %v449 = vld [vmem:[#allocation4 + $0xe4] sm:$0xf]
          %v450 = vld [vmem:[#allocation4 + $0xe8] sm:$0xf]
          %v451 = vld [vmem:[#allocation4 + $0xec] sm:$0xf]
          %v452 = vld [vmem:[#allocation4 + $0xf0] sm:$0xf]
          %v453 = vld [vmem:[#allocation4 + $0xf4] sm:$0xf]
          %v454 = vld [vmem:[#allocation4 + $0xf8] sm:$0xf]
          %v455 = vld [vmem:[#allocation4 + $0xfc] sm:$0xf]
          %v456 = vlaneseq
          %v457 = vshrl.u32 %v456, 7
          %v458 = vsub.s32 0, %v457
          %v459 = vrot.slane %v371, %v458
          %v476 = vunpack.c.l.b16 %v376
          %v477 = vunpack.c.h.b16 %v376
          %v478 = vunpack.c.l.b16 %v377
          %v479 = vunpack.c.h.b16 %v377
          %v480 = vunpack.c.l.b16 %v378
          %v481 = vunpack.c.h.b16 %v378
          %v482 = vunpack.c.l.b16 %v379
          %v483 = vunpack.c.h.b16 %v379
          %v484 = vunpack.c.l.b16 %v380
          %v485 = vunpack.c.h.b16 %v380
          %v486 = vunpack.c.l.b16 %v381
          %v487 = vunpack.c.h.b16 %v381
          %v488 = vunpack.c.l.b16 %v382
          %v489 = vunpack.c.h.b16 %v382
          %v490 = vunpack.c.l.b16 %v383
          %v491 = vunpack.c.h.b16 %v383
          %v492 = vunpack.c.l.b16 %v384
          %v493 = vunpack.c.h.b16 %v384
          %v494 = vunpack.c.l.b16 %v385
          %v495 = vunpack.c.h.b16 %v385
          %v496 = vunpack.c.l.b16 %v386
          %v497 = vunpack.c.h.b16 %v386
          %v498 = vunpack.c.l.b16 %v387
          %v499 = vunpack.c.h.b16 %v387
          %v500 = vunpack.c.l.b16 %v388
          %v501 = vunpack.c.h.b16 %v388
          %v502 = vunpack.c.l.b16 %v389
          %v503 = vunpack.c.h.b16 %v389
          %v504 = vunpack.c.l.b16 %v390
          %v505 = vunpack.c.h.b16 %v390
          %v506 = vunpack.c.l.b16 %v391
          %v507 = vunpack.c.h.b16 %v391
          %v508 = vpack.c.b16 %v480, %v476
          %v509 = vpack.c.b16 %v481, %v477
          %v510 = vpack.c.b16 %v482, %v478
          %v511 = vpack.c.b16 %v483, %v479
          %v512 = vpack.c.b16 %v488, %v484
          %v513 = vpack.c.b16 %v489, %v485
          %v514 = vpack.c.b16 %v490, %v486
          %v515 = vpack.c.b16 %v491, %v487
          %v516 = vpack.c.b16 %v496, %v492
          %v517 = vpack.c.b16 %v497, %v493
          %v518 = vpack.c.b16 %v498, %v494
          %v519 = vpack.c.b16 %v499, %v495
          %v520 = vpack.c.b16 %v504, %v500
          %v521 = vpack.c.b16 %v505, %v501
          %v522 = vpack.c.b16 %v506, %v502
          %v523 = vpack.c.b16 %v507, %v503
          %v604 = vunpack.c.l.b16 %v392
          %v605 = vunpack.c.l.b16 %v393
          %v606 = vunpack.c.l.b16 %v394
          %v607 = vunpack.c.l.b16 %v395
          %v608 = vunpack.c.l.b16 %v396
          %v609 = vunpack.c.l.b16 %v397
          %v610 = vunpack.c.l.b16 %v398
          %v611 = vunpack.c.l.b16 %v399
          %v612 = vunpack.c.l.b16 %v400
          %v613 = vunpack.c.l.b16 %v401
          %v614 = vunpack.c.l.b16 %v402
          %v615 = vunpack.c.l.b16 %v403
          %v616 = vunpack.c.l.b16 %v404
          %v617 = vunpack.c.l.b16 %v405
          %v618 = vunpack.c.l.b16 %v406
          %v619 = vunpack.c.l.b16 %v407
          %v620 = vunpack.c.l.b16 %v408
          %v621 = vunpack.c.l.b16 %v409
          %v622 = vunpack.c.l.b16 %v410
          %v623 = vunpack.c.l.b16 %v411
          %v624 = vunpack.c.l.b16 %v412
          %v625 = vunpack.c.l.b16 %v413
          %v626 = vunpack.c.l.b16 %v414
          %v627 = vunpack.c.l.b16 %v415
          %v628 = vunpack.c.l.b16 %v416
          %v629 = vunpack.c.l.b16 %v417
          %v630 = vunpack.c.l.b16 %v418
          %v631 = vunpack.c.l.b16 %v419
          %v632 = vunpack.c.l.b16 %v420
          %v633 = vunpack.c.l.b16 %v421
          %v634 = vunpack.c.l.b16 %v422
          %v635 = vunpack.c.l.b16 %v423
          %v636 = vunpack.c.l.b16 %v424
          %v637 = vunpack.c.l.b16 %v425
          %v638 = vunpack.c.l.b16 %v426
          %v639 = vunpack.c.l.b16 %v427
          %v640 = vunpack.c.l.b16 %v428
          %v641 = vunpack.c.l.b16 %v429
          %v642 = vunpack.c.l.b16 %v430
          %v643 = vunpack.c.l.b16 %v431
          %v644 = vunpack.c.l.b16 %v432
          %v645 = vunpack.c.l.b16 %v433
          %v646 = vunpack.c.l.b16 %v434
          %v647 = vunpack.c.l.b16 %v435
          %v648 = vunpack.c.l.b16 %v436
          %v649 = vunpack.c.l.b16 %v437
          %v650 = vunpack.c.l.b16 %v438
          %v651 = vunpack.c.l.b16 %v439
          %v652 = vunpack.c.l.b16 %v440
          %v653 = vunpack.c.l.b16 %v441
          %v654 = vunpack.c.l.b16 %v442
          %v655 = vunpack.c.l.b16 %v443
          %v656 = vunpack.c.l.b16 %v444
          %v657 = vunpack.c.l.b16 %v445
          %v658 = vunpack.c.l.b16 %v446
          %v659 = vunpack.c.l.b16 %v447
          %v660 = vunpack.c.l.b16 %v448
          %v661 = vunpack.c.l.b16 %v449
          %v662 = vunpack.c.l.b16 %v450
          %v663 = vunpack.c.l.b16 %v451
          %v664 = vunpack.c.l.b16 %v452
          %v665 = vunpack.c.l.b16 %v453
          %v666 = vunpack.c.l.b16 %v454
          %v667 = vunpack.c.l.b16 %v455
          %v668 = vpack.c.b16 %v605, %v604
          %v669 = vpack.c.b16 %v607, %v606
          %v670 = vpack.c.b16 %v609, %v608
          %v671 = vpack.c.b16 %v611, %v610
          %v672 = vpack.c.b16 %v613, %v612
          %v673 = vpack.c.b16 %v615, %v614
          %v674 = vpack.c.b16 %v617, %v616
          %v675 = vpack.c.b16 %v619, %v618
          %v676 = vpack.c.b16 %v621, %v620
          %v677 = vpack.c.b16 %v623, %v622
          %v678 = vpack.c.b16 %v625, %v624
          %v679 = vpack.c.b16 %v627, %v626
          %v680 = vpack.c.b16 %v629, %v628
          %v681 = vpack.c.b16 %v631, %v630
          %v682 = vpack.c.b16 %v633, %v632
          %v683 = vpack.c.b16 %v635, %v634
          %v684 = vpack.c.b16 %v637, %v636
          %v685 = vpack.c.b16 %v639, %v638
          %v686 = vpack.c.b16 %v641, %v640
          %v687 = vpack.c.b16 %v643, %v642
          %v688 = vpack.c.b16 %v645, %v644
          %v689 = vpack.c.b16 %v647, %v646
          %v690 = vpack.c.b16 %v649, %v648
          %v691 = vpack.c.b16 %v651, %v650
          %v692 = vpack.c.b16 %v653, %v652
          %v693 = vpack.c.b16 %v655, %v654
          %v694 = vpack.c.b16 %v657, %v656
          %v695 = vpack.c.b16 %v659, %v658
          %v696 = vpack.c.b16 %v661, %v660
          %v697 = vpack.c.b16 %v663, %v662
          %v698 = vpack.c.b16 %v665, %v664
          %v699 = vpack.c.b16 %v667, %v666
          %732 = vmatprep.subr.bf16.mxu0 0
          %733 = vmatpush1.bf16.msra.mxu0 %v668
          %734 = vmatprep.subr.bf16.mxu0 0
          %735 = vmatpush1.bf16.msra.mxu0 %v669
          %736 = vmatprep.subr.bf16.mxu0 0
          %737 = vmatpush1.bf16.msra.mxu0 %v670
          %738 = vmatprep.subr.bf16.mxu0 0
          %739 = vmatpush1.bf16.msra.mxu0 %v671
          %740 = vmatprep.subr.bf16.mxu0 0
          %741 = vmatpush1.bf16.msra.mxu0 %v672
          %742 = vmatprep.subr.bf16.mxu0 0
          %743 = vmatpush1.bf16.msra.mxu0 %v673
          %744 = vmatprep.subr.bf16.mxu0 0
          %745 = vmatpush1.bf16.msra.mxu0 %v674
          %746 = vmatprep.subr.bf16.mxu0 0
          %747 = vmatpush1.bf16.msra.mxu0 %v675
          %748 = vmatprep.subr.bf16.mxu0 0
          %749 = vmatpush1.bf16.msra.mxu0 %v676
          %750 = vmatprep.subr.bf16.mxu0 0
          %751 = vmatpush1.bf16.msra.mxu0 %v677
          %752 = vmatprep.subr.bf16.mxu0 0
          %753 = vmatpush1.bf16.msra.mxu0 %v678
          %754 = vmatprep.subr.bf16.mxu0 0
          %755 = vmatpush1.bf16.msra.mxu0 %v679
          %756 = vmatprep.subr.bf16.mxu0 0
          %757 = vmatpush1.bf16.msra.mxu0 %v680
          %758 = vmatprep.subr.bf16.mxu0 0
          %759 = vmatpush1.bf16.msra.mxu0 %v681
          %760 = vmatprep.subr.bf16.mxu0 0
          %761 = vmatpush1.bf16.msra.mxu0 %v682
          %762 = vmatprep.subr.bf16.mxu0 0
          %763 = vmatpush1.bf16.msra.mxu0 %v683
          %764 = vmatprep.mubr.bf16.mxu0 %v509
          %765 = vmatmul.mubr.bf16.gmra.mrb[0].mxu0 %v508
          %v766 = vpop.f32.mrb[0].mxu0
          %v767 = vadd.f32 %v459, %v766
          %v768 = vpop.f32.mrb[0].mxu0
          %v769 = vpop.f32.mrb[0].mxu0
          %v770 = vadd.f32 %v459, %v769
          %v771 = vpop.f32.mrb[0].mxu0
          %772 = vmatprep.mubr.bf16.mxu0 %v513
          %773 = vmatmul.mubr.bf16.gmra.mrb[0].mxu0 %v512
          %v774 = vpop.f32.mrb[0].mxu0
          %v775 = vadd.f32 %v459, %v774
          %v776 = vpop.f32.mrb[0].mxu0
          %v777 = vpop.f32.mrb[0].mxu0
          %v778 = vadd.f32 %v459, %v777
          %v779 = vpop.f32.mrb[0].mxu0
          %780 = vmatprep.mubr.bf16.mxu0 %v517
          %781 = vmatmul.mubr.bf16.gmra.mrb[0].mxu0 %v516
          %v782 = vpop.f32.mrb[0].mxu0
          %v783 = vadd.f32 %v459, %v782
          %v784 = vpop.f32.mrb[0].mxu0
          %v785 = vpop.f32.mrb[0].mxu0
          %v786 = vadd.f32 %v459, %v785
          %v787 = vpop.f32.mrb[0].mxu0
          %788 = vmatprep.mubr.bf16.mxu0 %v521
          %789 = vmatmul.mubr.bf16.gmra.mrb[0].mxu0 %v520
          %v790 = vpop.f32.mrb[0].mxu0
          %v791 = vadd.f32 %v459, %v790
          %v792 = vpop.f32.mrb[0].mxu0
          %v793 = vpop.f32.mrb[0].mxu0
          %v794 = vadd.f32 %v459, %v793
          %v795 = vpop.f32.mrb[0].mxu0
          %796 = vdwg.mxu0
          %797 = vmatprep.subr.bf16.mxu0 0
          %798 = vmatpush1.bf16.msra.mxu0 %v684
          %799 = vmatprep.subr.bf16.mxu0 0
          %800 = vmatpush1.bf16.msra.mxu0 %v685
          %801 = vmatprep.subr.bf16.mxu0 0
          %802 = vmatpush1.bf16.msra.mxu0 %v686
          %803 = vmatprep.subr.bf16.mxu0 0
          %804 = vmatpush1.bf16.msra.mxu0 %v687
          %805 = vmatprep.subr.bf16.mxu0 0
          %806 = vmatpush1.bf16.msra.mxu0 %v688
          %807 = vmatprep.subr.bf16.mxu0 0
          %808 = vmatpush1.bf16.msra.mxu0 %v689
          %809 = vmatprep.subr.bf16.mxu0 0
          %810 = vmatpush1.bf16.msra.mxu0 %v690
          %811 = vmatprep.subr.bf16.mxu0 0
          %812 = vmatpush1.bf16.msra.mxu0 %v691
          %813 = vmatprep.subr.bf16.mxu0 0
          %814 = vmatpush1.bf16.msra.mxu0 %v692
          %815 = vmatprep.subr.bf16.mxu0 0
          %816 = vmatpush1.bf16.msra.mxu0 %v693
          %817 = vmatprep.subr.bf16.mxu0 0
          %818 = vmatpush1.bf16.msra.mxu0 %v694
          %819 = vmatprep.subr.bf16.mxu0 0
          %820 = vmatpush1.bf16.msra.mxu0 %v695
          %821 = vmatprep.subr.bf16.mxu0 0
          %822 = vmatpush1.bf16.msra.mxu0 %v696
          %823 = vmatprep.subr.bf16.mxu0 0
          %824 = vmatpush1.bf16.msra.mxu0 %v697
          %825 = vmatprep.subr.bf16.mxu0 0
          %826 = vmatpush1.bf16.msra.mxu0 %v698
          %827 = vmatprep.subr.bf16.mxu0 0
          %828 = vmatpush1.bf16.msra.mxu0 %v699
          %829 = vmatprep.mubr.bf16.mxu0 %v511
          %830 = vmatmul.mubr.bf16.gmra.mrb[0].mxu0 %v510
          %v831 = vpop.f32.mrb[0].mxu0
          %v832 = vadd.f32 %v767, %v831
          %v833 = vpop.f32.mrb[0].mxu0
          %v834 = vpop.f32.mrb[0].mxu0
          %v835 = vadd.f32 %v770, %v834
          %v836 = vpop.f32.mrb[0].mxu0
          %837 = vmatprep.mubr.bf16.mxu0 %v515
          %838 = vmatmul.mubr.bf16.gmra.mrb[0].mxu0 %v514
          %v839 = vpop.f32.mrb[0].mxu0
          %v840 = vadd.f32 %v775, %v839
          %v841 = vpop.f32.mrb[0].mxu0
          %v842 = vpop.f32.mrb[0].mxu0
          %v843 = vadd.f32 %v778, %v842
          %v844 = vpop.f32.mrb[0].mxu0
          %845 = vmatprep.mubr.bf16.mxu0 %v519
          %846 = vmatmul.mubr.bf16.gmra.mrb[0].mxu0 %v518
          %v847 = vpop.f32.mrb[0].mxu0
          %v848 = vadd.f32 %v783, %v847
          %v849 = vpop.f32.mrb[0].mxu0
          %v850 = vpop.f32.mrb[0].mxu0
          %v851 = vadd.f32 %v786, %v850
          %v852 = vpop.f32.mrb[0].mxu0
          %853 = vmatprep.mubr.bf16.mxu0 %v523
          %854 = vmatmul.mubr.bf16.gmra.mrb[0].mxu0 %v522
          %v855 = vpop.f32.mrb[0].mxu0
          %v856 = vadd.f32 %v791, %v855
          %v857 = vpop.f32.mrb[0].mxu0
          %v858 = vpop.f32.mrb[0].mxu0
          %v859 = vadd.f32 %v794, %v858
          %v860 = vpop.f32.mrb[0].mxu0
          %861 = vdwg.mxu0
          %862 = vadd.xlane.f32.xlu0 %v832
          %v863 = vpop.xlane.xlu0 %862
          %864 = vadd.xlane.f32.xlu0 %v835
          %v865 = vpop.xlane.xlu0 %864
          %866 = vadd.xlane.f32.xlu0 %v840
          %v867 = vpop.xlane.xlu0 %866
          %868 = vadd.xlane.f32.xlu0 %v843
          %v869 = vpop.xlane.xlu0 %868
          %870 = vadd.xlane.f32.xlu0 %v848
          %v871 = vpop.xlane.xlu0 %870
          %872 = vadd.xlane.f32.xlu0 %v851
          %v873 = vpop.xlane.xlu0 %872
          %874 = vadd.xlane.f32.xlu0 %v856
          %v875 = vpop.xlane.xlu0 %874
          %876 = vadd.xlane.f32.xlu0 %v859
          %v877 = vpop.xlane.xlu0 %876
          %v878 = vrcp.pop 128.0
          %v879 = vmul.f32 %v863, %v878
          %v880 = vmul.f32 %v865, %v878
          %v881 = vmul.f32 %v867, %v878
          %v882 = vmul.f32 %v869, %v878
          %v883 = vmul.f32 %v871, %v878
          %v884 = vmul.f32 %v873, %v878
          %v885 = vmul.f32 %v875, %v878
          %v886 = vmul.f32 %v877, %v878
          %v887 = vsub.f32 %v832, %v879
          %v888 = vsub.f32 %v835, %v880
          %v889 = vsub.f32 %v840, %v881
          %v890 = vsub.f32 %v843, %v882
          %v891 = vsub.f32 %v848, %v883
          %v892 = vsub.f32 %v851, %v884
          %v893 = vsub.f32 %v856, %v885
          %v894 = vsub.f32 %v859, %v886
          %v895 = vmul.f32 %v887, %v887
          %v896 = vmul.f32 %v888, %v888
          %v897 = vmul.f32 %v889, %v889
          %v898 = vmul.f32 %v890, %v890
          %v899 = vmul.f32 %v891, %v891
          %v900 = vmul.f32 %v892, %v892
          %v901 = vmul.f32 %v893, %v893
          %v902 = vmul.f32 %v894, %v894
          %903 = vadd.xlane.f32.xlu0 %v895
          %v904 = vpop.xlane.xlu0 %903
          %905 = vadd.xlane.f32.xlu0 %v896
          %v906 = vpop.xlane.xlu0 %905
          %907 = vadd.xlane.f32.xlu0 %v897
          %v908 = vpop.xlane.xlu0 %907
          %909 = vadd.xlane.f32.xlu0 %v898
          %v910 = vpop.xlane.xlu0 %909
          %911 = vadd.xlane.f32.xlu0 %v899
          %v912 = vpop.xlane.xlu0 %911
          %913 = vadd.xlane.f32.xlu0 %v900
          %v914 = vpop.xlane.xlu0 %913
          %915 = vadd.xlane.f32.xlu0 %v901
          %v916 = vpop.xlane.xlu0 %915
          %917 = vadd.xlane.f32.xlu0 %v902
          %v918 = vpop.xlane.xlu0 %917
          %v919 = vmul.f32 %v904, %v878
          %v920 = vmul.f32 %v906, %v878
          %v921 = vmul.f32 %v908, %v878
          %v922 = vmul.f32 %v910, %v878
          %v923 = vmul.f32 %v912, %v878
          %v924 = vmul.f32 %v914, %v878
          %v925 = vmul.f32 %v916, %v878
          %v926 = vmul.f32 %v918, %v878
          %v927 = vadd.f32 %v919, 1e-05
          %v928 = vadd.f32 %v920, 1e-05
          %v929 = vadd.f32 %v921, 1e-05
          %v930 = vadd.f32 %v922, 1e-05
          %v931 = vadd.f32 %v923, 1e-05
          %v932 = vadd.f32 %v924, 1e-05
          %v933 = vadd.f32 %v925, 1e-05
          %v934 = vadd.f32 %v926, 1e-05
          %v935 = vrsqrt.pop %v927
          %v936 = vrsqrt.pop %v928
          %v937 = vrsqrt.pop %v929
          %v938 = vrsqrt.pop %v930
          %v939 = vrsqrt.pop %v931
          %v940 = vrsqrt.pop %v932
          %v941 = vrsqrt.pop %v933
          %v942 = vrsqrt.pop %v934
          %v943 = vmul.f32 %v887, %v935
          %v944 = vmul.f32 %v888, %v936
          %v945 = vmul.f32 %v889, %v937
          %v946 = vmul.f32 %v890, %v938
          %v947 = vmul.f32 %v891, %v939
          %v948 = vmul.f32 %v892, %v940
          %v949 = vmul.f32 %v893, %v941
          %v950 = vmul.f32 %v894, %v942
          %v951 = vlaneseq
          %v952 = vshrl.u32 %v951, 7
          %v953 = vsub.s32 1, %v952
          %v954 = vrot.slane %v371, %v953
          %v955 = vmul.f32 %v943, %v954
          %v956 = vmul.f32 %v944, %v954
          %v957 = vmul.f32 %v945, %v954
          %v958 = vmul.f32 %v946, %v954
          %v959 = vmul.f32 %v947, %v954
          %v960 = vmul.f32 %v948, %v954
          %v961 = vmul.f32 %v949, %v954
          %v962 = vmul.f32 %v950, %v954
          %v963 = vlaneseq
          %v964 = vshrl.u32 %v963, 7
          %v965 = vsub.s32 2, %v964
          %v966 = vrot.slane %v371, %v965
          %v967 = vadd.f32 %v955, %v966
          %v968 = vadd.f32 %v956, %v966
          %v969 = vadd.f32 %v957, %v966
          %v970 = vadd.f32 %v958, %v966
          %v971 = vadd.f32 %v959, %v966
          %v972 = vadd.f32 %v960, %v966
          %v973 = vadd.f32 %v961, %v966
          %v974 = vadd.f32 %v962, %v966
          %v975 = vpack.c.bf16 %v968, %v967
          %v976 = vpack.c.bf16 %v970, %v969
          %v977 = vpack.c.bf16 %v972, %v971
          %v978 = vpack.c.bf16 %v974, %v973
          %v979 = vld [vmem:[%s3] sm:$0xf]
          %v980 = vld [vmem:[%s3 + $0x4] sm:$0xf]
          %v981 = vld [vmem:[%s3 + $0x8] sm:$0xf]
          %v982 = vld [vmem:[%s3 + $0xc] sm:$0xf]
          %v983 = vld [vmem:[%s3 + $0x10] sm:$0xf]
          %v984 = vld [vmem:[%s3 + $0x14] sm:$0xf]
          %v985 = vld [vmem:[%s3 + $0x18] sm:$0xf]
          %v986 = vld [vmem:[%s3 + $0x1c] sm:$0xf]
          %v987 = vld [vmem:[%s3 + $0x20] sm:$0xf]
          %v988 = vld [vmem:[%s3 + $0x24] sm:$0xf]
          %v989 = vld [vmem:[%s3 + $0x28] sm:$0xf]
          %v990 = vld [vmem:[%s3 + $0x2c] sm:$0xf]
          %v991 = vld [vmem:[%s3 + $0x30] sm:$0xf]
          %v992 = vld [vmem:[%s3 + $0x34] sm:$0xf]
          %v993 = vld [vmem:[%s3 + $0x38] sm:$0xf]
          %v994 = vld [vmem:[%s3 + $0x3c] sm:$0xf]
          %v995 = vld [vmem:[%s3 + $0x40] sm:$0xf]
          %v996 = vld [vmem:[%s3 + $0x44] sm:$0xf]
          %v997 = vld [vmem:[%s3 + $0x48] sm:$0xf]
          %v998 = vld [vmem:[%s3 + $0x4c] sm:$0xf]
          %v999 = vld [vmem:[%s3 + $0x50] sm:$0xf]
          %v1000 = vld [vmem:[%s3 + $0x54] sm:$0xf]
          %v1001 = vld [vmem:[%s3 + $0x58] sm:$0xf]
          %v1002 = vld [vmem:[%s3 + $0x5c] sm:$0xf]
          %v1003 = vld [vmem:[%s3 + $0x60] sm:$0xf]
          %v1004 = vld [vmem:[%s3 + $0x64] sm:$0xf]
          %v1005 = vld [vmem:[%s3 + $0x68] sm:$0xf]
          %v1006 = vld [vmem:[%s3 + $0x6c] sm:$0xf]
          %v1007 = vld [vmem:[%s3 + $0x70] sm:$0xf]
          %v1008 = vld [vmem:[%s3 + $0x74] sm:$0xf]
          %v1009 = vld [vmem:[%s3 + $0x78] sm:$0xf]
          %v1010 = vld [vmem:[%s3 + $0x7c] sm:$0xf]
          %v1011 = vld [vmem:[%s3 + $0x80] sm:$0xf]
          %v1012 = vld [vmem:[%s3 + $0x84] sm:$0xf]
          %v1013 = vld [vmem:[%s3 + $0x88] sm:$0xf]
          %v1014 = vld [vmem:[%s3 + $0x8c] sm:$0xf]
          %v1015 = vld [vmem:[%s3 + $0x90] sm:$0xf]
          %v1016 = vld [vmem:[%s3 + $0x94] sm:$0xf]
          %v1017 = vld [vmem:[%s3 + $0x98] sm:$0xf]
          %v1018 = vld [vmem:[%s3 + $0x9c] sm:$0xf]
          %v1019 = vld [vmem:[%s3 + $0xa0] sm:$0xf]
          %v1020 = vld [vmem:[%s3 + $0xa4] sm:$0xf]
          %v1021 = vld [vmem:[%s3 + $0xa8] sm:$0xf]
          %v1022 = vld [vmem:[%s3 + $0xac] sm:$0xf]
          %v1023 = vld [vmem:[%s3 + $0xb0] sm:$0xf]
          %v1024 = vld [vmem:[%s3 + $0xb4] sm:$0xf]
          %v1025 = vld [vmem:[%s3 + $0xb8] sm:$0xf]
          %v1026 = vld [vmem:[%s3 + $0xbc] sm:$0xf]
          %v1027 = vld [vmem:[%s3 + $0xc0] sm:$0xf]
          %v1028 = vld [vmem:[%s3 + $0xc4] sm:$0xf]
          %v1029 = vld [vmem:[%s3 + $0xc8] sm:$0xf]
          %v1030 = vld [vmem:[%s3 + $0xcc] sm:$0xf]
          %v1031 = vld [vmem:[%s3 + $0xd0] sm:$0xf]
          %v1032 = vld [vmem:[%s3 + $0xd4] sm:$0xf]
          %v1033 = vld [vmem:[%s3 + $0xd8] sm:$0xf]
          %v1034 = vld [vmem:[%s3 + $0xdc] sm:$0xf]
          %v1035 = vld [vmem:[%s3 + $0xe0] sm:$0xf]
          %v1036 = vld [vmem:[%s3 + $0xe4] sm:$0xf]
          %v1037 = vld [vmem:[%s3 + $0xe8] sm:$0xf]
          %v1038 = vld [vmem:[%s3 + $0xec] sm:$0xf]
          %v1039 = vld [vmem:[%s3 + $0xf0] sm:$0xf]
          %v1040 = vld [vmem:[%s3 + $0xf4] sm:$0xf]
          %v1041 = vld [vmem:[%s3 + $0xf8] sm:$0xf]
          %v1042 = vld [vmem:[%s3 + $0xfc] sm:$0xf]
          %v1059 = vunpack.c.l.b16 %v979
          %v1060 = vunpack.c.l.b16 %v980
          %v1061 = vunpack.c.l.b16 %v981
          %v1062 = vunpack.c.l.b16 %v982
          %v1063 = vunpack.c.l.b16 %v983
          %v1064 = vunpack.c.l.b16 %v984
          %v1065 = vunpack.c.l.b16 %v985
          %v1066 = vunpack.c.l.b16 %v986
          %v1067 = vunpack.c.l.b16 %v987
          %v1068 = vunpack.c.l.b16 %v988
          %v1069 = vunpack.c.l.b16 %v989
          %v1070 = vunpack.c.l.b16 %v990
          %v1071 = vunpack.c.l.b16 %v991
          %v1072 = vunpack.c.l.b16 %v992
          %v1073 = vunpack.c.l.b16 %v993
          %v1074 = vunpack.c.l.b16 %v994
          %v1075 = vpack.c.b16 %v1060, %v1059
          %v1076 = vpack.c.b16 %v1062, %v1061
          %v1077 = vpack.c.b16 %v1064, %v1063
          %v1078 = vpack.c.b16 %v1066, %v1065
          %v1079 = vpack.c.b16 %v1068, %v1067
          %v1080 = vpack.c.b16 %v1070, %v1069
          %v1081 = vpack.c.b16 %v1072, %v1071
          %v1082 = vpack.c.b16 %v1074, %v1073
          %1091 = vmatprep.subr.bf16.mxu0 0
          %1092 = vmatpush1.bf16.msra.mxu0 %v1075
          %1093 = vmatprep.subr.bf16.mxu0 0
          %1094 = vmatpush1.bf16.msra.mxu0 %v1076
          %1095 = vmatprep.subr.bf16.mxu0 0
          %1096 = vmatpush1.bf16.msra.mxu0 %v1077
          %1097 = vmatprep.subr.bf16.mxu0 0
          %1098 = vmatpush1.bf16.msra.mxu0 %v1078
          %1099 = vmatprep.subr.bf16.mxu0 0
          %1100 = vmatpush1.bf16.msra.mxu0 %v1079
          %1101 = vmatprep.subr.bf16.mxu0 0
          %1102 = vmatpush1.bf16.msra.mxu0 %v1080
          %1103 = vmatprep.subr.bf16.mxu0 0
          %1104 = vmatpush1.bf16.msra.mxu0 %v1081
          %1105 = vmatprep.subr.bf16.mxu0 0
          %1106 = vmatpush1.bf16.msra.mxu0 %v1082
          %1107 = vmatprep.subr.bf16.mxu0 0
          %1108 = vmatpush1.bf16.msra.mxu0 0
          %1109 = vmatprep.subr.bf16.mxu0 0
          %1110 = vmatpush1.bf16.msra.mxu0 0
          %1111 = vmatprep.subr.bf16.mxu0 0
          %1112 = vmatpush1.bf16.msra.mxu0 0
          %1113 = vmatprep.subr.bf16.mxu0 0
          %1114 = vmatpush1.bf16.msra.mxu0 0
          %1115 = vmatprep.subr.bf16.mxu0 0
          %1116 = vmatpush1.bf16.msra.mxu0 0
          %1117 = vmatprep.subr.bf16.mxu0 0
          %1118 = vmatpush1.bf16.msra.mxu0 0
          %1119 = vmatprep.subr.bf16.mxu0 0
          %1120 = vmatpush1.bf16.msra.mxu0 0
          %1121 = vmatprep.subr.bf16.mxu0 0
          %1122 = vmatpush1.bf16.msra.mxu0 0
          %1123 = vmatprep.mubr.bf16.mxu0 0
          %1124 = vmatmul.mubr.bf16.gmra.mrb[0].mxu0 %v975
          %v1125 = vpop.f32.mrb[0].mxu0
          %v1126 = vadd.f32 0.0, %v1125
          %v1127 = vpop.f32.mrb[0].mxu0
          %v1128 = vpop.f32.mrb[0].mxu0
          %v1129 = vadd.f32 0.0, %v1128
          %v1130 = vpop.f32.mrb[0].mxu0
          %1131 = vmatprep.mubr.bf16.mxu0 0
          %1132 = vmatmul.mubr.bf16.gmra.mrb[0].mxu0 %v976
          %v1133 = vpop.f32.mrb[0].mxu0
          %v1134 = vadd.f32 0.0, %v1133
          %v1135 = vpop.f32.mrb[0].mxu0
          %v1136 = vpop.f32.mrb[0].mxu0
          %v1137 = vadd.f32 0.0, %v1136
          %v1138 = vpop.f32.mrb[0].mxu0
          %1139 = vmatprep.mubr.bf16.mxu0 0
          %1140 = vmatmul.mubr.bf16.gmra.mrb[0].mxu0 %v977
          %v1141 = vpop.f32.mrb[0].mxu0
          %v1142 = vadd.f32 0.0, %v1141
          %v1143 = vpop.f32.mrb[0].mxu0
          %v1144 = vpop.f32.mrb[0].mxu0
          %v1145 = vadd.f32 0.0, %v1144
          %v1146 = vpop.f32.mrb[0].mxu0
          %1147 = vmatprep.mubr.bf16.mxu0 0
          %1148 = vmatmul.mubr.bf16.gmra.mrb[0].mxu0 %v978
          %v1149 = vpop.f32.mrb[0].mxu0
          %v1150 = vadd.f32 0.0, %v1149
          %v1151 = vpop.f32.mrb[0].mxu0
          %v1152 = vpop.f32.mrb[0].mxu0
          %v1153 = vadd.f32 0.0, %v1152
          %v1154 = vpop.f32.mrb[0].mxu0
          %1155 = vdwg.mxu0
          %v1172 = vunpack.c.l.b16 %v995
          %v1173 = vunpack.c.l.b16 %v996
          %v1174 = vunpack.c.l.b16 %v997
          %v1175 = vunpack.c.l.b16 %v998
          %v1176 = vunpack.c.l.b16 %v999
          %v1177 = vunpack.c.l.b16 %v1000
          %v1178 = vunpack.c.l.b16 %v1001
          %v1179 = vunpack.c.l.b16 %v1002
          %v1180 = vunpack.c.l.b16 %v1003
          %v1181 = vunpack.c.l.b16 %v1004
          %v1182 = vunpack.c.l.b16 %v1005
          %v1183 = vunpack.c.l.b16 %v1006
          %v1184 = vunpack.c.l.b16 %v1007
          %v1185 = vunpack.c.l.b16 %v1008
          %v1186 = vunpack.c.l.b16 %v1009
          %v1187 = vunpack.c.l.b16 %v1010
          %v1188 = vpack.c.b16 %v1173, %v1172
          %v1189 = vpack.c.b16 %v1175, %v1174
          %v1190 = vpack.c.b16 %v1177, %v1176
          %v1191 = vpack.c.b16 %v1179, %v1178
          %v1192 = vpack.c.b16 %v1181, %v1180
          %v1193 = vpack.c.b16 %v1183, %v1182
          %v1194 = vpack.c.b16 %v1185, %v1184
          %v1195 = vpack.c.b16 %v1187, %v1186
          %1204 = vmatprep.subr.bf16.mxu0 0
          %1205 = vmatpush1.bf16.msra.mxu0 %v1188
          %1206 = vmatprep.subr.bf16.mxu0 0
          %1207 = vmatpush1.bf16.msra.mxu0 %v1189
          %1208 = vmatprep.subr.bf16.mxu0 0
          %1209 = vmatpush1.bf16.msra.mxu0 %v1190
          %1210 = vmatprep.subr.bf16.mxu0 0
          %1211 = vmatpush1.bf16.msra.mxu0 %v1191
          %1212 = vmatprep.subr.bf16.mxu0 0
          %1213 = vmatpush1.bf16.msra.mxu0 %v1192
          %1214 = vmatprep.subr.bf16.mxu0 0
          %1215 = vmatpush1.bf16.msra.mxu0 %v1193
          %1216 = vmatprep.subr.bf16.mxu0 0
          %1217 = vmatpush1.bf16.msra.mxu0 %v1194
          %1218 = vmatprep.subr.bf16.mxu0 0
          %1219 = vmatpush1.bf16.msra.mxu0 %v1195
          %1220 = vmatprep.subr.bf16.mxu0 0
          %1221 = vmatpush1.bf16.msra.mxu0 0
          %1222 = vmatprep.subr.bf16.mxu0 0
          %1223 = vmatpush1.bf16.msra.mxu0 0
          %1224 = vmatprep.subr.bf16.mxu0 0
          %1225 = vmatpush1.bf16.msra.mxu0 0
          %1226 = vmatprep.subr.bf16.mxu0 0
          %1227 = vmatpush1.bf16.msra.mxu0 0
          %1228 = vmatprep.subr.bf16.mxu0 0
          %1229 = vmatpush1.bf16.msra.mxu0 0
          %1230 = vmatprep.subr.bf16.mxu0 0
          %1231 = vmatpush1.bf16.msra.mxu0 0
          %1232 = vmatprep.subr.bf16.mxu0 0
          %1233 = vmatpush1.bf16.msra.mxu0 0
          %1234 = vmatprep.subr.bf16.mxu0 0
          %1235 = vmatpush1.bf16.msra.mxu0 0
          %1236 = vmatprep.mubr.bf16.mxu0 0
          %1237 = vmatmul.mubr.bf16.gmra.mrb[0].mxu0 %v975
          %v1238 = vpop.f32.mrb[0].mxu0
          %v1239 = vadd.f32 0.0, %v1238
          %v1240 = vpop.f32.mrb[0].mxu0
          %v1241 = vpop.f32.mrb[0].mxu0
          %v1242 = vadd.f32 0.0, %v1241
          %v1243 = vpop.f32.mrb[0].mxu0
          %1244 = vmatprep.mubr.bf16.mxu0 0
          %1245 = vmatmul.mubr.bf16.gmra.mrb[0].mxu0 %v976
          %v1246 = vpop.f32.mrb[0].mxu0
          %v1247 = vadd.f32 0.0, %v1246
          %v1248 = vpop.f32.mrb[0].mxu0
          %v1249 = vpop.f32.mrb[0].mxu0
          %v1250 = vadd.f32 0.0, %v1249
          %v1251 = vpop.f32.mrb[0].mxu0
          %1252 = vmatprep.mubr.bf16.mxu0 0
          %1253 = vmatmul.mubr.bf16.gmra.mrb[0].mxu0 %v977
          %v1254 = vpop.f32.mrb[0].mxu0
          %v1255 = vadd.f32 0.0, %v1254
          %v1256 = vpop.f32.mrb[0].mxu0
          %v1257 = vpop.f32.mrb[0].mxu0
          %v1258 = vadd.f32 0.0, %v1257
          %v1259 = vpop.f32.mrb[0].mxu0
          %1260 = vmatprep.mubr.bf16.mxu0 0
          %1261 = vmatmul.mubr.bf16.gmra.mrb[0].mxu0 %v978
          %v1262 = vpop.f32.mrb[0].mxu0
          %v1263 = vadd.f32 0.0, %v1262
          %v1264 = vpop.f32.mrb[0].mxu0
          %v1265 = vpop.f32.mrb[0].mxu0
          %v1266 = vadd.f32 0.0, %v1265
          %v1267 = vpop.f32.mrb[0].mxu0
          %1268 = vdwg.mxu0
          %v1285 = vunpack.c.l.b16 %v1011
          %v1286 = vunpack.c.l.b16 %v1012
          %v1287 = vunpack.c.l.b16 %v1013
          %v1288 = vunpack.c.l.b16 %v1014
          %v1289 = vunpack.c.l.b16 %v1015
          %v1290 = vunpack.c.l.b16 %v1016
          %v1291 = vunpack.c.l.b16 %v1017
          %v1292 = vunpack.c.l.b16 %v1018
          %v1293 = vunpack.c.l.b16 %v1019
          %v1294 = vunpack.c.l.b16 %v1020
          %v1295 = vunpack.c.l.b16 %v1021
          %v1296 = vunpack.c.l.b16 %v1022
          %v1297 = vunpack.c.l.b16 %v1023
          %v1298 = vunpack.c.l.b16 %v1024
          %v1299 = vunpack.c.l.b16 %v1025
          %v1300 = vunpack.c.l.b16 %v1026
          %v1301 = vpack.c.b16 %v1286, %v1285
          %v1302 = vpack.c.b16 %v1288, %v1287
          %v1303 = vpack.c.b16 %v1290, %v1289
          %v1304 = vpack.c.b16 %v1292, %v1291
          %v1305 = vpack.c.b16 %v1294, %v1293
          %v1306 = vpack.c.b16 %v1296, %v1295
          %v1307 = vpack.c.b16 %v1298, %v1297
          %v1308 = vpack.c.b16 %v1300, %v1299
          %1317 = vmatprep.subr.bf16.mxu0 0
          %1318 = vmatpush1.bf16.msra.mxu0 %v1301
          %1319 = vmatprep.subr.bf16.mxu0 0
          %1320 = vmatpush1.bf16.msra.mxu0 %v1302
          %1321 = vmatprep.subr.bf16.mxu0 0
          %1322 = vmatpush1.bf16.msra.mxu0 %v1303
          %1323 = vmatprep.subr.bf16.mxu0 0
          %1324 = vmatpush1.bf16.msra.mxu0 %v1304
          %1325 = vmatprep.subr.bf16.mxu0 0
          %1326 = vmatpush1.bf16.msra.mxu0 %v1305
          %1327 = vmatprep.subr.bf16.mxu0 0
          %1328 = vmatpush1.bf16.msra.mxu0 %v1306
          %1329 = vmatprep.subr.bf16.mxu0 0
          %1330 = vmatpush1.bf16.msra.mxu0 %v1307
          %1331 = vmatprep.subr.bf16.mxu0 0
          %1332 = vmatpush1.bf16.msra.mxu0 %v1308
          %1333 = vmatprep.subr.bf16.mxu0 0
          %1334 = vmatpush1.bf16.msra.mxu0 0
          %1335 = vmatprep.subr.bf16.mxu0 0
          %1336 = vmatpush1.bf16.msra.mxu0 0
          %1337 = vmatprep.subr.bf16.mxu0 0
          %1338 = vmatpush1.bf16.msra.mxu0 0
          %1339 = vmatprep.subr.bf16.mxu0 0
          %1340 = vmatpush1.bf16.msra.mxu0 0
          %1341 = vmatprep.subr.bf16.mxu0 0
          %1342 = vmatpush1.bf16.msra.mxu0 0
          %1343 = vmatprep.subr.bf16.mxu0 0
          %1344 = vmatpush1.bf16.msra.mxu0 0
          %1345 = vmatprep.subr.bf16.mxu0 0
          %1346 = vmatpush1.bf16.msra.mxu0 0
          %1347 = vmatprep.subr.bf16.mxu0 0
          %1348 = vmatpush1.bf16.msra.mxu0 0
          %1349 = vmatprep.mubr.bf16.mxu0 0
          %1350 = vmatmul.mubr.bf16.gmra.mrb[0].mxu0 %v975
          %v1351 = vpop.f32.mrb[0].mxu0
          %v1352 = vadd.f32 0.0, %v1351
          %v1353 = vpop.f32.mrb[0].mxu0
          %v1354 = vpop.f32.mrb[0].mxu0
          %v1355 = vadd.f32 0.0, %v1354
          %v1356 = vpop.f32.mrb[0].mxu0
          %1357 = vmatprep.mubr.bf16.mxu0 0
          %1358 = vmatmul.mubr.bf16.gmra.mrb[0].mxu0 %v976
          %v1359 = vpop.f32.mrb[0].mxu0
          %v1360 = vadd.f32 0.0, %v1359
          %v1361 = vpop.f32.mrb[0].mxu0
          %v1362 = vpop.f32.mrb[0].mxu0
          %v1363 = vadd.f32 0.0, %v1362
          %v1364 = vpop.f32.mrb[0].mxu0
          %1365 = vmatprep.mubr.bf16.mxu0 0
          %1366 = vmatmul.mubr.bf16.gmra.mrb[0].mxu0 %v977
          %v1367 = vpop.f32.mrb[0].mxu0
          %v1368 = vadd.f32 0.0, %v1367
          %v1369 = vpop.f32.mrb[0].mxu0
          %v1370 = vpop.f32.mrb[0].mxu0
          %v1371 = vadd.f32 0.0, %v1370
          %v1372 = vpop.f32.mrb[0].mxu0
          %1373 = vmatprep.mubr.bf16.mxu0 0
          %1374 = vmatmul.mubr.bf16.gmra.mrb[0].mxu0 %v978
          %v1375 = vpop.f32.mrb[0].mxu0
          %v1376 = vadd.f32 0.0, %v1375
          %v1377 = vpop.f32.mrb[0].mxu0
          %v1378 = vpop.f32.mrb[0].mxu0
          %v1379 = vadd.f32 0.0, %v1378
          %v1380 = vpop.f32.mrb[0].mxu0
          %1381 = vdwg.mxu0
          %v1398 = vunpack.c.l.b16 %v1027
          %v1399 = vunpack.c.l.b16 %v1028
          %v1400 = vunpack.c.l.b16 %v1029
          %v1401 = vunpack.c.l.b16 %v1030
          %v1402 = vunpack.c.l.b16 %v1031
          %v1403 = vunpack.c.l.b16 %v1032
          %v1404 = vunpack.c.l.b16 %v1033
          %v1405 = vunpack.c.l.b16 %v1034
          %v1406 = vunpack.c.l.b16 %v1035
          %v1407 = vunpack.c.l.b16 %v1036
          %v1408 = vunpack.c.l.b16 %v1037
          %v1409 = vunpack.c.l.b16 %v1038
          %v1410 = vunpack.c.l.b16 %v1039
          %v1411 = vunpack.c.l.b16 %v1040
          %v1412 = vunpack.c.l.b16 %v1041
          %v1413 = vunpack.c.l.b16 %v1042
          %v1414 = vpack.c.b16 %v1399, %v1398
          %v1415 = vpack.c.b16 %v1401, %v1400
          %v1416 = vpack.c.b16 %v1403, %v1402
          %v1417 = vpack.c.b16 %v1405, %v1404
          %v1418 = vpack.c.b16 %v1407, %v1406
          %v1419 = vpack.c.b16 %v1409, %v1408
          %v1420 = vpack.c.b16 %v1411, %v1410
          %v1421 = vpack.c.b16 %v1413, %v1412
          %1430 = vmatprep.subr.bf16.mxu0 0
          %1431 = vmatpush1.bf16.msra.mxu0 %v1414
          %1432 = vmatprep.subr.bf16.mxu0 0
          %1433 = vmatpush1.bf16.msra.mxu0 %v1415
          %1434 = vmatprep.subr.bf16.mxu0 0
          %1435 = vmatpush1.bf16.msra.mxu0 %v1416
          %1436 = vmatprep.subr.bf16.mxu0 0
          %1437 = vmatpush1.bf16.msra.mxu0 %v1417
          %1438 = vmatprep.subr.bf16.mxu0 0
          %1439 = vmatpush1.bf16.msra.mxu0 %v1418
          %1440 = vmatprep.subr.bf16.mxu0 0
          %1441 = vmatpush1.bf16.msra.mxu0 %v1419
          %1442 = vmatprep.subr.bf16.mxu0 0
          %1443 = vmatpush1.bf16.msra.mxu0 %v1420
          %1444 = vmatprep.subr.bf16.mxu0 0
          %1445 = vmatpush1.bf16.msra.mxu0 %v1421
          %1446 = vmatprep.subr.bf16.mxu0 0
          %1447 = vmatpush1.bf16.msra.mxu0 0
          %1448 = vmatprep.subr.bf16.mxu0 0
          %1449 = vmatpush1.bf16.msra.mxu0 0
          %1450 = vmatprep.subr.bf16.mxu0 0
          %1451 = vmatpush1.bf16.msra.mxu0 0
          %1452 = vmatprep.subr.bf16.mxu0 0
          %1453 = vmatpush1.bf16.msra.mxu0 0
          %1454 = vmatprep.subr.bf16.mxu0 0
          %1455 = vmatpush1.bf16.msra.mxu0 0
          %1456 = vmatprep.subr.bf16.mxu0 0
          %1457 = vmatpush1.bf16.msra.mxu0 0
          %1458 = vmatprep.subr.bf16.mxu0 0
          %1459 = vmatpush1.bf16.msra.mxu0 0
          %1460 = vmatprep.subr.bf16.mxu0 0
          %1461 = vmatpush1.bf16.msra.mxu0 0
          %1462 = vmatprep.mubr.bf16.mxu0 0
          %1463 = vmatmul.mubr.bf16.gmra.mrb[0].mxu0 %v975
          %v1464 = vpop.f32.mrb[0].mxu0
          %v1465 = vadd.f32 0.0, %v1464
          %v1466 = vpop.f32.mrb[0].mxu0
          %v1467 = vpop.f32.mrb[0].mxu0
          %v1468 = vadd.f32 0.0, %v1467
          %v1469 = vpop.f32.mrb[0].mxu0
          %1470 = vmatprep.mubr.bf16.mxu0 0
          %1471 = vmatmul.mubr.bf16.gmra.mrb[0].mxu0 %v976
          %v1472 = vpop.f32.mrb[0].mxu0
          %v1473 = vadd.f32 0.0, %v1472
          %v1474 = vpop.f32.mrb[0].mxu0
          %v1475 = vpop.f32.mrb[0].mxu0
          %v1476 = vadd.f32 0.0, %v1475
          %v1477 = vpop.f32.mrb[0].mxu0
          %1478 = vmatprep.mubr.bf16.mxu0 0
          %1479 = vmatmul.mubr.bf16.gmra.mrb[0].mxu0 %v977
          %v1480 = vpop.f32.mrb[0].mxu0
          %v1481 = vadd.f32 0.0, %v1480
          %v1482 = vpop.f32.mrb[0].mxu0
          %v1483 = vpop.f32.mrb[0].mxu0
          %v1484 = vadd.f32 0.0, %v1483
          %v1485 = vpop.f32.mrb[0].mxu0
          %1486 = vmatprep.mubr.bf16.mxu0 0
          %1487 = vmatmul.mubr.bf16.gmra.mrb[0].mxu0 %v978
          %v1488 = vpop.f32.mrb[0].mxu0
          %v1489 = vadd.f32 0.0, %v1488
          %v1490 = vpop.f32.mrb[0].mxu0
          %v1491 = vpop.f32.mrb[0].mxu0
          %v1492 = vadd.f32 0.0, %v1491
          %v1493 = vpop.f32.mrb[0].mxu0
          %1494 = vdwg.mxu0
          %v1495 = vpack.c.bf16 %v1129, %v1126
          %v1496 = vpack.c.bf16 %v1137, %v1134
          %v1497 = vpack.c.bf16 %v1145, %v1142
          %v1498 = vpack.c.bf16 %v1153, %v1150
          %v1499 = vpack.c.bf16 %v1242, %v1239
          %v1500 = vpack.c.bf16 %v1250, %v1247
          %v1501 = vpack.c.bf16 %v1258, %v1255
          %v1502 = vpack.c.bf16 %v1266, %v1263
          %v1503 = vpack.c.bf16 %v1355, %v1352
          %v1504 = vpack.c.bf16 %v1363, %v1360
          %v1505 = vpack.c.bf16 %v1371, %v1368
          %v1506 = vpack.c.bf16 %v1379, %v1376
          %v1507 = vpack.c.bf16 %v1468, %v1465
          %v1508 = vpack.c.bf16 %v1476, %v1473
          %v1509 = vpack.c.bf16 %v1484, %v1481
          %v1510 = vpack.c.bf16 %v1492, %v1489
          %vm1511 = vcmask 261120
          %1512 = vst.msk [vmem:[#allocation2] sm:$0xff] %vm1511, %v1495
          %1513 = vst.msk [vmem:[#allocation2 + $0x8] sm:$0xff] %vm1511, %v1496
          %1514 = vst.msk [vmem:[#allocation2 + $0x10] sm:$0xff] %vm1511, %v1497
          %1515 = vst.msk [vmem:[#allocation2 + $0x18] sm:$0xff] %vm1511, %v1498
          %1516 = vst.msk [vmem:[#allocation2 + $0x20] sm:$0xff] %vm1511, %v1499
          %1517 = vst.msk [vmem:[#allocation2 + $0x28] sm:$0xff] %vm1511, %v1500
          %1518 = vst.msk [vmem:[#allocation2 + $0x30] sm:$0xff] %vm1511, %v1501
          %1519 = vst.msk [vmem:[#allocation2 + $0x38] sm:$0xff] %vm1511, %v1502
          %1520 = vst.msk [vmem:[#allocation2 + $0x40] sm:$0xff] %vm1511, %v1503
          %1521 = vst.msk [vmem:[#allocation2 + $0x48] sm:$0xff] %vm1511, %v1504
          %1522 = vst.msk [vmem:[#allocation2 + $0x50] sm:$0xff] %vm1511, %v1505
          %1523 = vst.msk [vmem:[#allocation2 + $0x58] sm:$0xff] %vm1511, %v1506
          %1524 = vst.msk [vmem:[#allocation2 + $0x60] sm:$0xff] %vm1511, %v1507
          %1525 = vst.msk [vmem:[#allocation2 + $0x68] sm:$0xff] %vm1511, %v1508
          %1526 = vst.msk [vmem:[#allocation2 + $0x70] sm:$0xff] %vm1511, %v1509
          %1527 = vst.msk [vmem:[#allocation2 + $0x78] sm:$0xff] %vm1511, %v1510
          %v1528 = vld [vmem:[%s4] sm:$0xf]
          %v1529 = vld [vmem:[%s4 + $0x4] sm:$0xf]
          %v1530 = vld [vmem:[%s4 + $0x8] sm:$0xf]
          %v1531 = vld [vmem:[%s4 + $0xc] sm:$0xf]
          %v1532 = vld [vmem:[%s4 + $0x10] sm:$0xf]
          %v1533 = vld [vmem:[%s4 + $0x14] sm:$0xf]
          %v1534 = vld [vmem:[%s4 + $0x18] sm:$0xf]
          %v1535 = vld [vmem:[%s4 + $0x1c] sm:$0xf]
          %v1536 = vld [vmem:[%s4 + $0x20] sm:$0xf]
          %v1537 = vld [vmem:[%s4 + $0x24] sm:$0xf]
          %v1538 = vld [vmem:[%s4 + $0x28] sm:$0xf]
          %v1539 = vld [vmem:[%s4 + $0x2c] sm:$0xf]
          %v1540 = vld [vmem:[%s4 + $0x30] sm:$0xf]
          %v1541 = vld [vmem:[%s4 + $0x34] sm:$0xf]
          %v1542 = vld [vmem:[%s4 + $0x38] sm:$0xf]
          %v1543 = vld [vmem:[%s4 + $0x3c] sm:$0xf]
          %v1544 = vld [vmem:[%s4 + $0x40] sm:$0xf]
          %v1545 = vld [vmem:[%s4 + $0x44] sm:$0xf]
          %v1546 = vld [vmem:[%s4 + $0x48] sm:$0xf]
          %v1547 = vld [vmem:[%s4 + $0x4c] sm:$0xf]
          %v1548 = vld [vmem:[%s4 + $0x50] sm:$0xf]
          %v1549 = vld [vmem:[%s4 + $0x54] sm:$0xf]
          %v1550 = vld [vmem:[%s4 + $0x58] sm:$0xf]
          %v1551 = vld [vmem:[%s4 + $0x5c] sm:$0xf]
          %v1552 = vld [vmem:[%s4 + $0x60] sm:$0xf]
          %v1553 = vld [vmem:[%s4 + $0x64] sm:$0xf]
          %v1554 = vld [vmem:[%s4 + $0x68] sm:$0xf]
          %v1555 = vld [vmem:[%s4 + $0x6c] sm:$0xf]
          %v1556 = vld [vmem:[%s4 + $0x70] sm:$0xf]
          %v1557 = vld [vmem:[%s4 + $0x74] sm:$0xf]
          %v1558 = vld [vmem:[%s4 + $0x78] sm:$0xf]
          %v1559 = vld [vmem:[%s4 + $0x7c] sm:$0xf]
          %v1560 = vld [vmem:[%s4 + $0x80] sm:$0xf]
          %v1561 = vld [vmem:[%s4 + $0x84] sm:$0xf]
          %v1562 = vld [vmem:[%s4 + $0x88] sm:$0xf]
          %v1563 = vld [vmem:[%s4 + $0x8c] sm:$0xf]
          %v1564 = vld [vmem:[%s4 + $0x90] sm:$0xf]
          %v1565 = vld [vmem:[%s4 + $0x94] sm:$0xf]
          %v1566 = vld [vmem:[%s4 + $0x98] sm:$0xf]
          %v1567 = vld [vmem:[%s4 + $0x9c] sm:$0xf]
          %v1568 = vld [vmem:[%s4 + $0xa0] sm:$0xf]
          %v1569 = vld [vmem:[%s4 + $0xa4] sm:$0xf]
          %v1570 = vld [vmem:[%s4 + $0xa8] sm:$0xf]
          %v1571 = vld [vmem:[%s4 + $0xac] sm:$0xf]
          %v1572 = vld [vmem:[%s4 + $0xb0] sm:$0xf]
          %v1573 = vld [vmem:[%s4 + $0xb4] sm:$0xf]
          %v1574 = vld [vmem:[%s4 + $0xb8] sm:$0xf]
          %v1575 = vld [vmem:[%s4 + $0xbc] sm:$0xf]
          %v1576 = vld [vmem:[%s4 + $0xc0] sm:$0xf]
          %v1577 = vld [vmem:[%s4 + $0xc4] sm:$0xf]
          %v1578 = vld [vmem:[%s4 + $0xc8] sm:$0xf]
          %v1579 = vld [vmem:[%s4 + $0xcc] sm:$0xf]
          %v1580 = vld [vmem:[%s4 + $0xd0] sm:$0xf]
          %v1581 = vld [vmem:[%s4 + $0xd4] sm:$0xf]
          %v1582 = vld [vmem:[%s4 + $0xd8] sm:$0xf]
          %v1583 = vld [vmem:[%s4 + $0xdc] sm:$0xf]
          %v1584 = vld [vmem:[%s4 + $0xe0] sm:$0xf]
          %v1585 = vld [vmem:[%s4 + $0xe4] sm:$0xf]
          %v1586 = vld [vmem:[%s4 + $0xe8] sm:$0xf]
          %v1587 = vld [vmem:[%s4 + $0xec] sm:$0xf]
          %v1588 = vld [vmem:[%s4 + $0xf0] sm:$0xf]
          %v1589 = vld [vmem:[%s4 + $0xf4] sm:$0xf]
          %v1590 = vld [vmem:[%s4 + $0xf8] sm:$0xf]
          %v1591 = vld [vmem:[%s4 + $0xfc] sm:$0xf]
          %v1608 = vunpack.c.l.b16 %v1528
          %v1609 = vunpack.c.l.b16 %v1529
          %v1610 = vunpack.c.l.b16 %v1530
          %v1611 = vunpack.c.l.b16 %v1531
          %v1612 = vunpack.c.l.b16 %v1532
          %v1613 = vunpack.c.l.b16 %v1533
          %v1614 = vunpack.c.l.b16 %v1534
          %v1615 = vunpack.c.l.b16 %v1535
          %v1616 = vunpack.c.l.b16 %v1536
          %v1617 = vunpack.c.l.b16 %v1537
          %v1618 = vunpack.c.l.b16 %v1538
          %v1619 = vunpack.c.l.b16 %v1539
          %v1620 = vunpack.c.l.b16 %v1540
          %v1621 = vunpack.c.l.b16 %v1541
          %v1622 = vunpack.c.l.b16 %v1542
          %v1623 = vunpack.c.l.b16 %v1543
          %v1624 = vpack.c.b16 %v1609, %v1608
          %v1625 = vpack.c.b16 %v1611, %v1610
          %v1626 = vpack.c.b16 %v1613, %v1612
          %v1627 = vpack.c.b16 %v1615, %v1614
          %v1628 = vpack.c.b16 %v1617, %v1616
          %v1629 = vpack.c.b16 %v1619, %v1618
          %v1630 = vpack.c.b16 %v1621, %v1620
          %v1631 = vpack.c.b16 %v1623, %v1622
          %1640 = vmatprep.subr.bf16.mxu0 0
          %1641 = vmatpush1.bf16.msra.mxu0 %v1624
          %1642 = vmatprep.subr.bf16.mxu0 0
          %1643 = vmatpush1.bf16.msra.mxu0 %v1625
          %1644 = vmatprep.subr.bf16.mxu0 0
          %1645 = vmatpush1.bf16.msra.mxu0 %v1626
          %1646 = vmatprep.subr.bf16.mxu0 0
          %1647 = vmatpush1.bf16.msra.mxu0 %v1627
          %1648 = vmatprep.subr.bf16.mxu0 0
          %1649 = vmatpush1.bf16.msra.mxu0 %v1628
          %1650 = vmatprep.subr.bf16.mxu0 0
          %1651 = vmatpush1.bf16.msra.mxu0 %v1629
          %1652 = vmatprep.subr.bf16.mxu0 0
          %1653 = vmatpush1.bf16.msra.mxu0 %v1630
          %1654 = vmatprep.subr.bf16.mxu0 0
          %1655 = vmatpush1.bf16.msra.mxu0 %v1631
          %1656 = vmatprep.subr.bf16.mxu0 0
          %1657 = vmatpush1.bf16.msra.mxu0 0
          %1658 = vmatprep.subr.bf16.mxu0 0
          %1659 = vmatpush1.bf16.msra.mxu0 0
          %1660 = vmatprep.subr.bf16.mxu0 0
          %1661 = vmatpush1.bf16.msra.mxu0 0
          %1662 = vmatprep.subr.bf16.mxu0 0
          %1663 = vmatpush1.bf16.msra.mxu0 0
          %1664 = vmatprep.subr.bf16.mxu0 0
          %1665 = vmatpush1.bf16.msra.mxu0 0
          %1666 = vmatprep.subr.bf16.mxu0 0
          %1667 = vmatpush1.bf16.msra.mxu0 0
          %1668 = vmatprep.subr.bf16.mxu0 0
          %1669 = vmatpush1.bf16.msra.mxu0 0
          %1670 = vmatprep.subr.bf16.mxu0 0
          %1671 = vmatpush1.bf16.msra.mxu0 0
          %1672 = vmatprep.mubr.bf16.mxu0 0
          %1673 = vmatmul.mubr.bf16.gmra.mrb[0].mxu0 %v975
          %v1674 = vpop.f32.mrb[0].mxu0
          %v1675 = vadd.f32 0.0, %v1674
          %v1676 = vpop.f32.mrb[0].mxu0
          %v1677 = vpop.f32.mrb[0].mxu0
          %v1678 = vadd.f32 0.0, %v1677
          %v1679 = vpop.f32.mrb[0].mxu0
          %1680 = vmatprep.mubr.bf16.mxu0 0
          %1681 = vmatmul.mubr.bf16.gmra.mrb[0].mxu0 %v976
          %v1682 = vpop.f32.mrb[0].mxu0
          %v1683 = vadd.f32 0.0, %v1682
          %v1684 = vpop.f32.mrb[0].mxu0
          %v1685 = vpop.f32.mrb[0].mxu0
          %v1686 = vadd.f32 0.0, %v1685
          %v1687 = vpop.f32.mrb[0].mxu0
          %1688 = vmatprep.mubr.bf16.mxu0 0
          %1689 = vmatmul.mubr.bf16.gmra.mrb[0].mxu0 %v977
          %v1690 = vpop.f32.mrb[0].mxu0
          %v1691 = vadd.f32 0.0, %v1690
          %v1692 = vpop.f32.mrb[0].mxu0
          %v1693 = vpop.f32.mrb[0].mxu0
          %v1694 = vadd.f32 0.0, %v1693
          %v1695 = vpop.f32.mrb[0].mxu0
          %1696 = vmatprep.mubr.bf16.mxu0 0
          %1697 = vmatmul.mubr.bf16.gmra.mrb[0].mxu0 %v978
          %v1698 = vpop.f32.mrb[0].mxu0
          %v1699 = vadd.f32 0.0, %v1698
          %v1700 = vpop.f32.mrb[0].mxu0
          %v1701 = vpop.f32.mrb[0].mxu0
          %v1702 = vadd.f32 0.0, %v1701
          %v1703 = vpop.f32.mrb[0].mxu0
          %1704 = vdwg.mxu0
          %v1721 = vunpack.c.l.b16 %v1544
          %v1722 = vunpack.c.l.b16 %v1545
          %v1723 = vunpack.c.l.b16 %v1546
          %v1724 = vunpack.c.l.b16 %v1547
          %v1725 = vunpack.c.l.b16 %v1548
          %v1726 = vunpack.c.l.b16 %v1549
          %v1727 = vunpack.c.l.b16 %v1550
          %v1728 = vunpack.c.l.b16 %v1551
          %v1729 = vunpack.c.l.b16 %v1552
          %v1730 = vunpack.c.l.b16 %v1553
          %v1731 = vunpack.c.l.b16 %v1554
          %v1732 = vunpack.c.l.b16 %v1555
          %v1733 = vunpack.c.l.b16 %v1556
          %v1734 = vunpack.c.l.b16 %v1557
          %v1735 = vunpack.c.l.b16 %v1558
          %v1736 = vunpack.c.l.b16 %v1559
          %v1737 = vpack.c.b16 %v1722, %v1721
          %v1738 = vpack.c.b16 %v1724, %v1723
          %v1739 = vpack.c.b16 %v1726, %v1725
          %v1740 = vpack.c.b16 %v1728, %v1727
          %v1741 = vpack.c.b16 %v1730, %v1729
          %v1742 = vpack.c.b16 %v1732, %v1731
          %v1743 = vpack.c.b16 %v1734, %v1733
          %v1744 = vpack.c.b16 %v1736, %v1735
          %1753 = vmatprep.subr.bf16.mxu0 0
          %1754 = vmatpush1.bf16.msra.mxu0 %v1737
          %1755 = vmatprep.subr.bf16.mxu0 0
          %1756 = vmatpush1.bf16.msra.mxu0 %v1738
          %1757 = vmatprep.subr.bf16.mxu0 0
          %1758 = vmatpush1.bf16.msra.mxu0 %v1739
          %1759 = vmatprep.subr.bf16.mxu0 0
          %1760 = vmatpush1.bf16.msra.mxu0 %v1740
          %1761 = vmatprep.subr.bf16.mxu0 0
          %1762 = vmatpush1.bf16.msra.mxu0 %v1741
          %1763 = vmatprep.subr.bf16.mxu0 0
          %1764 = vmatpush1.bf16.msra.mxu0 %v1742
          %1765 = vmatprep.subr.bf16.mxu0 0
          %1766 = vmatpush1.bf16.msra.mxu0 %v1743
          %1767 = vmatprep.subr.bf16.mxu0 0
          %1768 = vmatpush1.bf16.msra.mxu0 %v1744
          %1769 = vmatprep.subr.bf16.mxu0 0
          %1770 = vmatpush1.bf16.msra.mxu0 0
          %1771 = vmatprep.subr.bf16.mxu0 0
          %1772 = vmatpush1.bf16.msra.mxu0 0
          %1773 = vmatprep.subr.bf16.mxu0 0
          %1774 = vmatpush1.bf16.msra.mxu0 0
          %1775 = vmatprep.subr.bf16.mxu0 0
          %1776 = vmatpush1.bf16.msra.mxu0 0
          %1777 = vmatprep.subr.bf16.mxu0 0
          %1778 = vmatpush1.bf16.msra.mxu0 0
          %1779 = vmatprep.subr.bf16.mxu0 0
          %1780 = vmatpush1.bf16.msra.mxu0 0
          %1781 = vmatprep.subr.bf16.mxu0 0
          %1782 = vmatpush1.bf16.msra.mxu0 0
          %1783 = vmatprep.subr.bf16.mxu0 0
          %1784 = vmatpush1.bf16.msra.mxu0 0
          %1785 = vmatprep.mubr.bf16.mxu0 0
          %1786 = vmatmul.mubr.bf16.gmra.mrb[0].mxu0 %v975
          %v1787 = vpop.f32.mrb[0].mxu0
          %v1788 = vadd.f32 0.0, %v1787
          %v1789 = vpop.f32.mrb[0].mxu0
          %v1790 = vpop.f32.mrb[0].mxu0
          %v1791 = vadd.f32 0.0, %v1790
          %v1792 = vpop.f32.mrb[0].mxu0
          %1793 = vmatprep.mubr.bf16.mxu0 0
          %1794 = vmatmul.mubr.bf16.gmra.mrb[0].mxu0 %v976
          %v1795 = vpop.f32.mrb[0].mxu0
          %v1796 = vadd.f32 0.0, %v1795
          %v1797 = vpop.f32.mrb[0].mxu0
          %v1798 = vpop.f32.mrb[0].mxu0
          %v1799 = vadd.f32 0.0, %v1798
          %v1800 = vpop.f32.mrb[0].mxu0
          %1801 = vmatprep.mubr.bf16.mxu0 0
          %1802 = vmatmul.mubr.bf16.gmra.mrb[0].mxu0 %v977
          %v1803 = vpop.f32.mrb[0].mxu0
          %v1804 = vadd.f32 0.0, %v1803
          %v1805 = vpop.f32.mrb[0].mxu0
          %v1806 = vpop.f32.mrb[0].mxu0
          %v1807 = vadd.f32 0.0, %v1806
          %v1808 = vpop.f32.mrb[0].mxu0
          %1809 = vmatprep.mubr.bf16.mxu0 0
          %1810 = vmatmul.mubr.bf16.gmra.mrb[0].mxu0 %v978
          %v1811 = vpop.f32.mrb[0].mxu0
          %v1812 = vadd.f32 0.0, %v1811
          %v1813 = vpop.f32.mrb[0].mxu0
          %v1814 = vpop.f32.mrb[0].mxu0
          %v1815 = vadd.f32 0.0, %v1814
          %v1816 = vpop.f32.mrb[0].mxu0
          %1817 = vdwg.mxu0
          %v1834 = vunpack.c.l.b16 %v1560
          %v1835 = vunpack.c.l.b16 %v1561
          %v1836 = vunpack.c.l.b16 %v1562
          %v1837 = vunpack.c.l.b16 %v1563
          %v1838 = vunpack.c.l.b16 %v1564
          %v1839 = vunpack.c.l.b16 %v1565
          %v1840 = vunpack.c.l.b16 %v1566
          %v1841 = vunpack.c.l.b16 %v1567
          %v1842 = vunpack.c.l.b16 %v1568
          %v1843 = vunpack.c.l.b16 %v1569
          %v1844 = vunpack.c.l.b16 %v1570
          %v1845 = vunpack.c.l.b16 %v1571
          %v1846 = vunpack.c.l.b16 %v1572
          %v1847 = vunpack.c.l.b16 %v1573
          %v1848 = vunpack.c.l.b16 %v1574
          %v1849 = vunpack.c.l.b16 %v1575
          %v1850 = vpack.c.b16 %v1835, %v1834
          %v1851 = vpack.c.b16 %v1837, %v1836
          %v1852 = vpack.c.b16 %v1839, %v1838
          %v1853 = vpack.c.b16 %v1841, %v1840
          %v1854 = vpack.c.b16 %v1843, %v1842
          %v1855 = vpack.c.b16 %v1845, %v1844
          %v1856 = vpack.c.b16 %v1847, %v1846
          %v1857 = vpack.c.b16 %v1849, %v1848
          %1866 = vmatprep.subr.bf16.mxu0 0
          %1867 = vmatpush1.bf16.msra.mxu0 %v1850
          %1868 = vmatprep.subr.bf16.mxu0 0
          %1869 = vmatpush1.bf16.msra.mxu0 %v1851
          %1870 = vmatprep.subr.bf16.mxu0 0
          %1871 = vmatpush1.bf16.msra.mxu0 %v1852
          %1872 = vmatprep.subr.bf16.mxu0 0
          %1873 = vmatpush1.bf16.msra.mxu0 %v1853
          %1874 = vmatprep.subr.bf16.mxu0 0
          %1875 = vmatpush1.bf16.msra.mxu0 %v1854
          %1876 = vmatprep.subr.bf16.mxu0 0
          %1877 = vmatpush1.bf16.msra.mxu0 %v1855
          %1878 = vmatprep.subr.bf16.mxu0 0
          %1879 = vmatpush1.bf16.msra.mxu0 %v1856
          %1880 = vmatprep.subr.bf16.mxu0 0
          %1881 = vmatpush1.bf16.msra.mxu0 %v1857
          %1882 = vmatprep.subr.bf16.mxu0 0
          %1883 = vmatpush1.bf16.msra.mxu0 0
          %1884 = vmatprep.subr.bf16.mxu0 0
          %1885 = vmatpush1.bf16.msra.mxu0 0
          %1886 = vmatprep.subr.bf16.mxu0 0
          %1887 = vmatpush1.bf16.msra.mxu0 0
          %1888 = vmatprep.subr.bf16.mxu0 0
          %1889 = vmatpush1.bf16.msra.mxu0 0
          %1890 = vmatprep.subr.bf16.mxu0 0
          %1891 = vmatpush1.bf16.msra.mxu0 0
          %1892 = vmatprep.subr.bf16.mxu0 0
          %1893 = vmatpush1.bf16.msra.mxu0 0
          %1894 = vmatprep.subr.bf16.mxu0 0
          %1895 = vmatpush1.bf16.msra.mxu0 0
          %1896 = vmatprep.subr.bf16.mxu0 0
          %1897 = vmatpush1.bf16.msra.mxu0 0
          %1898 = vmatprep.mubr.bf16.mxu0 0
          %1899 = vmatmul.mubr.bf16.gmra.mrb[0].mxu0 %v975
          %v1900 = vpop.f32.mrb[0].mxu0
          %v1901 = vadd.f32 0.0, %v1900
          %v1902 = vpop.f32.mrb[0].mxu0
          %v1903 = vpop.f32.mrb[0].mxu0
          %v1904 = vadd.f32 0.0, %v1903
          %v1905 = vpop.f32.mrb[0].mxu0
          %1906 = vmatprep.mubr.bf16.mxu0 0
          %1907 = vmatmul.mubr.bf16.gmra.mrb[0].mxu0 %v976
          %v1908 = vpop.f32.mrb[0].mxu0
          %v1909 = vadd.f32 0.0, %v1908
          %v1910 = vpop.f32.mrb[0].mxu0
          %v1911 = vpop.f32.mrb[0].mxu0
          %v1912 = vadd.f32 0.0, %v1911
          %v1913 = vpop.f32.mrb[0].mxu0
          %1914 = vmatprep.mubr.bf16.mxu0 0
          %1915 = vmatmul.mubr.bf16.gmra.mrb[0].mxu0 %v977
          %v1916 = vpop.f32.mrb[0].mxu0
          %v1917 = vadd.f32 0.0, %v1916
          %v1918 = vpop.f32.mrb[0].mxu0
          %v1919 = vpop.f32.mrb[0].mxu0
          %v1920 = vadd.f32 0.0, %v1919
          %v1921 = vpop.f32.mrb[0].mxu0
          %1922 = vmatprep.mubr.bf16.mxu0 0
          %1923 = vmatmul.mubr.bf16.gmra.mrb[0].mxu0 %v978
          %v1924 = vpop.f32.mrb[0].mxu0
          %v1925 = vadd.f32 0.0, %v1924
          %v1926 = vpop.f32.mrb[0].mxu0
          %v1927 = vpop.f32.mrb[0].mxu0
          %v1928 = vadd.f32 0.0, %v1927
          %v1929 = vpop.f32.mrb[0].mxu0
          %1930 = vdwg.mxu0
          %v1947 = vunpack.c.l.b16 %v1576
          %v1948 = vunpack.c.l.b16 %v1577
          %v1949 = vunpack.c.l.b16 %v1578
          %v1950 = vunpack.c.l.b16 %v1579
          %v1951 = vunpack.c.l.b16 %v1580
          %v1952 = vunpack.c.l.b16 %v1581
          %v1953 = vunpack.c.l.b16 %v1582
          %v1954 = vunpack.c.l.b16 %v1583
          %v1955 = vunpack.c.l.b16 %v1584
          %v1956 = vunpack.c.l.b16 %v1585
          %v1957 = vunpack.c.l.b16 %v1586
          %v1958 = vunpack.c.l.b16 %v1587
          %v1959 = vunpack.c.l.b16 %v1588
          %v1960 = vunpack.c.l.b16 %v1589
          %v1961 = vunpack.c.l.b16 %v1590
          %v1962 = vunpack.c.l.b16 %v1591
          %v1963 = vpack.c.b16 %v1948, %v1947
          %v1964 = vpack.c.b16 %v1950, %v1949
          %v1965 = vpack.c.b16 %v1952, %v1951
          %v1966 = vpack.c.b16 %v1954, %v1953
          %v1967 = vpack.c.b16 %v1956, %v1955
          %v1968 = vpack.c.b16 %v1958, %v1957
          %v1969 = vpack.c.b16 %v1960, %v1959
          %v1970 = vpack.c.b16 %v1962, %v1961
          %1979 = vmatprep.subr.bf16.mxu0 0
          %1980 = vmatpush1.bf16.msra.mxu0 %v1963
          %1981 = vmatprep.subr.bf16.mxu0 0
          %1982 = vmatpush1.bf16.msra.mxu0 %v1964
          %1983 = vmatprep.subr.bf16.mxu0 0
          %1984 = vmatpush1.bf16.msra.mxu0 %v1965
          %1985 = vmatprep.subr.bf16.mxu0 0
          %1986 = vmatpush1.bf16.msra.mxu0 %v1966
          %1987 = vmatprep.subr.bf16.mxu0 0
          %1988 = vmatpush1.bf16.msra.mxu0 %v1967
          %1989 = vmatprep.subr.bf16.mxu0 0
          %1990 = vmatpush1.bf16.msra.mxu0 %v1968
          %1991 = vmatprep.subr.bf16.mxu0 0
          %1992 = vmatpush1.bf16.msra.mxu0 %v1969
          %1993 = vmatprep.subr.bf16.mxu0 0
          %1994 = vmatpush1.bf16.msra.mxu0 %v1970
          %1995 = vmatprep.subr.bf16.mxu0 0
          %1996 = vmatpush1.bf16.msra.mxu0 0
          %1997 = vmatprep.subr.bf16.mxu0 0
          %1998 = vmatpush1.bf16.msra.mxu0 0
          %1999 = vmatprep.subr.bf16.mxu0 0
          %2000 = vmatpush1.bf16.msra.mxu0 0
          %2001 = vmatprep.subr.bf16.mxu0 0
          %2002 = vmatpush1.bf16.msra.mxu0 0
          %2003 = vmatprep.subr.bf16.mxu0 0
          %2004 = vmatpush1.bf16.msra.mxu0 0
          %2005 = vmatprep.subr.bf16.mxu0 0
          %2006 = vmatpush1.bf16.msra.mxu0 0
          %2007 = vmatprep.subr.bf16.mxu0 0
          %2008 = vmatpush1.bf16.msra.mxu0 0
          %2009 = vmatprep.subr.bf16.mxu0 0
          %2010 = vmatpush1.bf16.msra.mxu0 0
          %2011 = vmatprep.mubr.bf16.mxu0 0
          %2012 = vmatmul.mubr.bf16.gmra.mrb[0].mxu0 %v975
          %v2013 = vpop.f32.mrb[0].mxu0
          %v2014 = vadd.f32 0.0, %v2013
          %v2015 = vpop.f32.mrb[0].mxu0
          %v2016 = vpop.f32.mrb[0].mxu0
          %v2017 = vadd.f32 0.0, %v2016
          %v2018 = vpop.f32.mrb[0].mxu0
          %2019 = vmatprep.mubr.bf16.mxu0 0
          %2020 = vmatmul.mubr.bf16.gmra.mrb[0].mxu0 %v976
          %v2021 = vpop.f32.mrb[0].mxu0
          %v2022 = vadd.f32 0.0, %v2021
          %v2023 = vpop.f32.mrb[0].mxu0
          %v2024 = vpop.f32.mrb[0].mxu0
          %v2025 = vadd.f32 0.0, %v2024
          %v2026 = vpop.f32.mrb[0].mxu0
          %2027 = vmatprep.mubr.bf16.mxu0 0
          %2028 = vmatmul.mubr.bf16.gmra.mrb[0].mxu0 %v977
          %v2029 = vpop.f32.mrb[0].mxu0
          %v2030 = vadd.f32 0.0, %v2029
          %v2031 = vpop.f32.mrb[0].mxu0
          %v2032 = vpop.f32.mrb[0].mxu0
          %v2033 = vadd.f32 0.0, %v2032
          %v2034 = vpop.f32.mrb[0].mxu0
          %2035 = vmatprep.mubr.bf16.mxu0 0
          %2036 = vmatmul.mubr.bf16.gmra.mrb[0].mxu0 %v978
          %v2037 = vpop.f32.mrb[0].mxu0
          %v2038 = vadd.f32 0.0, %v2037
          %v2039 = vpop.f32.mrb[0].mxu0
          %v2040 = vpop.f32.mrb[0].mxu0
          %v2041 = vadd.f32 0.0, %v2040
          %v2042 = vpop.f32.mrb[0].mxu0
          %2043 = vdwg.mxu0
          %v2044 = vpack.c.bf16 %v1678, %v1675
          %v2045 = vpack.c.bf16 %v1686, %v1683
          %v2046 = vpack.c.bf16 %v1694, %v1691
          %v2047 = vpack.c.bf16 %v1702, %v1699
          %v2048 = vpack.c.bf16 %v1791, %v1788
          %v2049 = vpack.c.bf16 %v1799, %v1796
          %v2050 = vpack.c.bf16 %v1807, %v1804
          %v2051 = vpack.c.bf16 %v1815, %v1812
          %v2052 = vpack.c.bf16 %v1904, %v1901
          %v2053 = vpack.c.bf16 %v1912, %v1909
          %v2054 = vpack.c.bf16 %v1920, %v1917
          %v2055 = vpack.c.bf16 %v1928, %v1925
          %v2056 = vpack.c.bf16 %v2017, %v2014
          %v2057 = vpack.c.bf16 %v2025, %v2022
          %v2058 = vpack.c.bf16 %v2033, %v2030
          %v2059 = vpack.c.bf16 %v2041, %v2038
          %2060 = vst.msk [vmem:[#allocation3] sm:$0xff] %vm1511, %v2044
          %2061 = vst.msk [vmem:[#allocation3 + $0x8] sm:$0xff] %vm1511, %v2045
          %2062 = vst.msk [vmem:[#allocation3 + $0x10] sm:$0xff] %vm1511, %v2046
          %2063 = vst.msk [vmem:[#allocation3 + $0x18] sm:$0xff] %vm1511, %v2047
          %2064 = vst.msk [vmem:[#allocation3 + $0x20] sm:$0xff] %vm1511, %v2048
          %2065 = vst.msk [vmem:[#allocation3 + $0x28] sm:$0xff] %vm1511, %v2049
          %2066 = vst.msk [vmem:[#allocation3 + $0x30] sm:$0xff] %vm1511, %v2050
          %2067 = vst.msk [vmem:[#allocation3 + $0x38] sm:$0xff] %vm1511, %v2051
          %2068 = vst.msk [vmem:[#allocation3 + $0x40] sm:$0xff] %vm1511, %v2052
          %2069 = vst.msk [vmem:[#allocation3 + $0x48] sm:$0xff] %vm1511, %v2053
          %2070 = vst.msk [vmem:[#allocation3 + $0x50] sm:$0xff] %vm1511, %v2054
          %2071 = vst.msk [vmem:[#allocation3 + $0x58] sm:$0xff] %vm1511, %v2055
          %2072 = vst.msk [vmem:[#allocation3 + $0x60] sm:$0xff] %vm1511, %v2056
          %2073 = vst.msk [vmem:[#allocation3 + $0x68] sm:$0xff] %vm1511, %v2057
          %2074 = vst.msk [vmem:[#allocation3 + $0x70] sm:$0xff] %vm1511, %v2058
          %2075 = vst.msk [vmem:[#allocation3 + $0x78] sm:$0xff] %vm1511, %v2059
        $region60: #{tpu_custom_call.1} parent=51 // pred_fallthru
          _
        %v2076 = vld [vmem:[%s362] sm:$0xff]
        %v2077 = vld [vmem:[%s362 + $0x8] sm:$0xff]
        %v2078 = vld [vmem:[%s362 + $0x10] sm:$0xff]
        %v2079 = vld [vmem:[%s362 + $0x18] sm:$0xff]
        %v2080 = vld [vmem:[%s362 + $0x20] sm:$0xff]
        %v2081 = vld [vmem:[%s362 + $0x28] sm:$0xff]
        %v2082 = vld [vmem:[%s362 + $0x30] sm:$0xff]
        %v2083 = vld [vmem:[%s362 + $0x38] sm:$0xff]
        %v2084 = vld [vmem:[%s362 + $0x40] sm:$0xff]
        %v2085 = vld [vmem:[%s362 + $0x48] sm:$0xff]
        %v2086 = vld [vmem:[%s362 + $0x50] sm:$0xff]
        %v2087 = vld [vmem:[%s362 + $0x58] sm:$0xff]
        %v2088 = vld [vmem:[%s362 + $0x60] sm:$0xff]
        %v2089 = vld [vmem:[%s362 + $0x68] sm:$0xff]
        %v2090 = vld [vmem:[%s362 + $0x70] sm:$0xff]
        %v2091 = vld [vmem:[%s362 + $0x78] sm:$0xff]
        %v2092 = vpack.c.bf16 %v2077, %v2076
        %v2093 = vpack.c.bf16 %v2079, %v2078
        %v2094 = vpack.c.bf16 %v2081, %v2080
        %v2095 = vpack.c.bf16 %v2083, %v2082
        %v2096 = vpack.c.bf16 %v2085, %v2084
        %v2097 = vpack.c.bf16 %v2087, %v2086
        %v2098 = vpack.c.bf16 %v2089, %v2088
        %v2099 = vpack.c.bf16 %v2091, %v2090
        %v2100 = vld [vmem:[%s2] sm:$0xf]
        %v2101 = vld [vmem:[%s2 + $0x4] sm:$0xf]
        %v2102 = vld [vmem:[%s2 + $0x8] sm:$0xf]
        %v2103 = vld [vmem:[%s2 + $0xc] sm:$0xf]
        %v2104 = vld [vmem:[%s2 + $0x10] sm:$0xf]
        %v2105 = vld [vmem:[%s2 + $0x14] sm:$0xf]
        %v2106 = vld [vmem:[%s2 + $0x18] sm:$0xf]
        %v2107 = vld [vmem:[%s2 + $0x1c] sm:$0xf]
        %v2108 = vld [vmem:[%s2 + $0x20] sm:$0xf]
        %v2109 = vld [vmem:[%s2 + $0x24] sm:$0xf]
        %v2110 = vld [vmem:[%s2 + $0x28] sm:$0xf]
        %v2111 = vld [vmem:[%s2 + $0x2c] sm:$0xf]
        %v2112 = vld [vmem:[%s2 + $0x30] sm:$0xf]
        %v2113 = vld [vmem:[%s2 + $0x34] sm:$0xf]
        %v2114 = vld [vmem:[%s2 + $0x38] sm:$0xf]
        %v2115 = vld [vmem:[%s2 + $0x3c] sm:$0xf]
        %v2116 = vld [vmem:[%s2 + $0x40] sm:$0xf]
        %v2117 = vld [vmem:[%s2 + $0x44] sm:$0xf]
        %v2118 = vld [vmem:[%s2 + $0x48] sm:$0xf]
        %v2119 = vld [vmem:[%s2 + $0x4c] sm:$0xf]
        %v2120 = vld [vmem:[%s2 + $0x50] sm:$0xf]
        %v2121 = vld [vmem:[%s2 + $0x54] sm:$0xf]
        %v2122 = vld [vmem:[%s2 + $0x58] sm:$0xf]
        %v2123 = vld [vmem:[%s2 + $0x5c] sm:$0xf]
        %v2124 = vld [vmem:[%s2 + $0x60] sm:$0xf]
        %v2125 = vld [vmem:[%s2 + $0x64] sm:$0xf]
        %v2126 = vld [vmem:[%s2 + $0x68] sm:$0xf]
        %v2127 = vld [vmem:[%s2 + $0x6c] sm:$0xf]
        %v2128 = vld [vmem:[%s2 + $0x70] sm:$0xf]
        %v2129 = vld [vmem:[%s2 + $0x74] sm:$0xf]
        %v2130 = vld [vmem:[%s2 + $0x78] sm:$0xf]
        %v2131 = vld [vmem:[%s2 + $0x7c] sm:$0xf]
        %v2132 = vld [vmem:[%s2 + $0x80] sm:$0xf]
        %v2133 = vld [vmem:[%s2 + $0x84] sm:$0xf]
        %v2134 = vld [vmem:[%s2 + $0x88] sm:$0xf]
        %v2135 = vld [vmem:[%s2 + $0x8c] sm:$0xf]
        %v2136 = vld [vmem:[%s2 + $0x90] sm:$0xf]
        %v2137 = vld [vmem:[%s2 + $0x94] sm:$0xf]
        %v2138 = vld [vmem:[%s2 + $0x98] sm:$0xf]
        %v2139 = vld [vmem:[%s2 + $0x9c] sm:$0xf]
        %v2140 = vld [vmem:[%s2 + $0xa0] sm:$0xf]
        %v2141 = vld [vmem:[%s2 + $0xa4] sm:$0xf]
        %v2142 = vld [vmem:[%s2 + $0xa8] sm:$0xf]
        %v2143 = vld [vmem:[%s2 + $0xac] sm:$0xf]
        %v2144 = vld [vmem:[%s2 + $0xb0] sm:$0xf]
        %v2145 = vld [vmem:[%s2 + $0xb4] sm:$0xf]
        %v2146 = vld [vmem:[%s2 + $0xb8] sm:$0xf]
        %v2147 = vld [vmem:[%s2 + $0xbc] sm:$0xf]
        %v2148 = vld [vmem:[%s2 + $0xc0] sm:$0xf]
        %v2149 = vld [vmem:[%s2 + $0xc4] sm:$0xf]
        %v2150 = vld [vmem:[%s2 + $0xc8] sm:$0xf]
        %v2151 = vld [vmem:[%s2 + $0xcc] sm:$0xf]
        %v2152 = vld [vmem:[%s2 + $0xd0] sm:$0xf]
        %v2153 = vld [vmem:[%s2 + $0xd4] sm:$0xf]
        %v2154 = vld [vmem:[%s2 + $0xd8] sm:$0xf]
        %v2155 = vld [vmem:[%s2 + $0xdc] sm:$0xf]
        %v2156 = vld [vmem:[%s2 + $0xe0] sm:$0xf]
        %v2157 = vld [vmem:[%s2 + $0xe4] sm:$0xf]
        %v2158 = vld [vmem:[%s2 + $0xe8] sm:$0xf]
        %v2159 = vld [vmem:[%s2 + $0xec] sm:$0xf]
        %v2160 = vld [vmem:[%s2 + $0xf0] sm:$0xf]
        %v2161 = vld [vmem:[%s2 + $0xf4] sm:$0xf]
        %v2162 = vld [vmem:[%s2 + $0xf8] sm:$0xf]
        %v2163 = vld [vmem:[%s2 + $0xfc] sm:$0xf]
        %v2180 = vunpack.c.l.b16 %v2100
        %v2181 = vunpack.c.l.b16 %v2101
        %v2182 = vunpack.c.l.b16 %v2102
        %v2183 = vunpack.c.l.b16 %v2103
        %v2184 = vunpack.c.l.b16 %v2104
        %v2185 = vunpack.c.l.b16 %v2105
        %v2186 = vunpack.c.l.b16 %v2106
        %v2187 = vunpack.c.l.b16 %v2107
        %v2188 = vunpack.c.l.b16 %v2108
        %v2189 = vunpack.c.l.b16 %v2109
        %v2190 = vunpack.c.l.b16 %v2110
        %v2191 = vunpack.c.l.b16 %v2111
        %v2192 = vunpack.c.l.b16 %v2112
        %v2193 = vunpack.c.l.b16 %v2113
        %v2194 = vunpack.c.l.b16 %v2114
        %v2195 = vunpack.c.l.b16 %v2115
        %v2196 = vpack.c.b16 %v2181, %v2180
        %v2197 = vpack.c.b16 %v2183, %v2182
        %v2198 = vpack.c.b16 %v2185, %v2184
        %v2199 = vpack.c.b16 %v2187, %v2186
        %v2200 = vpack.c.b16 %v2189, %v2188
        %v2201 = vpack.c.b16 %v2191, %v2190
        %v2202 = vpack.c.b16 %v2193, %v2192
        %v2203 = vpack.c.b16 %v2195, %v2194
        %2212 = vmatprep.subr.bf16.mxu0 0
        %2213 = vmatpush1.bf16.msra.mxu0 %v2196
        %2214 = vmatprep.subr.bf16.mxu0 0
        %2215 = vmatpush1.bf16.msra.mxu0 %v2197
        %2216 = vmatprep.subr.bf16.mxu0 0
        %2217 = vmatpush1.bf16.msra.mxu0 %v2198
        %2218 = vmatprep.subr.bf16.mxu0 0
        %2219 = vmatpush1.bf16.msra.mxu0 %v2199
        %2220 = vmatprep.subr.bf16.mxu0 0
        %2221 = vmatpush1.bf16.msra.mxu0 %v2200
        %2222 = vmatprep.subr.bf16.mxu0 0
        %2223 = vmatpush1.bf16.msra.mxu0 %v2201
        %2224 = vmatprep.subr.bf16.mxu0 0
        %2225 = vmatpush1.bf16.msra.mxu0 %v2202
        %2226 = vmatprep.subr.bf16.mxu0 0
        %2227 = vmatpush1.bf16.msra.mxu0 %v2203
        %2228 = vmatprep.subr.bf16.mxu0 0
        %2229 = vmatpush1.bf16.msra.mxu0 0
        %2230 = vmatprep.subr.bf16.mxu0 0
        %2231 = vmatpush1.bf16.msra.mxu0 0
        %2232 = vmatprep.subr.bf16.mxu0 0
        %2233 = vmatpush1.bf16.msra.mxu0 0
        %2234 = vmatprep.subr.bf16.mxu0 0
        %2235 = vmatpush1.bf16.msra.mxu0 0
        %2236 = vmatprep.subr.bf16.mxu0 0
        %2237 = vmatpush1.bf16.msra.mxu0 0
        %2238 = vmatprep.subr.bf16.mxu0 0
        %2239 = vmatpush1.bf16.msra.mxu0 0
        %2240 = vmatprep.subr.bf16.mxu0 0
        %2241 = vmatpush1.bf16.msra.mxu0 0
        %2242 = vmatprep.subr.bf16.mxu0 0
        %2243 = vmatpush1.bf16.msra.mxu0 0
        %2244 = vmatprep.mubr.bf16.mxu0 0
        %2245 = vmatmul.mubr.bf16.gmra.mrb[0].mxu0 %v2092
        %v2246 = vpop.f32.mrb[0].mxu0
        %v2247 = vadd.f32 0.0, %v2246
        %v2248 = vpop.f32.mrb[0].mxu0
        %v2249 = vpop.f32.mrb[0].mxu0
        %v2250 = vadd.f32 0.0, %v2249
        %v2251 = vpop.f32.mrb[0].mxu0
        %2252 = vmatprep.mubr.bf16.mxu0 0
        %2253 = vmatmul.mubr.bf16.gmra.mrb[0].mxu0 %v2093
        %v2254 = vpop.f32.mrb[0].mxu0
        %v2255 = vadd.f32 0.0, %v2254
        %v2256 = vpop.f32.mrb[0].mxu0
        %v2257 = vpop.f32.mrb[0].mxu0
        %v2258 = vadd.f32 0.0, %v2257
        %v2259 = vpop.f32.mrb[0].mxu0
        %2260 = vmatprep.mubr.bf16.mxu0 0
        %2261 = vmatmul.mubr.bf16.gmra.mrb[0].mxu0 %v2094
        %v2262 = vpop.f32.mrb[0].mxu0
        %v2263 = vadd.f32 0.0, %v2262
        %v2264 = vpop.f32.mrb[0].mxu0
        %v2265 = vpop.f32.mrb[0].mxu0
        %v2266 = vadd.f32 0.0, %v2265
        %v2267 = vpop.f32.mrb[0].mxu0
        %2268 = vmatprep.mubr.bf16.mxu0 0
        %2269 = vmatmul.mubr.bf16.gmra.mrb[0].mxu0 %v2095
        %v2270 = vpop.f32.mrb[0].mxu0
        %v2271 = vadd.f32 0.0, %v2270
        %v2272 = vpop.f32.mrb[0].mxu0
        %v2273 = vpop.f32.mrb[0].mxu0
        %v2274 = vadd.f32 0.0, %v2273
        %v2275 = vpop.f32.mrb[0].mxu0
        %2276 = vmatprep.mubr.bf16.mxu0 0
        %2277 = vmatmul.mubr.bf16.gmra.mrb[0].mxu0 %v2096
        %v2278 = vpop.f32.mrb[0].mxu0
        %v2279 = vadd.f32 0.0, %v2278
        %v2280 = vpop.f32.mrb[0].mxu0
        %v2281 = vpop.f32.mrb[0].mxu0
        %v2282 = vadd.f32 0.0, %v2281
        %v2283 = vpop.f32.mrb[0].mxu0
        %2284 = vmatprep.mubr.bf16.mxu0 0
        %2285 = vmatmul.mubr.bf16.gmra.mrb[0].mxu0 %v2097
        %v2286 = vpop.f32.mrb[0].mxu0
        %v2287 = vadd.f32 0.0, %v2286
        %v2288 = vpop.f32.mrb[0].mxu0
        %v2289 = vpop.f32.mrb[0].mxu0
        %v2290 = vadd.f32 0.0, %v2289
        %v2291 = vpop.f32.mrb[0].mxu0
        %2292 = vmatprep.mubr.bf16.mxu0 0
        %2293 = vmatmul.mubr.bf16.gmra.mrb[0].mxu0 %v2098
        %v2294 = vpop.f32.mrb[0].mxu0
        %v2295 = vadd.f32 0.0, %v2294
        %v2296 = vpop.f32.mrb[0].mxu0
        %v2297 = vpop.f32.mrb[0].mxu0
        %v2298 = vadd.f32 0.0, %v2297
        %v2299 = vpop.f32.mrb[0].mxu0
        %2300 = vmatprep.mubr.bf16.mxu0 0
        %2301 = vmatmul.mubr.bf16.gmra.mrb[0].mxu0 %v2099
        %v2302 = vpop.f32.mrb[0].mxu0
        %v2303 = vadd.f32 0.0, %v2302
        %v2304 = vpop.f32.mrb[0].mxu0
        %v2305 = vpop.f32.mrb[0].mxu0
        %v2306 = vadd.f32 0.0, %v2305
        %v2307 = vpop.f32.mrb[0].mxu0
        %2308 = vdwg.mxu0
        %v2325 = vunpack.c.l.b16 %v2116
        %v2326 = vunpack.c.l.b16 %v2117
        %v2327 = vunpack.c.l.b16 %v2118
        %v2328 = vunpack.c.l.b16 %v2119
        %v2329 = vunpack.c.l.b16 %v2120
        %v2330 = vunpack.c.l.b16 %v2121
        %v2331 = vunpack.c.l.b16 %v2122
        %v2332 = vunpack.c.l.b16 %v2123
        %v2333 = vunpack.c.l.b16 %v2124
        %v2334 = vunpack.c.l.b16 %v2125
        %v2335 = vunpack.c.l.b16 %v2126
        %v2336 = vunpack.c.l.b16 %v2127
        %v2337 = vunpack.c.l.b16 %v2128
        %v2338 = vunpack.c.l.b16 %v2129
        %v2339 = vunpack.c.l.b16 %v2130
        %v2340 = vunpack.c.l.b16 %v2131
        %v2341 = vpack.c.b16 %v2326, %v2325
        %v2342 = vpack.c.b16 %v2328, %v2327
        %v2343 = vpack.c.b16 %v2330, %v2329
        %v2344 = vpack.c.b16 %v2332, %v2331
        %v2345 = vpack.c.b16 %v2334, %v2333
        %v2346 = vpack.c.b16 %v2336, %v2335
        %v2347 = vpack.c.b16 %v2338, %v2337
        %v2348 = vpack.c.b16 %v2340, %v2339
        %2357 = vmatprep.subr.bf16.mxu0 0
        %2358 = vmatpush1.bf16.msra.mxu0 %v2341
        %2359 = vmatprep.subr.bf16.mxu0 0
        %2360 = vmatpush1.bf16.msra.mxu0 %v2342
        %2361 = vmatprep.subr.bf16.mxu0 0
        %2362 = vmatpush1.bf16.msra.mxu0 %v2343
        %2363 = vmatprep.subr.bf16.mxu0 0
        %2364 = vmatpush1.bf16.msra.mxu0 %v2344
        %2365 = vmatprep.subr.bf16.mxu0 0
        %2366 = vmatpush1.bf16.msra.mxu0 %v2345
        %2367 = vmatprep.subr.bf16.mxu0 0
        %2368 = vmatpush1.bf16.msra.mxu0 %v2346
        %2369 = vmatprep.subr.bf16.mxu0 0
        %2370 = vmatpush1.bf16.msra.mxu0 %v2347
        %2371 = vmatprep.subr.bf16.mxu0 0
        %2372 = vmatpush1.bf16.msra.mxu0 %v2348
        %2373 = vmatprep.subr.bf16.mxu0 0
        %2374 = vmatpush1.bf16.msra.mxu0 0
        %2375 = vmatprep.subr.bf16.mxu0 0
        %2376 = vmatpush1.bf16.msra.mxu0 0
        %2377 = vmatprep.subr.bf16.mxu0 0
        %2378 = vmatpush1.bf16.msra.mxu0 0
        %2379 = vmatprep.subr.bf16.mxu0 0
        %2380 = vmatpush1.bf16.msra.mxu0 0
        %2381 = vmatprep.subr.bf16.mxu0 0
        %2382 = vmatpush1.bf16.msra.mxu0 0
        %2383 = vmatprep.subr.bf16.mxu0 0
        %2384 = vmatpush1.bf16.msra.mxu0 0
        %2385 = vmatprep.subr.bf16.mxu0 0
        %2386 = vmatpush1.bf16.msra.mxu0 0
        %2387 = vmatprep.subr.bf16.mxu0 0
        %2388 = vmatpush1.bf16.msra.mxu0 0
        %2389 = vmatprep.mubr.bf16.mxu0 0
        %2390 = vmatmul.mubr.bf16.gmra.mrb[0].mxu0 %v2092
        %v2391 = vpop.f32.mrb[0].mxu0
        %v2392 = vadd.f32 0.0, %v2391
        %v2393 = vpop.f32.mrb[0].mxu0
        %v2394 = vpop.f32.mrb[0].mxu0
        %v2395 = vadd.f32 0.0, %v2394
        %v2396 = vpop.f32.mrb[0].mxu0
        %2397 = vmatprep.mubr.bf16.mxu0 0
        %2398 = vmatmul.mubr.bf16.gmra.mrb[0].mxu0 %v2093
        %v2399 = vpop.f32.mrb[0].mxu0
        %v2400 = vadd.f32 0.0, %v2399
        %v2401 = vpop.f32.mrb[0].mxu0
        %v2402 = vpop.f32.mrb[0].mxu0
        %v2403 = vadd.f32 0.0, %v2402
        %v2404 = vpop.f32.mrb[0].mxu0
        %2405 = vmatprep.mubr.bf16.mxu0 0
        %2406 = vmatmul.mubr.bf16.gmra.mrb[0].mxu0 %v2094
        %v2407 = vpop.f32.mrb[0].mxu0
        %v2408 = vadd.f32 0.0, %v2407
        %v2409 = vpop.f32.mrb[0].mxu0
        %v2410 = vpop.f32.mrb[0].mxu0
        %v2411 = vadd.f32 0.0, %v2410
        %v2412 = vpop.f32.mrb[0].mxu0
        %2413 = vmatprep.mubr.bf16.mxu0 0
        %2414 = vmatmul.mubr.bf16.gmra.mrb[0].mxu0 %v2095
        %v2415 = vpop.f32.mrb[0].mxu0
        %v2416 = vadd.f32 0.0, %v2415
        %v2417 = vpop.f32.mrb[0].mxu0
        %v2418 = vpop.f32.mrb[0].mxu0
        %v2419 = vadd.f32 0.0, %v2418
        %v2420 = vpop.f32.mrb[0].mxu0
        %2421 = vmatprep.mubr.bf16.mxu0 0
        %2422 = vmatmul.mubr.bf16.gmra.mrb[0].mxu0 %v2096
        %v2423 = vpop.f32.mrb[0].mxu0
        %v2424 = vadd.f32 0.0, %v2423
        %v2425 = vpop.f32.mrb[0].mxu0
        %v2426 = vpop.f32.mrb[0].mxu0
        %v2427 = vadd.f32 0.0, %v2426
        %v2428 = vpop.f32.mrb[0].mxu0
        %2429 = vmatprep.mubr.bf16.mxu0 0
        %2430 = vmatmul.mubr.bf16.gmra.mrb[0].mxu0 %v2097
        %v2431 = vpop.f32.mrb[0].mxu0
        %v2432 = vadd.f32 0.0, %v2431
        %v2433 = vpop.f32.mrb[0].mxu0
        %v2434 = vpop.f32.mrb[0].mxu0
        %v2435 = vadd.f32 0.0, %v2434
        %v2436 = vpop.f32.mrb[0].mxu0
        %2437 = vmatprep.mubr.bf16.mxu0 0
        %2438 = vmatmul.mubr.bf16.gmra.mrb[0].mxu0 %v2098
        %v2439 = vpop.f32.mrb[0].mxu0
        %v2440 = vadd.f32 0.0, %v2439
        %v2441 = vpop.f32.mrb[0].mxu0
        %v2442 = vpop.f32.mrb[0].mxu0
        %v2443 = vadd.f32 0.0, %v2442
        %v2444 = vpop.f32.mrb[0].mxu0
        %2445 = vmatprep.mubr.bf16.mxu0 0
        %2446 = vmatmul.mubr.bf16.gmra.mrb[0].mxu0 %v2099
        %v2447 = vpop.f32.mrb[0].mxu0
        %v2448 = vadd.f32 0.0, %v2447
        %v2449 = vpop.f32.mrb[0].mxu0
        %v2450 = vpop.f32.mrb[0].mxu0
        %v2451 = vadd.f32 0.0, %v2450
        %v2452 = vpop.f32.mrb[0].mxu0
        %2453 = vdwg.mxu0
        %v2470 = vunpack.c.l.b16 %v2132
        %v2471 = vunpack.c.l.b16 %v2133
        %v2472 = vunpack.c.l.b16 %v2134
        %v2473 = vunpack.c.l.b16 %v2135
        %v2474 = vunpack.c.l.b16 %v2136
        %v2475 = vunpack.c.l.b16 %v2137
        %v2476 = vunpack.c.l.b16 %v2138
        %v2477 = vunpack.c.l.b16 %v2139
        %v2478 = vunpack.c.l.b16 %v2140
        %v2479 = vunpack.c.l.b16 %v2141
        %v2480 = vunpack.c.l.b16 %v2142
        %v2481 = vunpack.c.l.b16 %v2143
        %v2482 = vunpack.c.l.b16 %v2144
        %v2483 = vunpack.c.l.b16 %v2145
        %v2484 = vunpack.c.l.b16 %v2146
        %v2485 = vunpack.c.l.b16 %v2147
        %v2486 = vpack.c.b16 %v2471, %v2470
        %v2487 = vpack.c.b16 %v2473, %v2472
        %v2488 = vpack.c.b16 %v2475, %v2474
        %v2489 = vpack.c.b16 %v2477, %v2476
        %v2490 = vpack.c.b16 %v2479, %v2478
        %v2491 = vpack.c.b16 %v2481, %v2480
        %v2492 = vpack.c.b16 %v2483, %v2482
        %v2493 = vpack.c.b16 %v2485, %v2484
        %2502 = vmatprep.subr.bf16.mxu0 0
        %2503 = vmatpush1.bf16.msra.mxu0 %v2486
        %2504 = vmatprep.subr.bf16.mxu0 0
        %2505 = vmatpush1.bf16.msra.mxu0 %v2487
        %2506 = vmatprep.subr.bf16.mxu0 0
        %2507 = vmatpush1.bf16.msra.mxu0 %v2488
        %2508 = vmatprep.subr.bf16.mxu0 0
        %2509 = vmatpush1.bf16.msra.mxu0 %v2489
        %2510 = vmatprep.subr.bf16.mxu0 0
        %2511 = vmatpush1.bf16.msra.mxu0 %v2490
        %2512 = vmatprep.subr.bf16.mxu0 0
        %2513 = vmatpush1.bf16.msra.mxu0 %v2491
        %2514 = vmatprep.subr.bf16.mxu0 0
        %2515 = vmatpush1.bf16.msra.mxu0 %v2492
        %2516 = vmatprep.subr.bf16.mxu0 0
        %2517 = vmatpush1.bf16.msra.mxu0 %v2493
        %2518 = vmatprep.subr.bf16.mxu0 0
        %2519 = vmatpush1.bf16.msra.mxu0 0
        %2520 = vmatprep.subr.bf16.mxu0 0
        %2521 = vmatpush1.bf16.msra.mxu0 0
        %2522 = vmatprep.subr.bf16.mxu0 0
        %2523 = vmatpush1.bf16.msra.mxu0 0
        %2524 = vmatprep.subr.bf16.mxu0 0
        %2525 = vmatpush1.bf16.msra.mxu0 0
        %2526 = vmatprep.subr.bf16.mxu0 0
        %2527 = vmatpush1.bf16.msra.mxu0 0
        %2528 = vmatprep.subr.bf16.mxu0 0
        %2529 = vmatpush1.bf16.msra.mxu0 0
        %2530 = vmatprep.subr.bf16.mxu0 0
        %2531 = vmatpush1.bf16.msra.mxu0 0
        %2532 = vmatprep.subr.bf16.mxu0 0
        %2533 = vmatpush1.bf16.msra.mxu0 0
        %2534 = vmatprep.mubr.bf16.mxu0 0
        %2535 = vmatmul.mubr.bf16.gmra.mrb[0].mxu0 %v2092
        %v2536 = vpop.f32.mrb[0].mxu0
        %v2537 = vadd.f32 0.0, %v2536
        %v2538 = vpop.f32.mrb[0].mxu0
        %v2539 = vpop.f32.mrb[0].mxu0
        %v2540 = vadd.f32 0.0, %v2539
        %v2541 = vpop.f32.mrb[0].mxu0
        %2542 = vmatprep.mubr.bf16.mxu0 0
        %2543 = vmatmul.mubr.bf16.gmra.mrb[0].mxu0 %v2093
        %v2544 = vpop.f32.mrb[0].mxu0
        %v2545 = vadd.f32 0.0, %v2544
        %v2546 = vpop.f32.mrb[0].mxu0
        %v2547 = vpop.f32.mrb[0].mxu0
        %v2548 = vadd.f32 0.0, %v2547
        %v2549 = vpop.f32.mrb[0].mxu0
        %2550 = vmatprep.mubr.bf16.mxu0 0
        %2551 = vmatmul.mubr.bf16.gmra.mrb[0].mxu0 %v2094
        %v2552 = vpop.f32.mrb[0].mxu0
        %v2553 = vadd.f32 0.0, %v2552
        %v2554 = vpop.f32.mrb[0].mxu0
        %v2555 = vpop.f32.mrb[0].mxu0
        %v2556 = vadd.f32 0.0, %v2555
        %v2557 = vpop.f32.mrb[0].mxu0
        %2558 = vmatprep.mubr.bf16.mxu0 0
        %2559 = vmatmul.mubr.bf16.gmra.mrb[0].mxu0 %v2095
        %v2560 = vpop.f32.mrb[0].mxu0
        %v2561 = vadd.f32 0.0, %v2560
        %v2562 = vpop.f32.mrb[0].mxu0
        %v2563 = vpop.f32.mrb[0].mxu0
        %v2564 = vadd.f32 0.0, %v2563
        %v2565 = vpop.f32.mrb[0].mxu0
        %2566 = vmatprep.mubr.bf16.mxu0 0
        %2567 = vmatmul.mubr.bf16.gmra.mrb[0].mxu0 %v2096
        %v2568 = vpop.f32.mrb[0].mxu0
        %v2569 = vadd.f32 0.0, %v2568
        %v2570 = vpop.f32.mrb[0].mxu0
        %v2571 = vpop.f32.mrb[0].mxu0
        %v2572 = vadd.f32 0.0, %v2571
        %v2573 = vpop.f32.mrb[0].mxu0
        %2574 = vmatprep.mubr.bf16.mxu0 0
        %2575 = vmatmul.mubr.bf16.gmra.mrb[0].mxu0 %v2097
        %v2576 = vpop.f32.mrb[0].mxu0
        %v2577 = vadd.f32 0.0, %v2576
        %v2578 = vpop.f32.mrb[0].mxu0
        %v2579 = vpop.f32.mrb[0].mxu0
        %v2580 = vadd.f32 0.0, %v2579
        %v2581 = vpop.f32.mrb[0].mxu0
        %2582 = vmatprep.mubr.bf16.mxu0 0
        %2583 = vmatmul.mubr.bf16.gmra.mrb[0].mxu0 %v2098
        %v2584 = vpop.f32.mrb[0].mxu0
        %v2585 = vadd.f32 0.0, %v2584
        %v2586 = vpop.f32.mrb[0].mxu0
        %v2587 = vpop.f32.mrb[0].mxu0
        %v2588 = vadd.f32 0.0, %v2587
        %v2589 = vpop.f32.mrb[0].mxu0
        %2590 = vmatprep.mubr.bf16.mxu0 0
        %2591 = vmatmul.mubr.bf16.gmra.mrb[0].mxu0 %v2099
        %v2592 = vpop.f32.mrb[0].mxu0
        %v2593 = vadd.f32 0.0, %v2592
        %v2594 = vpop.f32.mrb[0].mxu0
        %v2595 = vpop.f32.mrb[0].mxu0
        %v2596 = vadd.f32 0.0, %v2595
        %v2597 = vpop.f32.mrb[0].mxu0
        %2598 = vdwg.mxu0
        %v2615 = vunpack.c.l.b16 %v2148
        %v2616 = vunpack.c.l.b16 %v2149
        %v2617 = vunpack.c.l.b16 %v2150
        %v2618 = vunpack.c.l.b16 %v2151
        %v2619 = vunpack.c.l.b16 %v2152
        %v2620 = vunpack.c.l.b16 %v2153
        %v2621 = vunpack.c.l.b16 %v2154
        %v2622 = vunpack.c.l.b16 %v2155
        %v2623 = vunpack.c.l.b16 %v2156
        %v2624 = vunpack.c.l.b16 %v2157
        %v2625 = vunpack.c.l.b16 %v2158
        %v2626 = vunpack.c.l.b16 %v2159
        %v2627 = vunpack.c.l.b16 %v2160
        %v2628 = vunpack.c.l.b16 %v2161
        %v2629 = vunpack.c.l.b16 %v2162
        %v2630 = vunpack.c.l.b16 %v2163
        %v2631 = vpack.c.b16 %v2616, %v2615
        %v2632 = vpack.c.b16 %v2618, %v2617
        %v2633 = vpack.c.b16 %v2620, %v2619
        %v2634 = vpack.c.b16 %v2622, %v2621
        %v2635 = vpack.c.b16 %v2624, %v2623
        %v2636 = vpack.c.b16 %v2626, %v2625
        %v2637 = vpack.c.b16 %v2628, %v2627
        %v2638 = vpack.c.b16 %v2630, %v2629
        %2647 = vmatprep.subr.bf16.mxu0 0
        %2648 = vmatpush1.bf16.msra.mxu0 %v2631
        %2649 = vmatprep.subr.bf16.mxu0 0
        %2650 = vmatpush1.bf16.msra.mxu0 %v2632
        %2651 = vmatprep.subr.bf16.mxu0 0
        %2652 = vmatpush1.bf16.msra.mxu0 %v2633
        %2653 = vmatprep.subr.bf16.mxu0 0
        %2654 = vmatpush1.bf16.msra.mxu0 %v2634
        %2655 = vmatprep.subr.bf16.mxu0 0
        %2656 = vmatpush1.bf16.msra.mxu0 %v2635
        %2657 = vmatprep.subr.bf16.mxu0 0
        %2658 = vmatpush1.bf16.msra.mxu0 %v2636
        %2659 = vmatprep.subr.bf16.mxu0 0
        %2660 = vmatpush1.bf16.msra.mxu0 %v2637
        %2661 = vmatprep.subr.bf16.mxu0 0
        %2662 = vmatpush1.bf16.msra.mxu0 %v2638
        %2663 = vmatprep.subr.bf16.mxu0 0
        %2664 = vmatpush1.bf16.msra.mxu0 0
        %2665 = vmatprep.subr.bf16.mxu0 0
        %2666 = vmatpush1.bf16.msra.mxu0 0
        %2667 = vmatprep.subr.bf16.mxu0 0
        %2668 = vmatpush1.bf16.msra.mxu0 0
        %2669 = vmatprep.subr.bf16.mxu0 0
        %2670 = vmatpush1.bf16.msra.mxu0 0
        %2671 = vmatprep.subr.bf16.mxu0 0
        %2672 = vmatpush1.bf16.msra.mxu0 0
        %2673 = vmatprep.subr.bf16.mxu0 0
        %2674 = vmatpush1.bf16.msra.mxu0 0
        %2675 = vmatprep.subr.bf16.mxu0 0
        %2676 = vmatpush1.bf16.msra.mxu0 0
        %2677 = vmatprep.subr.bf16.mxu0 0
        %2678 = vmatpush1.bf16.msra.mxu0 0
        %2679 = vmatprep.mubr.bf16.mxu0 0
        %2680 = vmatmul.mubr.bf16.gmra.mrb[0].mxu0 %v2092
        %v2681 = vpop.f32.mrb[0].mxu0
        %v2682 = vadd.f32 0.0, %v2681
        %v2683 = vpop.f32.mrb[0].mxu0
        %v2684 = vpop.f32.mrb[0].mxu0
        %v2685 = vadd.f32 0.0, %v2684
        %v2686 = vpop.f32.mrb[0].mxu0
        %2687 = vmatprep.mubr.bf16.mxu0 0
        %2688 = vmatmul.mubr.bf16.gmra.mrb[0].mxu0 %v2093
        %v2689 = vpop.f32.mrb[0].mxu0
        %v2690 = vadd.f32 0.0, %v2689
        %v2691 = vpop.f32.mrb[0].mxu0
        %v2692 = vpop.f32.mrb[0].mxu0
        %v2693 = vadd.f32 0.0, %v2692
        %v2694 = vpop.f32.mrb[0].mxu0
        %2695 = vmatprep.mubr.bf16.mxu0 0
        %2696 = vmatmul.mubr.bf16.gmra.mrb[0].mxu0 %v2094
        %v2697 = vpop.f32.mrb[0].mxu0
        %v2698 = vadd.f32 0.0, %v2697
        %v2699 = vpop.f32.mrb[0].mxu0
        %v2700 = vpop.f32.mrb[0].mxu0
        %v2701 = vadd.f32 0.0, %v2700
        %v2702 = vpop.f32.mrb[0].mxu0
        %2703 = vmatprep.mubr.bf16.mxu0 0
        %2704 = vmatmul.mubr.bf16.gmra.mrb[0].mxu0 %v2095
        %v2705 = vpop.f32.mrb[0].mxu0
        %v2706 = vadd.f32 0.0, %v2705
        %v2707 = vpop.f32.mrb[0].mxu0
        %v2708 = vpop.f32.mrb[0].mxu0
        %v2709 = vadd.f32 0.0, %v2708
        %v2710 = vpop.f32.mrb[0].mxu0
        %2711 = vmatprep.mubr.bf16.mxu0 0
        %2712 = vmatmul.mubr.bf16.gmra.mrb[0].mxu0 %v2096
        %v2713 = vpop.f32.mrb[0].mxu0
        %v2714 = vadd.f32 0.0, %v2713
        %v2715 = vpop.f32.mrb[0].mxu0
        %v2716 = vpop.f32.mrb[0].mxu0
        %v2717 = vadd.f32 0.0, %v2716
        %v2718 = vpop.f32.mrb[0].mxu0
        %2719 = vmatprep.mubr.bf16.mxu0 0
        %2720 = vmatmul.mubr.bf16.gmra.mrb[0].mxu0 %v2097
        %v2721 = vpop.f32.mrb[0].mxu0
        %v2722 = vadd.f32 0.0, %v2721
        %v2723 = vpop.f32.mrb[0].mxu0
        %v2724 = vpop.f32.mrb[0].mxu0
        %v2725 = vadd.f32 0.0, %v2724
        %v2726 = vpop.f32.mrb[0].mxu0
        %2727 = vmatprep.mubr.bf16.mxu0 0
        %2728 = vmatmul.mubr.bf16.gmra.mrb[0].mxu0 %v2098
        %v2729 = vpop.f32.mrb[0].mxu0
        %v2730 = vadd.f32 0.0, %v2729
        %v2731 = vpop.f32.mrb[0].mxu0
        %v2732 = vpop.f32.mrb[0].mxu0
        %v2733 = vadd.f32 0.0, %v2732
        %v2734 = vpop.f32.mrb[0].mxu0
        %2735 = vmatprep.mubr.bf16.mxu0 0
        %2736 = vmatmul.mubr.bf16.gmra.mrb[0].mxu0 %v2099
        %v2737 = vpop.f32.mrb[0].mxu0
        %v2738 = vadd.f32 0.0, %v2737
        %v2739 = vpop.f32.mrb[0].mxu0
        %v2740 = vpop.f32.mrb[0].mxu0
        %v2741 = vadd.f32 0.0, %v2740
        %v2742 = vpop.f32.mrb[0].mxu0
        %2743 = vdwg.mxu0
        %v2744 = vpack.c.bf16 %v2250, %v2247
        %v2745 = vpack.c.bf16 %v2258, %v2255
        %v2746 = vpack.c.bf16 %v2266, %v2263
        %v2747 = vpack.c.bf16 %v2274, %v2271
        %v2748 = vpack.c.bf16 %v2282, %v2279
        %v2749 = vpack.c.bf16 %v2290, %v2287
        %v2750 = vpack.c.bf16 %v2298, %v2295
        %v2751 = vpack.c.bf16 %v2306, %v2303
        %v2752 = vpack.c.bf16 %v2395, %v2392
        %v2753 = vpack.c.bf16 %v2403, %v2400
        %v2754 = vpack.c.bf16 %v2411, %v2408
        %v2755 = vpack.c.bf16 %v2419, %v2416
        %v2756 = vpack.c.bf16 %v2427, %v2424
        %v2757 = vpack.c.bf16 %v2435, %v2432
        %v2758 = vpack.c.bf16 %v2443, %v2440
        %v2759 = vpack.c.bf16 %v2451, %v2448
        %v2760 = vpack.c.bf16 %v2540, %v2537
        %v2761 = vpack.c.bf16 %v2548, %v2545
        %v2762 = vpack.c.bf16 %v2556, %v2553
        %v2763 = vpack.c.bf16 %v2564, %v2561
        %v2764 = vpack.c.bf16 %v2572, %v2569
        %v2765 = vpack.c.bf16 %v2580, %v2577
        %v2766 = vpack.c.bf16 %v2588, %v2585
        %v2767 = vpack.c.bf16 %v2596, %v2593
        %v2768 = vpack.c.bf16 %v2685, %v2682
        %v2769 = vpack.c.bf16 %v2693, %v2690
        %v2770 = vpack.c.bf16 %v2701, %v2698
        %v2771 = vpack.c.bf16 %v2709, %v2706
        %v2772 = vpack.c.bf16 %v2717, %v2714
        %v2773 = vpack.c.bf16 %v2725, %v2722
        %v2774 = vpack.c.bf16 %v2733, %v2730
        %v2775 = vpack.c.bf16 %v2741, %v2738
        %v2776 = vld [vmem:[#allocation2] sm:$0xff]
        %v2777 = vld [vmem:[#allocation2 + $0x8] sm:$0xff]
        %v2778 = vld [vmem:[#allocation2 + $0x10] sm:$0xff]
        %v2779 = vld [vmem:[#allocation2 + $0x18] sm:$0xff]
        %v2780 = vld [vmem:[#allocation2 + $0x20] sm:$0xff]
        %v2781 = vld [vmem:[#allocation2 + $0x28] sm:$0xff]
        %v2782 = vld [vmem:[#allocation2 + $0x30] sm:$0xff]
        %v2783 = vld [vmem:[#allocation2 + $0x38] sm:$0xff]
        %v2784 = vld [vmem:[#allocation2 + $0x40] sm:$0xff]
        %v2785 = vld [vmem:[#allocation2 + $0x48] sm:$0xff]
        %v2786 = vld [vmem:[#allocation2 + $0x50] sm:$0xff]
        %v2787 = vld [vmem:[#allocation2 + $0x58] sm:$0xff]
        %v2788 = vld [vmem:[#allocation2 + $0x60] sm:$0xff]
        %v2789 = vld [vmem:[#allocation2 + $0x68] sm:$0xff]
        %v2790 = vld [vmem:[#allocation2 + $0x70] sm:$0xff]
        %v2791 = vld [vmem:[#allocation2 + $0x78] sm:$0xff]
        %vm2792 = vcmask 261120
        %v2794 = vsel %vm2792, %v2744, 0
        %v2797 = vsel %vm2792, %v2745, 0
        %v2800 = vsel %vm2792, %v2746, 0
        %v2803 = vsel %vm2792, %v2747, 0
        %v2806 = vsel %vm2792, %v2748, 0
        %v2809 = vsel %vm2792, %v2749, 0
        %v2812 = vsel %vm2792, %v2750, 0
        %v2815 = vsel %vm2792, %v2751, 0
        %v2818 = vsel %vm2792, %v2776, 0
        %v2821 = vsel %vm2792, %v2777, 0
        %v2824 = vsel %vm2792, %v2778, 0
        %v2827 = vsel %vm2792, %v2779, 0
        %2829 = vmatprep.subr.bf16.mxu0 0
        %2830 = vmatpush1.bf16.xpose.msra.mxu0 %v2818
        %2831 = vmatprep.subr.bf16.mxu0 0
        %2832 = vmatpush1.bf16.xpose.msra.mxu0 %v2821
        %2833 = vmatprep.subr.bf16.mxu0 0
        %2834 = vmatpush1.bf16.xpose.msra.mxu0 %v2824
        %2835 = vmatprep.subr.bf16.mxu0 0
        %2836 = vmatpush1.bf16.xpose.msra.mxu0 %v2827
        %2837 = vmatprep.subr.bf16.mxu0 0
        %2838 = vmatpush1.bf16.xpose.msra.mxu0 0
        %2839 = vmatprep.subr.bf16.mxu0 0
        %2840 = vmatpush1.bf16.xpose.msra.mxu0 0
        %2841 = vmatprep.subr.bf16.mxu0 0
        %2842 = vmatpush1.bf16.xpose.msra.mxu0 0
        %2843 = vmatprep.subr.bf16.mxu0 0
        %2844 = vmatpush1.bf16.xpose.msra.mxu0 0
        %2845 = vmatprep.subr.bf16.mxu0 0
        %2846 = vmatpush1.bf16.xpose.msra.mxu0 0
        %2847 = vmatprep.subr.bf16.mxu0 0
        %2848 = vmatpush1.bf16.xpose.msra.mxu0 0
        %2849 = vmatprep.subr.bf16.mxu0 0
        %2850 = vmatpush1.bf16.xpose.msra.mxu0 0
        %2851 = vmatprep.subr.bf16.mxu0 0
        %2852 = vmatpush1.bf16.xpose.msra.mxu0 0
        %2853 = vmatprep.subr.bf16.mxu0 0
        %2854 = vmatpush1.bf16.xpose.msra.mxu0 0
        %2855 = vmatprep.subr.bf16.mxu0 0
        %2856 = vmatpush1.bf16.xpose.msra.mxu0 0
        %2857 = vmatprep.subr.bf16.mxu0 0
        %2858 = vmatpush1.bf16.xpose.msra.mxu0 0
        %2859 = vmatprep.subr.bf16.mxu0 0
        %2860 = vmatpush1.bf16.xpose.msra.mxu0 0
        %2861 = vmatprep.mubr.bf16.mxu0 0
        %2862 = vmatmul.mubr.bf16.gmra.mrb[0].mxu0 %v2794
        %v2863 = vpop.f32.mrb[0].mxu0
        %v2864 = vadd.f32 0.0, %v2863
        %v2865 = vpop.f32.mrb[0].mxu0
        %v2866 = vpop.f32.mrb[0].mxu0
        %v2867 = vadd.f32 0.0, %v2866
        %v2868 = vpop.f32.mrb[0].mxu0
        %2869 = vmatprep.mubr.bf16.mxu0 0
        %2870 = vmatmul.mubr.bf16.gmra.mrb[0].mxu0 %v2797
        %v2871 = vpop.f32.mrb[0].mxu0
        %v2872 = vadd.f32 0.0, %v2871
        %v2873 = vpop.f32.mrb[0].mxu0
        %v2874 = vpop.f32.mrb[0].mxu0
        %v2875 = vadd.f32 0.0, %v2874
        %v2876 = vpop.f32.mrb[0].mxu0
        %2877 = vmatprep.mubr.bf16.mxu0 0
        %2878 = vmatmul.mubr.bf16.gmra.mrb[0].mxu0 %v2800
        %v2879 = vpop.f32.mrb[0].mxu0
        %v2880 = vadd.f32 0.0, %v2879
        %v2881 = vpop.f32.mrb[0].mxu0
        %v2882 = vpop.f32.mrb[0].mxu0
        %v2883 = vadd.f32 0.0, %v2882
        %v2884 = vpop.f32.mrb[0].mxu0
        %2885 = vmatprep.mubr.bf16.mxu0 0
        %2886 = vmatmul.mubr.bf16.gmra.mrb[0].mxu0 %v2803
        %v2887 = vpop.f32.mrb[0].mxu0
        %v2888 = vadd.f32 0.0, %v2887
        %v2889 = vpop.f32.mrb[0].mxu0
        %v2890 = vpop.f32.mrb[0].mxu0
        %v2891 = vadd.f32 0.0, %v2890
        %v2892 = vpop.f32.mrb[0].mxu0
        %2893 = vmatprep.mubr.bf16.mxu0 0
        %2894 = vmatmul.mubr.bf16.gmra.mrb[0].mxu0 %v2806
        %v2895 = vpop.f32.mrb[0].mxu0
        %v2896 = vadd.f32 0.0, %v2895
        %v2897 = vpop.f32.mrb[0].mxu0
        %v2898 = vpop.f32.mrb[0].mxu0
        %v2899 = vadd.f32 0.0, %v2898
        %v2900 = vpop.f32.mrb[0].mxu0
        %2901 = vmatprep.mubr.bf16.mxu0 0
        %2902 = vmatmul.mubr.bf16.gmra.mrb[0].mxu0 %v2809
        %v2903 = vpop.f32.mrb[0].mxu0
        %v2904 = vadd.f32 0.0, %v2903
        %v2905 = vpop.f32.mrb[0].mxu0
        %v2906 = vpop.f32.mrb[0].mxu0
        %v2907 = vadd.f32 0.0, %v2906
        %v2908 = vpop.f32.mrb[0].mxu0
        %2909 = vmatprep.mubr.bf16.mxu0 0
        %2910 = vmatmul.mubr.bf16.gmra.mrb[0].mxu0 %v2812
        %v2911 = vpop.f32.mrb[0].mxu0
        %v2912 = vadd.f32 0.0, %v2911
        %v2913 = vpop.f32.mrb[0].mxu0
        %v2914 = vpop.f32.mrb[0].mxu0
        %v2915 = vadd.f32 0.0, %v2914
        %v2916 = vpop.f32.mrb[0].mxu0
        %2917 = vmatprep.mubr.bf16.mxu0 0
        %2918 = vmatmul.mubr.bf16.gmra.mrb[0].mxu0 %v2815
        %v2919 = vpop.f32.mrb[0].mxu0
        %v2920 = vadd.f32 0.0, %v2919
        %v2921 = vpop.f32.mrb[0].mxu0
        %v2922 = vpop.f32.mrb[0].mxu0
        %v2923 = vadd.f32 0.0, %v2922
        %v2924 = vpop.f32.mrb[0].mxu0
        %2925 = vdwg.mxu0
        %v2927 = vsel %vm2792, %v2752, 0
        %v2930 = vsel %vm2792, %v2753, 0
        %v2933 = vsel %vm2792, %v2754, 0
        %v2936 = vsel %vm2792, %v2755, 0
        %v2939 = vsel %vm2792, %v2756, 0
        %v2942 = vsel %vm2792, %v2757, 0
        %v2945 = vsel %vm2792, %v2758, 0
        %v2948 = vsel %vm2792, %v2759, 0
        %v2951 = vsel %vm2792, %v2780, 0
        %v2954 = vsel %vm2792, %v2781, 0
        %v2957 = vsel %vm2792, %v2782, 0
        %v2960 = vsel %vm2792, %v2783, 0
        %2962 = vmatprep.subr.bf16.mxu0 0
        %2963 = vmatpush1.bf16.xpose.msra.mxu0 %v2951
        %2964 = vmatprep.subr.bf16.mxu0 0
        %2965 = vmatpush1.bf16.xpose.msra.mxu0 %v2954
        %2966 = vmatprep.subr.bf16.mxu0 0
        %2967 = vmatpush1.bf16.xpose.msra.mxu0 %v2957
        %2968 = vmatprep.subr.bf16.mxu0 0
        %2969 = vmatpush1.bf16.xpose.msra.mxu0 %v2960
        %2970 = vmatprep.subr.bf16.mxu0 0
        %2971 = vmatpush1.bf16.xpose.msra.mxu0 0
        %2972 = vmatprep.subr.bf16.mxu0 0
        %2973 = vmatpush1.bf16.xpose.msra.mxu0 0
        %2974 = vmatprep.subr.bf16.mxu0 0
        %2975 = vmatpush1.bf16.xpose.msra.mxu0 0
        %2976 = vmatprep.subr.bf16.mxu0 0
        %2977 = vmatpush1.bf16.xpose.msra.mxu0 0
        %2978 = vmatprep.subr.bf16.mxu0 0
        %2979 = vmatpush1.bf16.xpose.msra.mxu0 0
        %2980 = vmatprep.subr.bf16.mxu0 0
        %2981 = vmatpush1.bf16.xpose.msra.mxu0 0
        %2982 = vmatprep.subr.bf16.mxu0 0
        %2983 = vmatpush1.bf16.xpose.msra.mxu0 0
        %2984 = vmatprep.subr.bf16.mxu0 0
        %2985 = vmatpush1.bf16.xpose.msra.mxu0 0
        %2986 = vmatprep.subr.bf16.mxu0 0
        %2987 = vmatpush1.bf16.xpose.msra.mxu0 0
        %2988 = vmatprep.subr.bf16.mxu0 0
        %2989 = vmatpush1.bf16.xpose.msra.mxu0 0
        %2990 = vmatprep.subr.bf16.mxu0 0
        %2991 = vmatpush1.bf16.xpose.msra.mxu0 0
        %2992 = vmatprep.subr.bf16.mxu0 0
        %2993 = vmatpush1.bf16.xpose.msra.mxu0 0
        %2994 = vmatprep.mubr.bf16.mxu0 0
        %2995 = vmatmul.mubr.bf16.gmra.mrb[0].mxu0 %v2927
        %v2996 = vpop.f32.mrb[0].mxu0
        %v2997 = vadd.f32 0.0, %v2996
        %v2998 = vpop.f32.mrb[0].mxu0
        %v2999 = vpop.f32.mrb[0].mxu0
        %v3000 = vadd.f32 0.0, %v2999
        %v3001 = vpop.f32.mrb[0].mxu0
        %3002 = vmatprep.mubr.bf16.mxu0 0
        %3003 = vmatmul.mubr.bf16.gmra.mrb[0].mxu0 %v2930
        %v3004 = vpop.f32.mrb[0].mxu0
        %v3005 = vadd.f32 0.0, %v3004
        %v3006 = vpop.f32.mrb[0].mxu0
        %v3007 = vpop.f32.mrb[0].mxu0
        %v3008 = vadd.f32 0.0, %v3007
        %v3009 = vpop.f32.mrb[0].mxu0
        %3010 = vmatprep.mubr.bf16.mxu0 0
        %3011 = vmatmul.mubr.bf16.gmra.mrb[0].mxu0 %v2933
        %v3012 = vpop.f32.mrb[0].mxu0
        %v3013 = vadd.f32 0.0, %v3012
        %v3014 = vpop.f32.mrb[0].mxu0
        %v3015 = vpop.f32.mrb[0].mxu0
        %v3016 = vadd.f32 0.0, %v3015
        %v3017 = vpop.f32.mrb[0].mxu0
        %3018 = vmatprep.mubr.bf16.mxu0 0
        %3019 = vmatmul.mubr.bf16.gmra.mrb[0].mxu0 %v2936
        %v3020 = vpop.f32.mrb[0].mxu0
        %v3021 = vadd.f32 0.0, %v3020
        %v3022 = vpop.f32.mrb[0].mxu0
        %v3023 = vpop.f32.mrb[0].mxu0
        %v3024 = vadd.f32 0.0, %v3023
        %v3025 = vpop.f32.mrb[0].mxu0
        %3026 = vmatprep.mubr.bf16.mxu0 0
        %3027 = vmatmul.mubr.bf16.gmra.mrb[0].mxu0 %v2939
        %v3028 = vpop.f32.mrb[0].mxu0
        %v3029 = vadd.f32 0.0, %v3028
        %v3030 = vpop.f32.mrb[0].mxu0
        %v3031 = vpop.f32.mrb[0].mxu0
        %v3032 = vadd.f32 0.0, %v3031
        %v3033 = vpop.f32.mrb[0].mxu0
        %3034 = vmatprep.mubr.bf16.mxu0 0
        %3035 = vmatmul.mubr.bf16.gmra.mrb[0].mxu0 %v2942
        %v3036 = vpop.f32.mrb[0].mxu0
        %v3037 = vadd.f32 0.0, %v3036
        %v3038 = vpop.f32.mrb[0].mxu0
        %v3039 = vpop.f32.mrb[0].mxu0
        %v3040 = vadd.f32 0.0, %v3039
        %v3041 = vpop.f32.mrb[0].mxu0
        %3042 = vmatprep.mubr.bf16.mxu0 0
        %3043 = vmatmul.mubr.bf16.gmra.mrb[0].mxu0 %v2945
        %v3044 = vpop.f32.mrb[0].mxu0
        %v3045 = vadd.f32 0.0, %v3044
        %v3046 = vpop.f32.mrb[0].mxu0
        %v3047 = vpop.f32.mrb[0].mxu0
        %v3048 = vadd.f32 0.0, %v3047
        %v3049 = vpop.f32.mrb[0].mxu0
        %3050 = vmatprep.mubr.bf16.mxu0 0
        %3051 = vmatmul.mubr.bf16.gmra.mrb[0].mxu0 %v2948
        %v3052 = vpop.f32.mrb[0].mxu0
        %v3053 = vadd.f32 0.0, %v3052
        %v3054 = vpop.f32.mrb[0].mxu0
        %v3055 = vpop.f32.mrb[0].mxu0
        %v3056 = vadd.f32 0.0, %v3055
        %v3057 = vpop.f32.mrb[0].mxu0
        %3058 = vdwg.mxu0
        %v3060 = vsel %vm2792, %v2760, 0
        %v3063 = vsel %vm2792, %v2761, 0
        %v3066 = vsel %vm2792, %v2762, 0
        %v3069 = vsel %vm2792, %v2763, 0
        %v3072 = vsel %vm2792, %v2764, 0
        %v3075 = vsel %vm2792, %v2765, 0
        %v3078 = vsel %vm2792, %v2766, 0
        %v3081 = vsel %vm2792, %v2767, 0
        %v3084 = vsel %vm2792, %v2784, 0
        %v3087 = vsel %vm2792, %v2785, 0
        %v3090 = vsel %vm2792, %v2786, 0
        %v3093 = vsel %vm2792, %v2787, 0
        %3095 = vmatprep.subr.bf16.mxu0 0
        %3096 = vmatpush1.bf16.xpose.msra.mxu0 %v3084
        %3097 = vmatprep.subr.bf16.mxu0 0
        %3098 = vmatpush1.bf16.xpose.msra.mxu0 %v3087
        %3099 = vmatprep.subr.bf16.mxu0 0
        %3100 = vmatpush1.bf16.xpose.msra.mxu0 %v3090
        %3101 = vmatprep.subr.bf16.mxu0 0
        %3102 = vmatpush1.bf16.xpose.msra.mxu0 %v3093
        %3103 = vmatprep.subr.bf16.mxu0 0
        %3104 = vmatpush1.bf16.xpose.msra.mxu0 0
        %3105 = vmatprep.subr.bf16.mxu0 0
        %3106 = vmatpush1.bf16.xpose.msra.mxu0 0
        %3107 = vmatprep.subr.bf16.mxu0 0
        %3108 = vmatpush1.bf16.xpose.msra.mxu0 0
        %3109 = vmatprep.subr.bf16.mxu0 0
        %3110 = vmatpush1.bf16.xpose.msra.mxu0 0
        %3111 = vmatprep.subr.bf16.mxu0 0
        %3112 = vmatpush1.bf16.xpose.msra.mxu0 0
        %3113 = vmatprep.subr.bf16.mxu0 0
        %3114 = vmatpush1.bf16.xpose.msra.mxu0 0
        %3115 = vmatprep.subr.bf16.mxu0 0
        %3116 = vmatpush1.bf16.xpose.msra.mxu0 0
        %3117 = vmatprep.subr.bf16.mxu0 0
        %3118 = vmatpush1.bf16.xpose.msra.mxu0 0
        %3119 = vmatprep.subr.bf16.mxu0 0
        %3120 = vmatpush1.bf16.xpose.msra.mxu0 0
        %3121 = vmatprep.subr.bf16.mxu0 0
        %3122 = vmatpush1.bf16.xpose.msra.mxu0 0
        %3123 = vmatprep.subr.bf16.mxu0 0
        %3124 = vmatpush1.bf16.xpose.msra.mxu0 0
        %3125 = vmatprep.subr.bf16.mxu0 0
        %3126 = vmatpush1.bf16.xpose.msra.mxu0 0
        %3127 = vmatprep.mubr.bf16.mxu0 0
        %3128 = vmatmul.mubr.bf16.gmra.mrb[0].mxu0 %v3060
        %v3129 = vpop.f32.mrb[0].mxu0
        %v3130 = vadd.f32 0.0, %v3129
        %v3131 = vpop.f32.mrb[0].mxu0
        %v3132 = vpop.f32.mrb[0].mxu0
        %v3133 = vadd.f32 0.0, %v3132
        %v3134 = vpop.f32.mrb[0].mxu0
        %3135 = vmatprep.mubr.bf16.mxu0 0
        %3136 = vmatmul.mubr.bf16.gmra.mrb[0].mxu0 %v3063
        %v3137 = vpop.f32.mrb[0].mxu0
        %v3138 = vadd.f32 0.0, %v3137
        %v3139 = vpop.f32.mrb[0].mxu0
        %v3140 = vpop.f32.mrb[0].mxu0
        %v3141 = vadd.f32 0.0, %v3140
        %v3142 = vpop.f32.mrb[0].mxu0
        %3143 = vmatprep.mubr.bf16.mxu0 0
        %3144 = vmatmul.mubr.bf16.gmra.mrb[0].mxu0 %v3066
        %v3145 = vpop.f32.mrb[0].mxu0
        %v3146 = vadd.f32 0.0, %v3145
        %v3147 = vpop.f32.mrb[0].mxu0
        %v3148 = vpop.f32.mrb[0].mxu0
        %v3149 = vadd.f32 0.0, %v3148
        %v3150 = vpop.f32.mrb[0].mxu0
        %3151 = vmatprep.mubr.bf16.mxu0 0
        %3152 = vmatmul.mubr.bf16.gmra.mrb[0].mxu0 %v3069
        %v3153 = vpop.f32.mrb[0].mxu0
        %v3154 = vadd.f32 0.0, %v3153
        %v3155 = vpop.f32.mrb[0].mxu0
        %v3156 = vpop.f32.mrb[0].mxu0
        %v3157 = vadd.f32 0.0, %v3156
        %v3158 = vpop.f32.mrb[0].mxu0
        %3159 = vmatprep.mubr.bf16.mxu0 0
        %3160 = vmatmul.mubr.bf16.gmra.mrb[0].mxu0 %v3072
        %v3161 = vpop.f32.mrb[0].mxu0
        %v3162 = vadd.f32 0.0, %v3161
        %v3163 = vpop.f32.mrb[0].mxu0
        %v3164 = vpop.f32.mrb[0].mxu0
        %v3165 = vadd.f32 0.0, %v3164
        %v3166 = vpop.f32.mrb[0].mxu0
        %3167 = vmatprep.mubr.bf16.mxu0 0
        %3168 = vmatmul.mubr.bf16.gmra.mrb[0].mxu0 %v3075
        %v3169 = vpop.f32.mrb[0].mxu0
        %v3170 = vadd.f32 0.0, %v3169
        %v3171 = vpop.f32.mrb[0].mxu0
        %v3172 = vpop.f32.mrb[0].mxu0
        %v3173 = vadd.f32 0.0, %v3172
        %v3174 = vpop.f32.mrb[0].mxu0
        %3175 = vmatprep.mubr.bf16.mxu0 0
        %3176 = vmatmul.mubr.bf16.gmra.mrb[0].mxu0 %v3078
        %v3177 = vpop.f32.mrb[0].mxu0
        %v3178 = vadd.f32 0.0, %v3177
        %v3179 = vpop.f32.mrb[0].mxu0
        %v3180 = vpop.f32.mrb[0].mxu0
        %v3181 = vadd.f32 0.0, %v3180
        %v3182 = vpop.f32.mrb[0].mxu0
        %3183 = vmatprep.mubr.bf16.mxu0 0
        %3184 = vmatmul.mubr.bf16.gmra.mrb[0].mxu0 %v3081
        %v3185 = vpop.f32.mrb[0].mxu0
        %v3186 = vadd.f32 0.0, %v3185
        %v3187 = vpop.f32.mrb[0].mxu0
        %v3188 = vpop.f32.mrb[0].mxu0
        %v3189 = vadd.f32 0.0, %v3188
        %v3190 = vpop.f32.mrb[0].mxu0
        %3191 = vdwg.mxu0
        %v3193 = vsel %vm2792, %v2768, 0
        %v3196 = vsel %vm2792, %v2769, 0
        %v3199 = vsel %vm2792, %v2770, 0
        %v3202 = vsel %vm2792, %v2771, 0
        %v3205 = vsel %vm2792, %v2772, 0
        %v3208 = vsel %vm2792, %v2773, 0
        %v3211 = vsel %vm2792, %v2774, 0
        %v3214 = vsel %vm2792, %v2775, 0
        %v3217 = vsel %vm2792, %v2788, 0
        %v3220 = vsel %vm2792, %v2789, 0
        %v3223 = vsel %vm2792, %v2790, 0
        %v3226 = vsel %vm2792, %v2791, 0
        %3228 = vmatprep.subr.bf16.mxu0 0
        %3229 = vmatpush1.bf16.xpose.msra.mxu0 %v3217
        %3230 = vmatprep.subr.bf16.mxu0 0
        %3231 = vmatpush1.bf16.xpose.msra.mxu0 %v3220
        %3232 = vmatprep.subr.bf16.mxu0 0
        %3233 = vmatpush1.bf16.xpose.msra.mxu0 %v3223
        %3234 = vmatprep.subr.bf16.mxu0 0
        %3235 = vmatpush1.bf16.xpose.msra.mxu0 %v3226
        %3236 = vmatprep.subr.bf16.mxu0 0
        %3237 = vmatpush1.bf16.xpose.msra.mxu0 0
        %3238 = vmatprep.subr.bf16.mxu0 0
        %3239 = vmatpush1.bf16.xpose.msra.mxu0 0
        %3240 = vmatprep.subr.bf16.mxu0 0
        %3241 = vmatpush1.bf16.xpose.msra.mxu0 0
        %3242 = vmatprep.subr.bf16.mxu0 0
        %3243 = vmatpush1.bf16.xpose.msra.mxu0 0
        %3244 = vmatprep.subr.bf16.mxu0 0
        %3245 = vmatpush1.bf16.xpose.msra.mxu0 0
        %3246 = vmatprep.subr.bf16.mxu0 0
        %3247 = vmatpush1.bf16.xpose.msra.mxu0 0
        %3248 = vmatprep.subr.bf16.mxu0 0
        %3249 = vmatpush1.bf16.xpose.msra.mxu0 0
        %3250 = vmatprep.subr.bf16.mxu0 0
        %3251 = vmatpush1.bf16.xpose.msra.mxu0 0
        %3252 = vmatprep.subr.bf16.mxu0 0
        %3253 = vmatpush1.bf16.xpose.msra.mxu0 0
        %3254 = vmatprep.subr.bf16.mxu0 0
        %3255 = vmatpush1.bf16.xpose.msra.mxu0 0
        %3256 = vmatprep.subr.bf16.mxu0 0
        %3257 = vmatpush1.bf16.xpose.msra.mxu0 0
        %3258 = vmatprep.subr.bf16.mxu0 0
        %3259 = vmatpush1.bf16.xpose.msra.mxu0 0
        %3260 = vmatprep.mubr.bf16.mxu0 0
        %3261 = vmatmul.mubr.bf16.gmra.mrb[0].mxu0 %v3193
        %v3262 = vpop.f32.mrb[0].mxu0
        %v3263 = vadd.f32 0.0, %v3262
        %v3264 = vpop.f32.mrb[0].mxu0
        %v3265 = vpop.f32.mrb[0].mxu0
        %v3266 = vadd.f32 0.0, %v3265
        %v3267 = vpop.f32.mrb[0].mxu0
        %3268 = vmatprep.mubr.bf16.mxu0 0
        %3269 = vmatmul.mubr.bf16.gmra.mrb[0].mxu0 %v3196
        %v3270 = vpop.f32.mrb[0].mxu0
        %v3271 = vadd.f32 0.0, %v3270
        %v3272 = vpop.f32.mrb[0].mxu0
        %v3273 = vpop.f32.mrb[0].mxu0
        %v3274 = vadd.f32 0.0, %v3273
        %v3275 = vpop.f32.mrb[0].mxu0
        %3276 = vmatprep.mubr.bf16.mxu0 0
        %3277 = vmatmul.mubr.bf16.gmra.mrb[0].mxu0 %v3199
        %v3278 = vpop.f32.mrb[0].mxu0
        %v3279 = vadd.f32 0.0, %v3278
        %v3280 = vpop.f32.mrb[0].mxu0
        %v3281 = vpop.f32.mrb[0].mxu0
        %v3282 = vadd.f32 0.0, %v3281
        %v3283 = vpop.f32.mrb[0].mxu0
        %3284 = vmatprep.mubr.bf16.mxu0 0
        %3285 = vmatmul.mubr.bf16.gmra.mrb[0].mxu0 %v3202
        %v3286 = vpop.f32.mrb[0].mxu0
        %v3287 = vadd.f32 0.0, %v3286
        %v3288 = vpop.f32.mrb[0].mxu0
        %v3289 = vpop.f32.mrb[0].mxu0
        %v3290 = vadd.f32 0.0, %v3289
        %v3291 = vpop.f32.mrb[0].mxu0
        %3292 = vmatprep.mubr.bf16.mxu0 0
        %3293 = vmatmul.mubr.bf16.gmra.mrb[0].mxu0 %v3205
        %v3294 = vpop.f32.mrb[0].mxu0
        %v3295 = vadd.f32 0.0, %v3294
        %v3296 = vpop.f32.mrb[0].mxu0
        %v3297 = vpop.f32.mrb[0].mxu0
        %v3298 = vadd.f32 0.0, %v3297
        %v3299 = vpop.f32.mrb[0].mxu0
        %3300 = vmatprep.mubr.bf16.mxu0 0
        %3301 = vmatmul.mubr.bf16.gmra.mrb[0].mxu0 %v3208
        %v3302 = vpop.f32.mrb[0].mxu0
        %v3303 = vadd.f32 0.0, %v3302
        %v3304 = vpop.f32.mrb[0].mxu0
        %v3305 = vpop.f32.mrb[0].mxu0
        %v3306 = vadd.f32 0.0, %v3305
        %v3307 = vpop.f32.mrb[0].mxu0
        %3308 = vmatprep.mubr.bf16.mxu0 0
        %3309 = vmatmul.mubr.bf16.gmra.mrb[0].mxu0 %v3211
        %v3310 = vpop.f32.mrb[0].mxu0
        %v3311 = vadd.f32 0.0, %v3310
        %v3312 = vpop.f32.mrb[0].mxu0
        %v3313 = vpop.f32.mrb[0].mxu0
        %v3314 = vadd.f32 0.0, %v3313
        %v3315 = vpop.f32.mrb[0].mxu0
        %3316 = vmatprep.mubr.bf16.mxu0 0
        %3317 = vmatmul.mubr.bf16.gmra.mrb[0].mxu0 %v3214
        %v3318 = vpop.f32.mrb[0].mxu0
        %v3319 = vadd.f32 0.0, %v3318
        %v3320 = vpop.f32.mrb[0].mxu0
        %v3321 = vpop.f32.mrb[0].mxu0
        %v3322 = vadd.f32 0.0, %v3321
        %v3323 = vpop.f32.mrb[0].mxu0
        %3324 = vdwg.mxu0
        %vm3325 = vcmask 523264
        %v3326 = vsel %vm3325, %v2864, -inf
        %3327 = vmax.xlane.f32.xlu0 %v3326
        %v3328 = vpop.xlane.xlu0 %3327
        %v3329 = vsel %vm3325, %v2867, -inf
        %3330 = vmax.xlane.f32.xlu0 %v3329
        %v3331 = vpop.xlane.xlu0 %3330
        %v3332 = vsel %vm3325, %v2872, -inf
        %3333 = vmax.xlane.f32.xlu0 %v3332
        %v3334 = vpop.xlane.xlu0 %3333
        %v3335 = vsel %vm3325, %v2875, -inf
        %3336 = vmax.xlane.f32.xlu0 %v3335
        %v3337 = vpop.xlane.xlu0 %3336
        %v3338 = vsel %vm3325, %v2880, -inf
        %3339 = vmax.xlane.f32.xlu0 %v3338
        %v3340 = vpop.xlane.xlu0 %3339
        %v3341 = vsel %vm3325, %v2883, -inf
        %3342 = vmax.xlane.f32.xlu0 %v3341
        %v3343 = vpop.xlane.xlu0 %3342
        %v3344 = vsel %vm3325, %v2888, -inf
        %3345 = vmax.xlane.f32.xlu0 %v3344
        %v3346 = vpop.xlane.xlu0 %3345
        %v3347 = vsel %vm3325, %v2891, -inf
        %3348 = vmax.xlane.f32.xlu0 %v3347
        %v3349 = vpop.xlane.xlu0 %3348
        %v3350 = vsel %vm3325, %v2896, -inf
        %3351 = vmax.xlane.f32.xlu0 %v3350
        %v3352 = vpop.xlane.xlu0 %3351
        %v3353 = vsel %vm3325, %v2899, -inf
        %3354 = vmax.xlane.f32.xlu0 %v3353
        %v3355 = vpop.xlane.xlu0 %3354
        %v3356 = vsel %vm3325, %v2904, -inf
        %3357 = vmax.xlane.f32.xlu0 %v3356
        %v3358 = vpop.xlane.xlu0 %3357
        %v3359 = vsel %vm3325, %v2907, -inf
        %3360 = vmax.xlane.f32.xlu0 %v3359
        %v3361 = vpop.xlane.xlu0 %3360
        %v3362 = vsel %vm3325, %v2912, -inf
        %3363 = vmax.xlane.f32.xlu0 %v3362
        %v3364 = vpop.xlane.xlu0 %3363
        %v3365 = vsel %vm3325, %v2915, -inf
        %3366 = vmax.xlane.f32.xlu0 %v3365
        %v3367 = vpop.xlane.xlu0 %3366
        %v3368 = vsel %vm3325, %v2920, -inf
        %3369 = vmax.xlane.f32.xlu0 %v3368
        %v3370 = vpop.xlane.xlu0 %3369
        %v3371 = vsel %vm3325, %v2923, -inf
        %3372 = vmax.xlane.f32.xlu0 %v3371
        %v3373 = vpop.xlane.xlu0 %3372
        %v3374 = vsel %vm3325, %v2997, -inf
        %3375 = vmax.xlane.f32.xlu0 %v3374
        %v3376 = vpop.xlane.xlu0 %3375
        %v3377 = vsel %vm3325, %v3000, -inf
        %3378 = vmax.xlane.f32.xlu0 %v3377
        %v3379 = vpop.xlane.xlu0 %3378
        %v3380 = vsel %vm3325, %v3005, -inf
        %3381 = vmax.xlane.f32.xlu0 %v3380
        %v3382 = vpop.xlane.xlu0 %3381
        %v3383 = vsel %vm3325, %v3008, -inf
        %3384 = vmax.xlane.f32.xlu0 %v3383
        %v3385 = vpop.xlane.xlu0 %3384
        %v3386 = vsel %vm3325, %v3013, -inf
        %3387 = vmax.xlane.f32.xlu0 %v3386
        %v3388 = vpop.xlane.xlu0 %3387
        %v3389 = vsel %vm3325, %v3016, -inf
        %3390 = vmax.xlane.f32.xlu0 %v3389
        %v3391 = vpop.xlane.xlu0 %3390
        %v3392 = vsel %vm3325, %v3021, -inf
        %3393 = vmax.xlane.f32.xlu0 %v3392
        %v3394 = vpop.xlane.xlu0 %3393
        %v3395 = vsel %vm3325, %v3024, -inf
        %3396 = vmax.xlane.f32.xlu0 %v3395
        %v3397 = vpop.xlane.xlu0 %3396
        %v3398 = vsel %vm3325, %v3029, -inf
        %3399 = vmax.xlane.f32.xlu0 %v3398
        %v3400 = vpop.xlane.xlu0 %3399
        %v3401 = vsel %vm3325, %v3032, -inf
        %3402 = vmax.xlane.f32.xlu0 %v3401
        %v3403 = vpop.xlane.xlu0 %3402
        %v3404 = vsel %vm3325, %v3037, -inf
        %3405 = vmax.xlane.f32.xlu0 %v3404
        %v3406 = vpop.xlane.xlu0 %3405
        %v3407 = vsel %vm3325, %v3040, -inf
        %3408 = vmax.xlane.f32.xlu0 %v3407
        %v3409 = vpop.xlane.xlu0 %3408
        %v3410 = vsel %vm3325, %v3045, -inf
        %3411 = vmax.xlane.f32.xlu0 %v3410
        %v3412 = vpop.xlane.xlu0 %3411
        %v3413 = vsel %vm3325, %v3048, -inf
        %3414 = vmax.xlane.f32.xlu0 %v3413
        %v3415 = vpop.xlane.xlu0 %3414
        %v3416 = vsel %vm3325, %v3053, -inf
        %3417 = vmax.xlane.f32.xlu0 %v3416
        %v3418 = vpop.xlane.xlu0 %3417
        %v3419 = vsel %vm3325, %v3056, -inf
        %3420 = vmax.xlane.f32.xlu0 %v3419
        %v3421 = vpop.xlane.xlu0 %3420
        %v3422 = vsel %vm3325, %v3130, -inf
        %3423 = vmax.xlane.f32.xlu0 %v3422
        %v3424 = vpop.xlane.xlu0 %3423
        %v3425 = vsel %vm3325, %v3133, -inf
        %3426 = vmax.xlane.f32.xlu0 %v3425
        %v3427 = vpop.xlane.xlu0 %3426
        %v3428 = vsel %vm3325, %v3138, -inf
        %3429 = vmax.xlane.f32.xlu0 %v3428
        %v3430 = vpop.xlane.xlu0 %3429
        %v3431 = vsel %vm3325, %v3141, -inf
        %3432 = vmax.xlane.f32.xlu0 %v3431
        %v3433 = vpop.xlane.xlu0 %3432
        %v3434 = vsel %vm3325, %v3146, -inf
        %3435 = vmax.xlane.f32.xlu0 %v3434
        %v3436 = vpop.xlane.xlu0 %3435
        %v3437 = vsel %vm3325, %v3149, -inf
        %3438 = vmax.xlane.f32.xlu0 %v3437
        %v3439 = vpop.xlane.xlu0 %3438
        %v3440 = vsel %vm3325, %v3154, -inf
        %3441 = vmax.xlane.f32.xlu0 %v3440
        %v3442 = vpop.xlane.xlu0 %3441
        %v3443 = vsel %vm3325, %v3157, -inf
        %3444 = vmax.xlane.f32.xlu0 %v3443
        %v3445 = vpop.xlane.xlu0 %3444
        %v3446 = vsel %vm3325, %v3162, -inf
        %3447 = vmax.xlane.f32.xlu0 %v3446
        %v3448 = vpop.xlane.xlu0 %3447
        %v3449 = vsel %vm3325, %v3165, -inf
        %3450 = vmax.xlane.f32.xlu0 %v3449
        %v3451 = vpop.xlane.xlu0 %3450
        %v3452 = vsel %vm3325, %v3170, -inf
        %3453 = vmax.xlane.f32.xlu0 %v3452
        %v3454 = vpop.xlane.xlu0 %3453
        %v3455 = vsel %vm3325, %v3173, -inf
        %3456 = vmax.xlane.f32.xlu0 %v3455
        %v3457 = vpop.xlane.xlu0 %3456
        %v3458 = vsel %vm3325, %v3178, -inf
        %3459 = vmax.xlane.f32.xlu0 %v3458
        %v3460 = vpop.xlane.xlu0 %3459
        %v3461 = vsel %vm3325, %v3181, -inf
        %3462 = vmax.xlane.f32.xlu0 %v3461
        %v3463 = vpop.xlane.xlu0 %3462
        %v3464 = vsel %vm3325, %v3186, -inf
        %3465 = vmax.xlane.f32.xlu0 %v3464
        %v3466 = vpop.xlane.xlu0 %3465
        %v3467 = vsel %vm3325, %v3189, -inf
        %3468 = vmax.xlane.f32.xlu0 %v3467
        %v3469 = vpop.xlane.xlu0 %3468
        %v3470 = vsel %vm3325, %v3263, -inf
        %3471 = vmax.xlane.f32.xlu0 %v3470
        %v3472 = vpop.xlane.xlu0 %3471
        %v3473 = vsel %vm3325, %v3266, -inf
        %3474 = vmax.xlane.f32.xlu0 %v3473
        %v3475 = vpop.xlane.xlu0 %3474
        %v3476 = vsel %vm3325, %v3271, -inf
        %3477 = vmax.xlane.f32.xlu0 %v3476
        %v3478 = vpop.xlane.xlu0 %3477
        %v3479 = vsel %vm3325, %v3274, -inf
        %3480 = vmax.xlane.f32.xlu0 %v3479
        %v3481 = vpop.xlane.xlu0 %3480
        %v3482 = vsel %vm3325, %v3279, -inf
        %3483 = vmax.xlane.f32.xlu0 %v3482
        %v3484 = vpop.xlane.xlu0 %3483
        %v3485 = vsel %vm3325, %v3282, -inf
        %3486 = vmax.xlane.f32.xlu0 %v3485
        %v3487 = vpop.xlane.xlu0 %3486
        %v3488 = vsel %vm3325, %v3287, -inf
        %3489 = vmax.xlane.f32.xlu0 %v3488
        %v3490 = vpop.xlane.xlu0 %3489
        %v3491 = vsel %vm3325, %v3290, -inf
        %3492 = vmax.xlane.f32.xlu0 %v3491
        %v3493 = vpop.xlane.xlu0 %3492
        %v3494 = vsel %vm3325, %v3295, -inf
        %3495 = vmax.xlane.f32.xlu0 %v3494
        %v3496 = vpop.xlane.xlu0 %3495
        %v3497 = vsel %vm3325, %v3298, -inf
        %3498 = vmax.xlane.f32.xlu0 %v3497
        %v3499 = vpop.xlane.xlu0 %3498
        %v3500 = vsel %vm3325, %v3303, -inf
        %3501 = vmax.xlane.f32.xlu0 %v3500
        %v3502 = vpop.xlane.xlu0 %3501
        %v3503 = vsel %vm3325, %v3306, -inf
        %3504 = vmax.xlane.f32.xlu0 %v3503
        %v3505 = vpop.xlane.xlu0 %3504
        %v3506 = vsel %vm3325, %v3311, -inf
        %3507 = vmax.xlane.f32.xlu0 %v3506
        %v3508 = vpop.xlane.xlu0 %3507
        %v3509 = vsel %vm3325, %v3314, -inf
        %3510 = vmax.xlane.f32.xlu0 %v3509
        %v3511 = vpop.xlane.xlu0 %3510
        %v3512 = vsel %vm3325, %v3319, -inf
        %3513 = vmax.xlane.f32.xlu0 %v3512
        %v3514 = vpop.xlane.xlu0 %3513
        %v3515 = vsel %vm3325, %v3322, -inf
        %3516 = vmax.xlane.f32.xlu0 %v3515
        %v3517 = vpop.xlane.xlu0 %3516
        %v3518 = vsub.f32 %v2864, %v3328
        %v3519 = vsub.f32 %v2867, %v3331
        %v3520 = vsub.f32 %v2872, %v3334
        %v3521 = vsub.f32 %v2875, %v3337
        %v3522 = vsub.f32 %v2880, %v3340
        %v3523 = vsub.f32 %v2883, %v3343
        %v3524 = vsub.f32 %v2888, %v3346
        %v3525 = vsub.f32 %v2891, %v3349
        %v3526 = vsub.f32 %v2896, %v3352
        %v3527 = vsub.f32 %v2899, %v3355
        %v3528 = vsub.f32 %v2904, %v3358
        %v3529 = vsub.f32 %v2907, %v3361
        %v3530 = vsub.f32 %v2912, %v3364
        %v3531 = vsub.f32 %v2915, %v3367
        %v3532 = vsub.f32 %v2920, %v3370
        %v3533 = vsub.f32 %v2923, %v3373
        %v3534 = vsub.f32 %v2997, %v3376
        %v3535 = vsub.f32 %v3000, %v3379
        %v3536 = vsub.f32 %v3005, %v3382
        %v3537 = vsub.f32 %v3008, %v3385
        %v3538 = vsub.f32 %v3013, %v3388
        %v3539 = vsub.f32 %v3016, %v3391
        %v3540 = vsub.f32 %v3021, %v3394
        %v3541 = vsub.f32 %v3024, %v3397
        %v3542 = vsub.f32 %v3029, %v3400
        %v3543 = vsub.f32 %v3032, %v3403
        %v3544 = vsub.f32 %v3037, %v3406
        %v3545 = vsub.f32 %v3040, %v3409
        %v3546 = vsub.f32 %v3045, %v3412
        %v3547 = vsub.f32 %v3048, %v3415
        %v3548 = vsub.f32 %v3053, %v3418
        %v3549 = vsub.f32 %v3056, %v3421
        %v3550 = vsub.f32 %v3130, %v3424
        %v3551 = vsub.f32 %v3133, %v3427
        %v3552 = vsub.f32 %v3138, %v3430
        %v3553 = vsub.f32 %v3141, %v3433
        %v3554 = vsub.f32 %v3146, %v3436
        %v3555 = vsub.f32 %v3149, %v3439
        %v3556 = vsub.f32 %v3154, %v3442
        %v3557 = vsub.f32 %v3157, %v3445
        %v3558 = vsub.f32 %v3162, %v3448
        %v3559 = vsub.f32 %v3165, %v3451
        %v3560 = vsub.f32 %v3170, %v3454
        %v3561 = vsub.f32 %v3173, %v3457
        %v3562 = vsub.f32 %v3178, %v3460
        %v3563 = vsub.f32 %v3181, %v3463
        %v3564 = vsub.f32 %v3186, %v3466
        %v3565 = vsub.f32 %v3189, %v3469
        %v3566 = vsub.f32 %v3263, %v3472
        %v3567 = vsub.f32 %v3266, %v3475
        %v3568 = vsub.f32 %v3271, %v3478
        %v3569 = vsub.f32 %v3274, %v3481
        %v3570 = vsub.f32 %v3279, %v3484
        %v3571 = vsub.f32 %v3282, %v3487
        %v3572 = vsub.f32 %v3287, %v3490
        %v3573 = vsub.f32 %v3290, %v3493
        %v3574 = vsub.f32 %v3295, %v3496
        %v3575 = vsub.f32 %v3298, %v3499
        %v3576 = vsub.f32 %v3303, %v3502
        %v3577 = vsub.f32 %v3306, %v3505
        %v3578 = vsub.f32 %v3311, %v3508
        %v3579 = vsub.f32 %v3314, %v3511
        %v3580 = vsub.f32 %v3319, %v3514
        %v3581 = vsub.f32 %v3322, %v3517
        %v3582 = vmul.f32 %v3518, 1.442695
        %v3583 = vpow.pop %v3582
        %v3584 = vmul.f32 %v3519, 1.442695
        %v3585 = vpow.pop %v3584
        %v3586 = vmul.f32 %v3520, 1.442695
        %v3587 = vpow.pop %v3586
        %v3588 = vmul.f32 %v3521, 1.442695
        %v3589 = vpow.pop %v3588
        %v3590 = vmul.f32 %v3522, 1.442695
        %v3591 = vpow.pop %v3590
        %v3592 = vmul.f32 %v3523, 1.442695
        %v3593 = vpow.pop %v3592
        %v3594 = vmul.f32 %v3524, 1.442695
        %v3595 = vpow.pop %v3594
        %v3596 = vmul.f32 %v3525, 1.442695
        %v3597 = vpow.pop %v3596
        %v3598 = vmul.f32 %v3526, 1.442695
        %v3599 = vpow.pop %v3598
        %v3600 = vmul.f32 %v3527, 1.442695
        %v3601 = vpow.pop %v3600
        %v3602 = vmul.f32 %v3528, 1.442695
        %v3603 = vpow.pop %v3602
        %v3604 = vmul.f32 %v3529, 1.442695
        %v3605 = vpow.pop %v3604
        %v3606 = vmul.f32 %v3530, 1.442695
        %v3607 = vpow.pop %v3606
        %v3608 = vmul.f32 %v3531, 1.442695
        %v3609 = vpow.pop %v3608
        %v3610 = vmul.f32 %v3532, 1.442695
        %v3611 = vpow.pop %v3610
        %v3612 = vmul.f32 %v3533, 1.442695
        %v3613 = vpow.pop %v3612
        %v3614 = vmul.f32 %v3534, 1.442695
        %v3615 = vpow.pop %v3614
        %v3616 = vmul.f32 %v3535, 1.442695
        %v3617 = vpow.pop %v3616
        %v3618 = vmul.f32 %v3536, 1.442695
        %v3619 = vpow.pop %v3618
        %v3620 = vmul.f32 %v3537, 1.442695
        %v3621 = vpow.pop %v3620
        %v3622 = vmul.f32 %v3538, 1.442695
        %v3623 = vpow.pop %v3622
        %v3624 = vmul.f32 %v3539, 1.442695
        %v3625 = vpow.pop %v3624
        %v3626 = vmul.f32 %v3540, 1.442695
        %v3627 = vpow.pop %v3626
        %v3628 = vmul.f32 %v3541, 1.442695
        %v3629 = vpow.pop %v3628
        %v3630 = vmul.f32 %v3542, 1.442695
        %v3631 = vpow.pop %v3630
        %v3632 = vmul.f32 %v3543, 1.442695
        %v3633 = vpow.pop %v3632
        %v3634 = vmul.f32 %v3544, 1.442695
        %v3635 = vpow.pop %v3634
        %v3636 = vmul.f32 %v3545, 1.442695
        %v3637 = vpow.pop %v3636
        %v3638 = vmul.f32 %v3546, 1.442695
        %v3639 = vpow.pop %v3638
        %v3640 = vmul.f32 %v3547, 1.442695
        %v3641 = vpow.pop %v3640
        %v3642 = vmul.f32 %v3548, 1.442695
        %v3643 = vpow.pop %v3642
        %v3644 = vmul.f32 %v3549, 1.442695
        %v3645 = vpow.pop %v3644
        %v3646 = vmul.f32 %v3550, 1.442695
        %v3647 = vpow.pop %v3646
        %v3648 = vmul.f32 %v3551, 1.442695
        %v3649 = vpow.pop %v3648
        %v3650 = vmul.f32 %v3552, 1.442695
        %v3651 = vpow.pop %v3650
        %v3652 = vmul.f32 %v3553, 1.442695
        %v3653 = vpow.pop %v3652
        %v3654 = vmul.f32 %v3554, 1.442695
        %v3655 = vpow.pop %v3654
        %v3656 = vmul.f32 %v3555, 1.442695
        %v3657 = vpow.pop %v3656
        %v3658 = vmul.f32 %v3556, 1.442695
        %v3659 = vpow.pop %v3658
        %v3660 = vmul.f32 %v3557, 1.442695
        %v3661 = vpow.pop %v3660
        %v3662 = vmul.f32 %v3558, 1.442695
        %v3663 = vpow.pop %v3662
        %v3664 = vmul.f32 %v3559, 1.442695
        %v3665 = vpow.pop %v3664
        %v3666 = vmul.f32 %v3560, 1.442695
        %v3667 = vpow.pop %v3666
        %v3668 = vmul.f32 %v3561, 1.442695
        %v3669 = vpow.pop %v3668
        %v3670 = vmul.f32 %v3562, 1.442695
        %v3671 = vpow.pop %v3670
        %v3672 = vmul.f32 %v3563, 1.442695
        %v3673 = vpow.pop %v3672
        %v3674 = vmul.f32 %v3564, 1.442695
        %v3675 = vpow.pop %v3674
        %v3676 = vmul.f32 %v3565, 1.442695
        %v3677 = vpow.pop %v3676
        %v3678 = vmul.f32 %v3566, 1.442695
        %v3679 = vpow.pop %v3678
        %v3680 = vmul.f32 %v3567, 1.442695
        %v3681 = vpow.pop %v3680
        %v3682 = vmul.f32 %v3568, 1.442695
        %v3683 = vpow.pop %v3682
        %v3684 = vmul.f32 %v3569, 1.442695
        %v3685 = vpow.pop %v3684
        %v3686 = vmul.f32 %v3570, 1.442695
        %v3687 = vpow.pop %v3686
        %v3688 = vmul.f32 %v3571, 1.442695
        %v3689 = vpow.pop %v3688
        %v3690 = vmul.f32 %v3572, 1.442695
        %v3691 = vpow.pop %v3690
        %v3692 = vmul.f32 %v3573, 1.442695
        %v3693 = vpow.pop %v3692
        %v3694 = vmul.f32 %v3574, 1.442695
        %v3695 = vpow.pop %v3694
        %v3696 = vmul.f32 %v3575, 1.442695
        %v3697 = vpow.pop %v3696
        %v3698 = vmul.f32 %v3576, 1.442695
        %v3699 = vpow.pop %v3698
        %v3700 = vmul.f32 %v3577, 1.442695
        %v3701 = vpow.pop %v3700
        %v3702 = vmul.f32 %v3578, 1.442695
        %v3703 = vpow.pop %v3702
        %v3704 = vmul.f32 %v3579, 1.442695
        %v3705 = vpow.pop %v3704
        %v3706 = vmul.f32 %v3580, 1.442695
        %v3707 = vpow.pop %v3706
        %v3708 = vmul.f32 %v3581, 1.442695
        %v3709 = vpow.pop %v3708
        %v3710 = vsel %vm3325, %v3583, 0.0
        %3711 = vadd.xlane.f32.xlu0 %v3710
        %v3712 = vpop.xlane.xlu0 %3711
        %v3713 = vsel %vm3325, %v3585, 0.0
        %3714 = vadd.xlane.f32.xlu0 %v3713
        %v3715 = vpop.xlane.xlu0 %3714
        %v3716 = vsel %vm3325, %v3587, 0.0
        %3717 = vadd.xlane.f32.xlu0 %v3716
        %v3718 = vpop.xlane.xlu0 %3717
        %v3719 = vsel %vm3325, %v3589, 0.0
        %3720 = vadd.xlane.f32.xlu0 %v3719
        %v3721 = vpop.xlane.xlu0 %3720
        %v3722 = vsel %vm3325, %v3591, 0.0
        %3723 = vadd.xlane.f32.xlu0 %v3722
        %v3724 = vpop.xlane.xlu0 %3723
        %v3725 = vsel %vm3325, %v3593, 0.0
        %3726 = vadd.xlane.f32.xlu0 %v3725
        %v3727 = vpop.xlane.xlu0 %3726
        %v3728 = vsel %vm3325, %v3595, 0.0
        %3729 = vadd.xlane.f32.xlu0 %v3728
        %v3730 = vpop.xlane.xlu0 %3729
        %v3731 = vsel %vm3325, %v3597, 0.0
        %3732 = vadd.xlane.f32.xlu0 %v3731
        %v3733 = vpop.xlane.xlu0 %3732
        %v3734 = vsel %vm3325, %v3599, 0.0
        %3735 = vadd.xlane.f32.xlu0 %v3734
        %v3736 = vpop.xlane.xlu0 %3735
        %v3737 = vsel %vm3325, %v3601, 0.0
        %3738 = vadd.xlane.f32.xlu0 %v3737
        %v3739 = vpop.xlane.xlu0 %3738
        %v3740 = vsel %vm3325, %v3603, 0.0
        %3741 = vadd.xlane.f32.xlu0 %v3740
        %v3742 = vpop.xlane.xlu0 %3741
        %v3743 = vsel %vm3325, %v3605, 0.0
        %3744 = vadd.xlane.f32.xlu0 %v3743
        %v3745 = vpop.xlane.xlu0 %3744
        %v3746 = vsel %vm3325, %v3607, 0.0
        %3747 = vadd.xlane.f32.xlu0 %v3746
        %v3748 = vpop.xlane.xlu0 %3747
        %v3749 = vsel %vm3325, %v3609, 0.0
        %3750 = vadd.xlane.f32.xlu0 %v3749
        %v3751 = vpop.xlane.xlu0 %3750
        %v3752 = vsel %vm3325, %v3611, 0.0
        %3753 = vadd.xlane.f32.xlu0 %v3752
        %v3754 = vpop.xlane.xlu0 %3753
        %v3755 = vsel %vm3325, %v3613, 0.0
        %3756 = vadd.xlane.f32.xlu0 %v3755
        %v3757 = vpop.xlane.xlu0 %3756
        %v3758 = vsel %vm3325, %v3615, 0.0
        %3759 = vadd.xlane.f32.xlu0 %v3758
        %v3760 = vpop.xlane.xlu0 %3759
        %v3761 = vsel %vm3325, %v3617, 0.0
        %3762 = vadd.xlane.f32.xlu0 %v3761
        %v3763 = vpop.xlane.xlu0 %3762
        %v3764 = vsel %vm3325, %v3619, 0.0
        %3765 = vadd.xlane.f32.xlu0 %v3764
        %v3766 = vpop.xlane.xlu0 %3765
        %v3767 = vsel %vm3325, %v3621, 0.0
        %3768 = vadd.xlane.f32.xlu0 %v3767
        %v3769 = vpop.xlane.xlu0 %3768
        %v3770 = vsel %vm3325, %v3623, 0.0
        %3771 = vadd.xlane.f32.xlu0 %v3770
        %v3772 = vpop.xlane.xlu0 %3771
        %v3773 = vsel %vm3325, %v3625, 0.0
        %3774 = vadd.xlane.f32.xlu0 %v3773
        %v3775 = vpop.xlane.xlu0 %3774
        %v3776 = vsel %vm3325, %v3627, 0.0
        %3777 = vadd.xlane.f32.xlu0 %v3776
        %v3778 = vpop.xlane.xlu0 %3777
        %v3779 = vsel %vm3325, %v3629, 0.0
        %3780 = vadd.xlane.f32.xlu0 %v3779
        %v3781 = vpop.xlane.xlu0 %3780
        %v3782 = vsel %vm3325, %v3631, 0.0
        %3783 = vadd.xlane.f32.xlu0 %v3782
        %v3784 = vpop.xlane.xlu0 %3783
        %v3785 = vsel %vm3325, %v3633, 0.0
        %3786 = vadd.xlane.f32.xlu0 %v3785
        %v3787 = vpop.xlane.xlu0 %3786
        %v3788 = vsel %vm3325, %v3635, 0.0
        %3789 = vadd.xlane.f32.xlu0 %v3788
        %v3790 = vpop.xlane.xlu0 %3789
        %v3791 = vsel %vm3325, %v3637, 0.0
        %3792 = vadd.xlane.f32.xlu0 %v3791
        %v3793 = vpop.xlane.xlu0 %3792
        %v3794 = vsel %vm3325, %v3639, 0.0
        %3795 = vadd.xlane.f32.xlu0 %v3794
        %v3796 = vpop.xlane.xlu0 %3795
        %v3797 = vsel %vm3325, %v3641, 0.0
        %3798 = vadd.xlane.f32.xlu0 %v3797
        %v3799 = vpop.xlane.xlu0 %3798
        %v3800 = vsel %vm3325, %v3643, 0.0
        %3801 = vadd.xlane.f32.xlu0 %v3800
        %v3802 = vpop.xlane.xlu0 %3801
        %v3803 = vsel %vm3325, %v3645, 0.0
        %3804 = vadd.xlane.f32.xlu0 %v3803
        %v3805 = vpop.xlane.xlu0 %3804
        %v3806 = vsel %vm3325, %v3647, 0.0
        %3807 = vadd.xlane.f32.xlu0 %v3806
        %v3808 = vpop.xlane.xlu0 %3807
        %v3809 = vsel %vm3325, %v3649, 0.0
        %3810 = vadd.xlane.f32.xlu0 %v3809
        %v3811 = vpop.xlane.xlu0 %3810
        %v3812 = vsel %vm3325, %v3651, 0.0
        %3813 = vadd.xlane.f32.xlu0 %v3812
        %v3814 = vpop.xlane.xlu0 %3813
        %v3815 = vsel %vm3325, %v3653, 0.0
        %3816 = vadd.xlane.f32.xlu0 %v3815
        %v3817 = vpop.xlane.xlu0 %3816
        %v3818 = vsel %vm3325, %v3655, 0.0
        %3819 = vadd.xlane.f32.xlu0 %v3818
        %v3820 = vpop.xlane.xlu0 %3819
        %v3821 = vsel %vm3325, %v3657, 0.0
        %3822 = vadd.xlane.f32.xlu0 %v3821
        %v3823 = vpop.xlane.xlu0 %3822
        %v3824 = vsel %vm3325, %v3659, 0.0
        %3825 = vadd.xlane.f32.xlu0 %v3824
        %v3826 = vpop.xlane.xlu0 %3825
        %v3827 = vsel %vm3325, %v3661, 0.0
        %3828 = vadd.xlane.f32.xlu0 %v3827
        %v3829 = vpop.xlane.xlu0 %3828
        %v3830 = vsel %vm3325, %v3663, 0.0
        %3831 = vadd.xlane.f32.xlu0 %v3830
        %v3832 = vpop.xlane.xlu0 %3831
        %v3833 = vsel %vm3325, %v3665, 0.0
        %3834 = vadd.xlane.f32.xlu0 %v3833
        %v3835 = vpop.xlane.xlu0 %3834
        %v3836 = vsel %vm3325, %v3667, 0.0
        %3837 = vadd.xlane.f32.xlu0 %v3836
        %v3838 = vpop.xlane.xlu0 %3837
        %v3839 = vsel %vm3325, %v3669, 0.0
        %3840 = vadd.xlane.f32.xlu0 %v3839
        %v3841 = vpop.xlane.xlu0 %3840
        %v3842 = vsel %vm3325, %v3671, 0.0
        %3843 = vadd.xlane.f32.xlu0 %v3842
        %v3844 = vpop.xlane.xlu0 %3843
        %v3845 = vsel %vm3325, %v3673, 0.0
        %3846 = vadd.xlane.f32.xlu0 %v3845
        %v3847 = vpop.xlane.xlu0 %3846
        %v3848 = vsel %vm3325, %v3675, 0.0
        %3849 = vadd.xlane.f32.xlu0 %v3848
        %v3850 = vpop.xlane.xlu0 %3849
        %v3851 = vsel %vm3325, %v3677, 0.0
        %3852 = vadd.xlane.f32.xlu0 %v3851
        %v3853 = vpop.xlane.xlu0 %3852
        %v3854 = vsel %vm3325, %v3679, 0.0
        %3855 = vadd.xlane.f32.xlu0 %v3854
        %v3856 = vpop.xlane.xlu0 %3855
        %v3857 = vsel %vm3325, %v3681, 0.0
        %3858 = vadd.xlane.f32.xlu0 %v3857
        %v3859 = vpop.xlane.xlu0 %3858
        %v3860 = vsel %vm3325, %v3683, 0.0
        %3861 = vadd.xlane.f32.xlu0 %v3860
        %v3862 = vpop.xlane.xlu0 %3861
        %v3863 = vsel %vm3325, %v3685, 0.0
        %3864 = vadd.xlane.f32.xlu0 %v3863
        %v3865 = vpop.xlane.xlu0 %3864
        %v3866 = vsel %vm3325, %v3687, 0.0
        %3867 = vadd.xlane.f32.xlu0 %v3866
        %v3868 = vpop.xlane.xlu0 %3867
        %v3869 = vsel %vm3325, %v3689, 0.0
        %3870 = vadd.xlane.f32.xlu0 %v3869
        %v3871 = vpop.xlane.xlu0 %3870
        %v3872 = vsel %vm3325, %v3691, 0.0
        %3873 = vadd.xlane.f32.xlu0 %v3872
        %v3874 = vpop.xlane.xlu0 %3873
        %v3875 = vsel %vm3325, %v3693, 0.0
        %3876 = vadd.xlane.f32.xlu0 %v3875
        %v3877 = vpop.xlane.xlu0 %3876
        %v3878 = vsel %vm3325, %v3695, 0.0
        %3879 = vadd.xlane.f32.xlu0 %v3878
        %v3880 = vpop.xlane.xlu0 %3879
        %v3881 = vsel %vm3325, %v3697, 0.0
        %3882 = vadd.xlane.f32.xlu0 %v3881
        %v3883 = vpop.xlane.xlu0 %3882
        %v3884 = vsel %vm3325, %v3699, 0.0
        %3885 = vadd.xlane.f32.xlu0 %v3884
        %v3886 = vpop.xlane.xlu0 %3885
        %v3887 = vsel %vm3325, %v3701, 0.0
        %3888 = vadd.xlane.f32.xlu0 %v3887
        %v3889 = vpop.xlane.xlu0 %3888
        %v3890 = vsel %vm3325, %v3703, 0.0
        %3891 = vadd.xlane.f32.xlu0 %v3890
        %v3892 = vpop.xlane.xlu0 %3891
        %v3893 = vsel %vm3325, %v3705, 0.0
        %3894 = vadd.xlane.f32.xlu0 %v3893
        %v3895 = vpop.xlane.xlu0 %3894
        %v3896 = vsel %vm3325, %v3707, 0.0
        %3897 = vadd.xlane.f32.xlu0 %v3896
        %v3898 = vpop.xlane.xlu0 %3897
        %v3899 = vsel %vm3325, %v3709, 0.0
        %3900 = vadd.xlane.f32.xlu0 %v3899
        %v3901 = vpop.xlane.xlu0 %3900
        %v3902 = vrcp.pop %v3712
        %v3903 = vrcp.pop %v3715
        %v3904 = vrcp.pop %v3718
        %v3905 = vrcp.pop %v3721
        %v3906 = vrcp.pop %v3724
        %v3907 = vrcp.pop %v3727
        %v3908 = vrcp.pop %v3730
        %v3909 = vrcp.pop %v3733
        %v3910 = vrcp.pop %v3736
        %v3911 = vrcp.pop %v3739
        %v3912 = vrcp.pop %v3742
        %v3913 = vrcp.pop %v3745
        %v3914 = vrcp.pop %v3748
        %v3915 = vrcp.pop %v3751
        %v3916 = vrcp.pop %v3754
        %v3917 = vrcp.pop %v3757
        %v3918 = vrcp.pop %v3760
        %v3919 = vrcp.pop %v3763
        %v3920 = vrcp.pop %v3766
        %v3921 = vrcp.pop %v3769
        %v3922 = vrcp.pop %v3772
        %v3923 = vrcp.pop %v3775
        %v3924 = vrcp.pop %v3778
        %v3925 = vrcp.pop %v3781
        %v3926 = vrcp.pop %v3784
        %v3927 = vrcp.pop %v3787
        %v3928 = vrcp.pop %v3790
        %v3929 = vrcp.pop %v3793
        %v3930 = vrcp.pop %v3796
        %v3931 = vrcp.pop %v3799
        %v3932 = vrcp.pop %v3802
        %v3933 = vrcp.pop %v3805
        %v3934 = vrcp.pop %v3808
        %v3935 = vrcp.pop %v3811
        %v3936 = vrcp.pop %v3814
        %v3937 = vrcp.pop %v3817
        %v3938 = vrcp.pop %v3820
        %v3939 = vrcp.pop %v3823
        %v3940 = vrcp.pop %v3826
        %v3941 = vrcp.pop %v3829
        %v3942 = vrcp.pop %v3832
        %v3943 = vrcp.pop %v3835
        %v3944 = vrcp.pop %v3838
        %v3945 = vrcp.pop %v3841
        %v3946 = vrcp.pop %v3844
        %v3947 = vrcp.pop %v3847
        %v3948 = vrcp.pop %v3850
        %v3949 = vrcp.pop %v3853
        %v3950 = vrcp.pop %v3856
        %v3951 = vrcp.pop %v3859
        %v3952 = vrcp.pop %v3862
        %v3953 = vrcp.pop %v3865
        %v3954 = vrcp.pop %v3868
        %v3955 = vrcp.pop %v3871
        %v3956 = vrcp.pop %v3874
        %v3957 = vrcp.pop %v3877
        %v3958 = vrcp.pop %v3880
        %v3959 = vrcp.pop %v3883
        %v3960 = vrcp.pop %v3886
        %v3961 = vrcp.pop %v3889
        %v3962 = vrcp.pop %v3892
        %v3963 = vrcp.pop %v3895
        %v3964 = vrcp.pop %v3898
        %v3965 = vrcp.pop %v3901
        %v3966 = vmul.f32 %v3583, %v3902
        %v3967 = vmul.f32 %v3585, %v3903
        %v3968 = vmul.f32 %v3587, %v3904
        %v3969 = vmul.f32 %v3589, %v3905
        %v3970 = vmul.f32 %v3591, %v3906
        %v3971 = vmul.f32 %v3593, %v3907
        %v3972 = vmul.f32 %v3595, %v3908
        %v3973 = vmul.f32 %v3597, %v3909
        %v3974 = vmul.f32 %v3599, %v3910
        %v3975 = vmul.f32 %v3601, %v3911
        %v3976 = vmul.f32 %v3603, %v3912
        %v3977 = vmul.f32 %v3605, %v3913
        %v3978 = vmul.f32 %v3607, %v3914
        %v3979 = vmul.f32 %v3609, %v3915
        %v3980 = vmul.f32 %v3611, %v3916
        %v3981 = vmul.f32 %v3613, %v3917
        %v3982 = vmul.f32 %v3615, %v3918
        %v3983 = vmul.f32 %v3617, %v3919
        %v3984 = vmul.f32 %v3619, %v3920
        %v3985 = vmul.f32 %v3621, %v3921
        %v3986 = vmul.f32 %v3623, %v3922
        %v3987 = vmul.f32 %v3625, %v3923
        %v3988 = vmul.f32 %v3627, %v3924
        %v3989 = vmul.f32 %v3629, %v3925
        %v3990 = vmul.f32 %v3631, %v3926
        %v3991 = vmul.f32 %v3633, %v3927
        %v3992 = vmul.f32 %v3635, %v3928
        %v3993 = vmul.f32 %v3637, %v3929
        %v3994 = vmul.f32 %v3639, %v3930
        %v3995 = vmul.f32 %v3641, %v3931
        %v3996 = vmul.f32 %v3643, %v3932
        %v3997 = vmul.f32 %v3645, %v3933
        %v3998 = vmul.f32 %v3647, %v3934
        %v3999 = vmul.f32 %v3649, %v3935
        %v4000 = vmul.f32 %v3651, %v3936
        %v4001 = vmul.f32 %v3653, %v3937
        %v4002 = vmul.f32 %v3655, %v3938
        %v4003 = vmul.f32 %v3657, %v3939
        %v4004 = vmul.f32 %v3659, %v3940
        %v4005 = vmul.f32 %v3661, %v3941
        %v4006 = vmul.f32 %v3663, %v3942
        %v4007 = vmul.f32 %v3665, %v3943
        %v4008 = vmul.f32 %v3667, %v3944
        %v4009 = vmul.f32 %v3669, %v3945
        %v4010 = vmul.f32 %v3671, %v3946
        %v4011 = vmul.f32 %v3673, %v3947
        %v4012 = vmul.f32 %v3675, %v3948
        %v4013 = vmul.f32 %v3677, %v3949
        %v4014 = vmul.f32 %v3679, %v3950
        %v4015 = vmul.f32 %v3681, %v3951
        %v4016 = vmul.f32 %v3683, %v3952
        %v4017 = vmul.f32 %v3685, %v3953
        %v4018 = vmul.f32 %v3687, %v3954
        %v4019 = vmul.f32 %v3689, %v3955
        %v4020 = vmul.f32 %v3691, %v3956
        %v4021 = vmul.f32 %v3693, %v3957
        %v4022 = vmul.f32 %v3695, %v3958
        %v4023 = vmul.f32 %v3697, %v3959
        %v4024 = vmul.f32 %v3699, %v3960
        %v4025 = vmul.f32 %v3701, %v3961
        %v4026 = vmul.f32 %v3703, %v3962
        %v4027 = vmul.f32 %v3705, %v3963
        %v4028 = vmul.f32 %v3707, %v3964
        %v4029 = vmul.f32 %v3709, %v3965
        %v4030 = vpack.c.bf16 %v3967, %v3966
        %v4031 = vpack.c.bf16 %v3969, %v3968
        %v4032 = vpack.c.bf16 %v3971, %v3970
        %v4033 = vpack.c.bf16 %v3973, %v3972
        %v4034 = vpack.c.bf16 %v3975, %v3974
        %v4035 = vpack.c.bf16 %v3977, %v3976
        %v4036 = vpack.c.bf16 %v3979, %v3978
        %v4037 = vpack.c.bf16 %v3981, %v3980
        %v4038 = vpack.c.bf16 %v3983, %v3982
        %v4039 = vpack.c.bf16 %v3985, %v3984
        %v4040 = vpack.c.bf16 %v3987, %v3986
        %v4041 = vpack.c.bf16 %v3989, %v3988
        %v4042 = vpack.c.bf16 %v3991, %v3990
        %v4043 = vpack.c.bf16 %v3993, %v3992
        %v4044 = vpack.c.bf16 %v3995, %v3994
        %v4045 = vpack.c.bf16 %v3997, %v3996
        %v4046 = vpack.c.bf16 %v3999, %v3998
        %v4047 = vpack.c.bf16 %v4001, %v4000
        %v4048 = vpack.c.bf16 %v4003, %v4002
        %v4049 = vpack.c.bf16 %v4005, %v4004
        %v4050 = vpack.c.bf16 %v4007, %v4006
        %v4051 = vpack.c.bf16 %v4009, %v4008
        %v4052 = vpack.c.bf16 %v4011, %v4010
        %v4053 = vpack.c.bf16 %v4013, %v4012
        %v4054 = vpack.c.bf16 %v4015, %v4014
        %v4055 = vpack.c.bf16 %v4017, %v4016
        %v4056 = vpack.c.bf16 %v4019, %v4018
        %v4057 = vpack.c.bf16 %v4021, %v4020
        %v4058 = vpack.c.bf16 %v4023, %v4022
        %v4059 = vpack.c.bf16 %v4025, %v4024
        %v4060 = vpack.c.bf16 %v4027, %v4026
        %v4061 = vpack.c.bf16 %v4029, %v4028
        %v4062 = vld [vmem:[#allocation3] sm:$0xff]
        %v4063 = vld [vmem:[#allocation3 + $0x8] sm:$0xff]
        %v4064 = vld [vmem:[#allocation3 + $0x10] sm:$0xff]
        %v4065 = vld [vmem:[#allocation3 + $0x18] sm:$0xff]
        %v4066 = vld [vmem:[#allocation3 + $0x20] sm:$0xff]
        %v4067 = vld [vmem:[#allocation3 + $0x28] sm:$0xff]
        %v4068 = vld [vmem:[#allocation3 + $0x30] sm:$0xff]
        %v4069 = vld [vmem:[#allocation3 + $0x38] sm:$0xff]
        %v4070 = vld [vmem:[#allocation3 + $0x40] sm:$0xff]
        %v4071 = vld [vmem:[#allocation3 + $0x48] sm:$0xff]
        %v4072 = vld [vmem:[#allocation3 + $0x50] sm:$0xff]
        %v4073 = vld [vmem:[#allocation3 + $0x58] sm:$0xff]
        %v4074 = vld [vmem:[#allocation3 + $0x60] sm:$0xff]
        %v4075 = vld [vmem:[#allocation3 + $0x68] sm:$0xff]
        %v4076 = vld [vmem:[#allocation3 + $0x70] sm:$0xff]
        %v4077 = vld [vmem:[#allocation3 + $0x78] sm:$0xff]
        %v4079 = vsel %vm3325, %v4030, 0
        %v4082 = vsel %vm3325, %v4031, 0
        %v4085 = vsel %vm3325, %v4032, 0
        %v4088 = vsel %vm3325, %v4033, 0
        %v4091 = vsel %vm3325, %v4034, 0
        %v4094 = vsel %vm3325, %v4035, 0
        %v4097 = vsel %vm3325, %v4036, 0
        %v4100 = vsel %vm3325, %v4037, 0
        %4102 = vmatprep.subr.bf16.mxu0 0
        %4103 = vmatpush1.bf16.msra.mxu0 %v4062
        %4104 = vmatprep.subr.bf16.mxu0 0
        %4105 = vmatpush1.bf16.msra.mxu0 %v4063
        %4106 = vmatprep.subr.bf16.mxu0 0
        %4107 = vmatpush1.bf16.msra.mxu0 %v4064
        %4108 = vmatprep.subr.bf16.mxu0 0
        %4109 = vmatpush1.bf16.msra.mxu0 %v4065
        %4110 = vmatprep.subr.bf16.mxu0 0
        %4111 = vmatpush1.bf16.msra.mxu0 0
        %4112 = vmatprep.subr.bf16.mxu0 0
        %4113 = vmatpush1.bf16.msra.mxu0 0
        %4114 = vmatprep.subr.bf16.mxu0 0
        %4115 = vmatpush1.bf16.msra.mxu0 0
        %4116 = vmatprep.subr.bf16.mxu0 0
        %4117 = vmatpush1.bf16.msra.mxu0 0
        %4118 = vmatprep.subr.bf16.mxu0 0
        %4119 = vmatpush1.bf16.msra.mxu0 0
        %4120 = vmatprep.subr.bf16.mxu0 0
        %4121 = vmatpush1.bf16.msra.mxu0 0
        %4122 = vmatprep.subr.bf16.mxu0 0
        %4123 = vmatpush1.bf16.msra.mxu0 0
        %4124 = vmatprep.subr.bf16.mxu0 0
        %4125 = vmatpush1.bf16.msra.mxu0 0
        %4126 = vmatprep.subr.bf16.mxu0 0
        %4127 = vmatpush1.bf16.msra.mxu0 0
        %4128 = vmatprep.subr.bf16.mxu0 0
        %4129 = vmatpush1.bf16.msra.mxu0 0
        %4130 = vmatprep.subr.bf16.mxu0 0
        %4131 = vmatpush1.bf16.msra.mxu0 0
        %4132 = vmatprep.subr.bf16.mxu0 0
        %4133 = vmatpush1.bf16.msra.mxu0 0
        %4134 = vmatprep.mubr.bf16.mxu0 0
        %4135 = vmatmul.mubr.bf16.gmra.mrb[0].mxu0 %v4079
        %v4136 = vpop.f32.mrb[0].mxu0
        %v4137 = vadd.f32 0.0, %v4136
        %v4138 = vpop.f32.mrb[0].mxu0
        %v4139 = vpop.f32.mrb[0].mxu0
        %v4140 = vadd.f32 0.0, %v4139
        %v4141 = vpop.f32.mrb[0].mxu0
        %4142 = vmatprep.mubr.bf16.mxu0 0
        %4143 = vmatmul.mubr.bf16.gmra.mrb[0].mxu0 %v4082
        %v4144 = vpop.f32.mrb[0].mxu0
        %v4145 = vadd.f32 0.0, %v4144
        %v4146 = vpop.f32.mrb[0].mxu0
        %v4147 = vpop.f32.mrb[0].mxu0
        %v4148 = vadd.f32 0.0, %v4147
        %v4149 = vpop.f32.mrb[0].mxu0
        %4150 = vmatprep.mubr.bf16.mxu0 0
        %4151 = vmatmul.mubr.bf16.gmra.mrb[0].mxu0 %v4085
        %v4152 = vpop.f32.mrb[0].mxu0
        %v4153 = vadd.f32 0.0, %v4152
        %v4154 = vpop.f32.mrb[0].mxu0
        %v4155 = vpop.f32.mrb[0].mxu0
        %v4156 = vadd.f32 0.0, %v4155
        %v4157 = vpop.f32.mrb[0].mxu0
        %4158 = vmatprep.mubr.bf16.mxu0 0
        %4159 = vmatmul.mubr.bf16.gmra.mrb[0].mxu0 %v4088
        %v4160 = vpop.f32.mrb[0].mxu0
        %v4161 = vadd.f32 0.0, %v4160
        %v4162 = vpop.f32.mrb[0].mxu0
        %v4163 = vpop.f32.mrb[0].mxu0
        %v4164 = vadd.f32 0.0, %v4163
        %v4165 = vpop.f32.mrb[0].mxu0
        %4166 = vmatprep.mubr.bf16.mxu0 0
        %4167 = vmatmul.mubr.bf16.gmra.mrb[0].mxu0 %v4091
        %v4168 = vpop.f32.mrb[0].mxu0
        %v4169 = vadd.f32 0.0, %v4168
        %v4170 = vpop.f32.mrb[0].mxu0
        %v4171 = vpop.f32.mrb[0].mxu0
        %v4172 = vadd.f32 0.0, %v4171
        %v4173 = vpop.f32.mrb[0].mxu0
        %4174 = vmatprep.mubr.bf16.mxu0 0
        %4175 = vmatmul.mubr.bf16.gmra.mrb[0].mxu0 %v4094
        %v4176 = vpop.f32.mrb[0].mxu0
        %v4177 = vadd.f32 0.0, %v4176
        %v4178 = vpop.f32.mrb[0].mxu0
        %v4179 = vpop.f32.mrb[0].mxu0
        %v4180 = vadd.f32 0.0, %v4179
        %v4181 = vpop.f32.mrb[0].mxu0
        %4182 = vmatprep.mubr.bf16.mxu0 0
        %4183 = vmatmul.mubr.bf16.gmra.mrb[0].mxu0 %v4097
        %v4184 = vpop.f32.mrb[0].mxu0
        %v4185 = vadd.f32 0.0, %v4184
        %v4186 = vpop.f32.mrb[0].mxu0
        %v4187 = vpop.f32.mrb[0].mxu0
        %v4188 = vadd.f32 0.0, %v4187
        %v4189 = vpop.f32.mrb[0].mxu0
        %4190 = vmatprep.mubr.bf16.mxu0 0
        %4191 = vmatmul.mubr.bf16.gmra.mrb[0].mxu0 %v4100
        %v4192 = vpop.f32.mrb[0].mxu0
        %v4193 = vadd.f32 0.0, %v4192
        %v4194 = vpop.f32.mrb[0].mxu0
        %v4195 = vpop.f32.mrb[0].mxu0
        %v4196 = vadd.f32 0.0, %v4195
        %v4197 = vpop.f32.mrb[0].mxu0
        %4198 = vdwg.mxu0
        %v4200 = vsel %vm3325, %v4038, 0
        %v4203 = vsel %vm3325, %v4039, 0
        %v4206 = vsel %vm3325, %v4040, 0
        %v4209 = vsel %vm3325, %v4041, 0
        %v4212 = vsel %vm3325, %v4042, 0
        %v4215 = vsel %vm3325, %v4043, 0
        %v4218 = vsel %vm3325, %v4044, 0
        %v4221 = vsel %vm3325, %v4045, 0
        %4223 = vmatprep.subr.bf16.mxu0 0
        %4224 = vmatpush1.bf16.msra.mxu0 %v4066
        %4225 = vmatprep.subr.bf16.mxu0 0
        %4226 = vmatpush1.bf16.msra.mxu0 %v4067
        %4227 = vmatprep.subr.bf16.mxu0 0
        %4228 = vmatpush1.bf16.msra.mxu0 %v4068
        %4229 = vmatprep.subr.bf16.mxu0 0
        %4230 = vmatpush1.bf16.msra.mxu0 %v4069
        %4231 = vmatprep.subr.bf16.mxu0 0
        %4232 = vmatpush1.bf16.msra.mxu0 0
        %4233 = vmatprep.subr.bf16.mxu0 0
        %4234 = vmatpush1.bf16.msra.mxu0 0
        %4235 = vmatprep.subr.bf16.mxu0 0
        %4236 = vmatpush1.bf16.msra.mxu0 0
        %4237 = vmatprep.subr.bf16.mxu0 0
        %4238 = vmatpush1.bf16.msra.mxu0 0
        %4239 = vmatprep.subr.bf16.mxu0 0
        %4240 = vmatpush1.bf16.msra.mxu0 0
        %4241 = vmatprep.subr.bf16.mxu0 0
        %4242 = vmatpush1.bf16.msra.mxu0 0
        %4243 = vmatprep.subr.bf16.mxu0 0
        %4244 = vmatpush1.bf16.msra.mxu0 0
        %4245 = vmatprep.subr.bf16.mxu0 0
        %4246 = vmatpush1.bf16.msra.mxu0 0
        %4247 = vmatprep.subr.bf16.mxu0 0
        %4248 = vmatpush1.bf16.msra.mxu0 0
        %4249 = vmatprep.subr.bf16.mxu0 0
        %4250 = vmatpush1.bf16.msra.mxu0 0
        %4251 = vmatprep.subr.bf16.mxu0 0
        %4252 = vmatpush1.bf16.msra.mxu0 0
        %4253 = vmatprep.subr.bf16.mxu0 0
        %4254 = vmatpush1.bf16.msra.mxu0 0
        %4255 = vmatprep.mubr.bf16.mxu0 0
        %4256 = vmatmul.mubr.bf16.gmra.mrb[0].mxu0 %v4200
        %v4257 = vpop.f32.mrb[0].mxu0
        %v4258 = vadd.f32 0.0, %v4257
        %v4259 = vpop.f32.mrb[0].mxu0
        %v4260 = vpop.f32.mrb[0].mxu0
        %v4261 = vadd.f32 0.0, %v4260
        %v4262 = vpop.f32.mrb[0].mxu0
        %4263 = vmatprep.mubr.bf16.mxu0 0
        %4264 = vmatmul.mubr.bf16.gmra.mrb[0].mxu0 %v4203
        %v4265 = vpop.f32.mrb[0].mxu0
        %v4266 = vadd.f32 0.0, %v4265
        %v4267 = vpop.f32.mrb[0].mxu0
        %v4268 = vpop.f32.mrb[0].mxu0
        %v4269 = vadd.f32 0.0, %v4268
        %v4270 = vpop.f32.mrb[0].mxu0
        %4271 = vmatprep.mubr.bf16.mxu0 0
        %4272 = vmatmul.mubr.bf16.gmra.mrb[0].mxu0 %v4206
        %v4273 = vpop.f32.mrb[0].mxu0
        %v4274 = vadd.f32 0.0, %v4273
        %v4275 = vpop.f32.mrb[0].mxu0
        %v4276 = vpop.f32.mrb[0].mxu0
        %v4277 = vadd.f32 0.0, %v4276
        %v4278 = vpop.f32.mrb[0].mxu0
        %4279 = vmatprep.mubr.bf16.mxu0 0
        %4280 = vmatmul.mubr.bf16.gmra.mrb[0].mxu0 %v4209
        %v4281 = vpop.f32.mrb[0].mxu0
        %v4282 = vadd.f32 0.0, %v4281
        %v4283 = vpop.f32.mrb[0].mxu0
        %v4284 = vpop.f32.mrb[0].mxu0
        %v4285 = vadd.f32 0.0, %v4284
        %v4286 = vpop.f32.mrb[0].mxu0
        %4287 = vmatprep.mubr.bf16.mxu0 0
        %4288 = vmatmul.mubr.bf16.gmra.mrb[0].mxu0 %v4212
        %v4289 = vpop.f32.mrb[0].mxu0
        %v4290 = vadd.f32 0.0, %v4289
        %v4291 = vpop.f32.mrb[0].mxu0
        %v4292 = vpop.f32.mrb[0].mxu0
        %v4293 = vadd.f32 0.0, %v4292
        %v4294 = vpop.f32.mrb[0].mxu0
        %4295 = vmatprep.mubr.bf16.mxu0 0
        %4296 = vmatmul.mubr.bf16.gmra.mrb[0].mxu0 %v4215
        %v4297 = vpop.f32.mrb[0].mxu0
        %v4298 = vadd.f32 0.0, %v4297
        %v4299 = vpop.f32.mrb[0].mxu0
        %v4300 = vpop.f32.mrb[0].mxu0
        %v4301 = vadd.f32 0.0, %v4300
        %v4302 = vpop.f32.mrb[0].mxu0
        %4303 = vmatprep.mubr.bf16.mxu0 0
        %4304 = vmatmul.mubr.bf16.gmra.mrb[0].mxu0 %v4218
        %v4305 = vpop.f32.mrb[0].mxu0
        %v4306 = vadd.f32 0.0, %v4305
        %v4307 = vpop.f32.mrb[0].mxu0
        %v4308 = vpop.f32.mrb[0].mxu0
        %v4309 = vadd.f32 0.0, %v4308
        %v4310 = vpop.f32.mrb[0].mxu0
        %4311 = vmatprep.mubr.bf16.mxu0 0
        %4312 = vmatmul.mubr.bf16.gmra.mrb[0].mxu0 %v4221
        %v4313 = vpop.f32.mrb[0].mxu0
        %v4314 = vadd.f32 0.0, %v4313
        %v4315 = vpop.f32.mrb[0].mxu0
        %v4316 = vpop.f32.mrb[0].mxu0
        %v4317 = vadd.f32 0.0, %v4316
        %v4318 = vpop.f32.mrb[0].mxu0
        %4319 = vdwg.mxu0
        %v4321 = vsel %vm3325, %v4046, 0
        %v4324 = vsel %vm3325, %v4047, 0
        %v4327 = vsel %vm3325, %v4048, 0
        %v4330 = vsel %vm3325, %v4049, 0
        %v4333 = vsel %vm3325, %v4050, 0
        %v4336 = vsel %vm3325, %v4051, 0
        %v4339 = vsel %vm3325, %v4052, 0
        %v4342 = vsel %vm3325, %v4053, 0
        %4344 = vmatprep.subr.bf16.mxu0 0
        %4345 = vmatpush1.bf16.msra.mxu0 %v4070
        %4346 = vmatprep.subr.bf16.mxu0 0
        %4347 = vmatpush1.bf16.msra.mxu0 %v4071
        %4348 = vmatprep.subr.bf16.mxu0 0
        %4349 = vmatpush1.bf16.msra.mxu0 %v4072
        %4350 = vmatprep.subr.bf16.mxu0 0
        %4351 = vmatpush1.bf16.msra.mxu0 %v4073
        %4352 = vmatprep.subr.bf16.mxu0 0
        %4353 = vmatpush1.bf16.msra.mxu0 0
        %4354 = vmatprep.subr.bf16.mxu0 0
        %4355 = vmatpush1.bf16.msra.mxu0 0
        %4356 = vmatprep.subr.bf16.mxu0 0
        %4357 = vmatpush1.bf16.msra.mxu0 0
        %4358 = vmatprep.subr.bf16.mxu0 0
        %4359 = vmatpush1.bf16.msra.mxu0 0
        %4360 = vmatprep.subr.bf16.mxu0 0
        %4361 = vmatpush1.bf16.msra.mxu0 0
        %4362 = vmatprep.subr.bf16.mxu0 0
        %4363 = vmatpush1.bf16.msra.mxu0 0
        %4364 = vmatprep.subr.bf16.mxu0 0
        %4365 = vmatpush1.bf16.msra.mxu0 0
        %4366 = vmatprep.subr.bf16.mxu0 0
        %4367 = vmatpush1.bf16.msra.mxu0 0
        %4368 = vmatprep.subr.bf16.mxu0 0
        %4369 = vmatpush1.bf16.msra.mxu0 0
        %4370 = vmatprep.subr.bf16.mxu0 0
        %4371 = vmatpush1.bf16.msra.mxu0 0
        %4372 = vmatprep.subr.bf16.mxu0 0
        %4373 = vmatpush1.bf16.msra.mxu0 0
        %4374 = vmatprep.subr.bf16.mxu0 0
        %4375 = vmatpush1.bf16.msra.mxu0 0
        %4376 = vmatprep.mubr.bf16.mxu0 0
        %4377 = vmatmul.mubr.bf16.gmra.mrb[0].mxu0 %v4321
        %v4378 = vpop.f32.mrb[0].mxu0
        %v4379 = vadd.f32 0.0, %v4378
        %v4380 = vpop.f32.mrb[0].mxu0
        %v4381 = vpop.f32.mrb[0].mxu0
        %v4382 = vadd.f32 0.0, %v4381
        %v4383 = vpop.f32.mrb[0].mxu0
        %4384 = vmatprep.mubr.bf16.mxu0 0
        %4385 = vmatmul.mubr.bf16.gmra.mrb[0].mxu0 %v4324
        %v4386 = vpop.f32.mrb[0].mxu0
        %v4387 = vadd.f32 0.0, %v4386
        %v4388 = vpop.f32.mrb[0].mxu0
        %v4389 = vpop.f32.mrb[0].mxu0
        %v4390 = vadd.f32 0.0, %v4389
        %v4391 = vpop.f32.mrb[0].mxu0
        %4392 = vmatprep.mubr.bf16.mxu0 0
        %4393 = vmatmul.mubr.bf16.gmra.mrb[0].mxu0 %v4327
        %v4394 = vpop.f32.mrb[0].mxu0
        %v4395 = vadd.f32 0.0, %v4394
        %v4396 = vpop.f32.mrb[0].mxu0
        %v4397 = vpop.f32.mrb[0].mxu0
        %v4398 = vadd.f32 0.0, %v4397
        %v4399 = vpop.f32.mrb[0].mxu0
        %4400 = vmatprep.mubr.bf16.mxu0 0
        %4401 = vmatmul.mubr.bf16.gmra.mrb[0].mxu0 %v4330
        %v4402 = vpop.f32.mrb[0].mxu0
        %v4403 = vadd.f32 0.0, %v4402
        %v4404 = vpop.f32.mrb[0].mxu0
        %v4405 = vpop.f32.mrb[0].mxu0
        %v4406 = vadd.f32 0.0, %v4405
        %v4407 = vpop.f32.mrb[0].mxu0
        %4408 = vmatprep.mubr.bf16.mxu0 0
        %4409 = vmatmul.mubr.bf16.gmra.mrb[0].mxu0 %v4333
        %v4410 = vpop.f32.mrb[0].mxu0
        %v4411 = vadd.f32 0.0, %v4410
        %v4412 = vpop.f32.mrb[0].mxu0
        %v4413 = vpop.f32.mrb[0].mxu0
        %v4414 = vadd.f32 0.0, %v4413
        %v4415 = vpop.f32.mrb[0].mxu0
        %4416 = vmatprep.mubr.bf16.mxu0 0
        %4417 = vmatmul.mubr.bf16.gmra.mrb[0].mxu0 %v4336
        %v4418 = vpop.f32.mrb[0].mxu0
        %v4419 = vadd.f32 0.0, %v4418
        %v4420 = vpop.f32.mrb[0].mxu0
        %v4421 = vpop.f32.mrb[0].mxu0
        %v4422 = vadd.f32 0.0, %v4421
        %v4423 = vpop.f32.mrb[0].mxu0
        %4424 = vmatprep.mubr.bf16.mxu0 0
        %4425 = vmatmul.mubr.bf16.gmra.mrb[0].mxu0 %v4339
        %v4426 = vpop.f32.mrb[0].mxu0
        %v4427 = vadd.f32 0.0, %v4426
        %v4428 = vpop.f32.mrb[0].mxu0
        %v4429 = vpop.f32.mrb[0].mxu0
        %v4430 = vadd.f32 0.0, %v4429
        %v4431 = vpop.f32.mrb[0].mxu0
        %4432 = vmatprep.mubr.bf16.mxu0 0
        %4433 = vmatmul.mubr.bf16.gmra.mrb[0].mxu0 %v4342
        %v4434 = vpop.f32.mrb[0].mxu0
        %v4435 = vadd.f32 0.0, %v4434
        %v4436 = vpop.f32.mrb[0].mxu0
        %v4437 = vpop.f32.mrb[0].mxu0
        %v4438 = vadd.f32 0.0, %v4437
        %v4439 = vpop.f32.mrb[0].mxu0
        %4440 = vdwg.mxu0
        %v4442 = vsel %vm3325, %v4054, 0
        %v4445 = vsel %vm3325, %v4055, 0
        %v4448 = vsel %vm3325, %v4056, 0
        %v4451 = vsel %vm3325, %v4057, 0
        %v4454 = vsel %vm3325, %v4058, 0
        %v4457 = vsel %vm3325, %v4059, 0
        %v4460 = vsel %vm3325, %v4060, 0
        %v4463 = vsel %vm3325, %v4061, 0
        %4465 = vmatprep.subr.bf16.mxu0 0
        %4466 = vmatpush1.bf16.msra.mxu0 %v4074
        %4467 = vmatprep.subr.bf16.mxu0 0
        %4468 = vmatpush1.bf16.msra.mxu0 %v4075
        %4469 = vmatprep.subr.bf16.mxu0 0
        %4470 = vmatpush1.bf16.msra.mxu0 %v4076
        %4471 = vmatprep.subr.bf16.mxu0 0
        %4472 = vmatpush1.bf16.msra.mxu0 %v4077
        %4473 = vmatprep.subr.bf16.mxu0 0
        %4474 = vmatpush1.bf16.msra.mxu0 0
        %4475 = vmatprep.subr.bf16.mxu0 0
        %4476 = vmatpush1.bf16.msra.mxu0 0
        %4477 = vmatprep.subr.bf16.mxu0 0
        %4478 = vmatpush1.bf16.msra.mxu0 0
        %4479 = vmatprep.subr.bf16.mxu0 0
        %4480 = vmatpush1.bf16.msra.mxu0 0
        %4481 = vmatprep.subr.bf16.mxu0 0
        %4482 = vmatpush1.bf16.msra.mxu0 0
        %4483 = vmatprep.subr.bf16.mxu0 0
        %4484 = vmatpush1.bf16.msra.mxu0 0
        %4485 = vmatprep.subr.bf16.mxu0 0
        %4486 = vmatpush1.bf16.msra.mxu0 0
        %4487 = vmatprep.subr.bf16.mxu0 0
        %4488 = vmatpush1.bf16.msra.mxu0 0
        %4489 = vmatprep.subr.bf16.mxu0 0
        %4490 = vmatpush1.bf16.msra.mxu0 0
        %4491 = vmatprep.subr.bf16.mxu0 0
        %4492 = vmatpush1.bf16.msra.mxu0 0
        %4493 = vmatprep.subr.bf16.mxu0 0
        %4494 = vmatpush1.bf16.msra.mxu0 0
        %4495 = vmatprep.subr.bf16.mxu0 0
        %4496 = vmatpush1.bf16.msra.mxu0 0
        %4497 = vmatprep.mubr.bf16.mxu0 0
        %4498 = vmatmul.mubr.bf16.gmra.mrb[0].mxu0 %v4442
        %v4499 = vpop.f32.mrb[0].mxu0
        %v4500 = vadd.f32 0.0, %v4499
        %v4501 = vpop.f32.mrb[0].mxu0
        %v4502 = vpop.f32.mrb[0].mxu0
        %v4503 = vadd.f32 0.0, %v4502
        %v4504 = vpop.f32.mrb[0].mxu0
        %4505 = vmatprep.mubr.bf16.mxu0 0
        %4506 = vmatmul.mubr.bf16.gmra.mrb[0].mxu0 %v4445
        %v4507 = vpop.f32.mrb[0].mxu0
        %v4508 = vadd.f32 0.0, %v4507
        %v4509 = vpop.f32.mrb[0].mxu0
        %v4510 = vpop.f32.mrb[0].mxu0
        %v4511 = vadd.f32 0.0, %v4510
        %v4512 = vpop.f32.mrb[0].mxu0
        %4513 = vmatprep.mubr.bf16.mxu0 0
        %4514 = vmatmul.mubr.bf16.gmra.mrb[0].mxu0 %v4448
        %v4515 = vpop.f32.mrb[0].mxu0
        %v4516 = vadd.f32 0.0, %v4515
        %v4517 = vpop.f32.mrb[0].mxu0
        %v4518 = vpop.f32.mrb[0].mxu0
        %v4519 = vadd.f32 0.0, %v4518
        %v4520 = vpop.f32.mrb[0].mxu0
        %4521 = vmatprep.mubr.bf16.mxu0 0
        %4522 = vmatmul.mubr.bf16.gmra.mrb[0].mxu0 %v4451
        %v4523 = vpop.f32.mrb[0].mxu0
        %v4524 = vadd.f32 0.0, %v4523
        %v4525 = vpop.f32.mrb[0].mxu0
        %v4526 = vpop.f32.mrb[0].mxu0
        %v4527 = vadd.f32 0.0, %v4526
        %v4528 = vpop.f32.mrb[0].mxu0
        %4529 = vmatprep.mubr.bf16.mxu0 0
        %4530 = vmatmul.mubr.bf16.gmra.mrb[0].mxu0 %v4454
        %v4531 = vpop.f32.mrb[0].mxu0
        %v4532 = vadd.f32 0.0, %v4531
        %v4533 = vpop.f32.mrb[0].mxu0
        %v4534 = vpop.f32.mrb[0].mxu0
        %v4535 = vadd.f32 0.0, %v4534
        %v4536 = vpop.f32.mrb[0].mxu0
        %4537 = vmatprep.mubr.bf16.mxu0 0
        %4538 = vmatmul.mubr.bf16.gmra.mrb[0].mxu0 %v4457
        %v4539 = vpop.f32.mrb[0].mxu0
        %v4540 = vadd.f32 0.0, %v4539
        %v4541 = vpop.f32.mrb[0].mxu0
        %v4542 = vpop.f32.mrb[0].mxu0
        %v4543 = vadd.f32 0.0, %v4542
        %v4544 = vpop.f32.mrb[0].mxu0
        %4545 = vmatprep.mubr.bf16.mxu0 0
        %4546 = vmatmul.mubr.bf16.gmra.mrb[0].mxu0 %v4460
        %v4547 = vpop.f32.mrb[0].mxu0
        %v4548 = vadd.f32 0.0, %v4547
        %v4549 = vpop.f32.mrb[0].mxu0
        %v4550 = vpop.f32.mrb[0].mxu0
        %v4551 = vadd.f32 0.0, %v4550
        %v4552 = vpop.f32.mrb[0].mxu0
        %4553 = vmatprep.mubr.bf16.mxu0 0
        %4554 = vmatmul.mubr.bf16.gmra.mrb[0].mxu0 %v4463
        %v4555 = vpop.f32.mrb[0].mxu0
        %v4556 = vadd.f32 0.0, %v4555
        %v4557 = vpop.f32.mrb[0].mxu0
        %v4558 = vpop.f32.mrb[0].mxu0
        %v4559 = vadd.f32 0.0, %v4558
        %v4560 = vpop.f32.mrb[0].mxu0
        %4561 = vdwg.mxu0
        %v4562 = vpack.c.bf16 %v4140, %v4137
        %v4563 = vpack.c.bf16 %v4148, %v4145
        %v4564 = vpack.c.bf16 %v4156, %v4153
        %v4565 = vpack.c.bf16 %v4164, %v4161
        %v4566 = vpack.c.bf16 %v4172, %v4169
        %v4567 = vpack.c.bf16 %v4180, %v4177
        %v4568 = vpack.c.bf16 %v4188, %v4185
        %v4569 = vpack.c.bf16 %v4196, %v4193
        %v4570 = vpack.c.bf16 %v4261, %v4258
        %v4571 = vpack.c.bf16 %v4269, %v4266
        %v4572 = vpack.c.bf16 %v4277, %v4274
        %v4573 = vpack.c.bf16 %v4285, %v4282
        %v4574 = vpack.c.bf16 %v4293, %v4290
        %v4575 = vpack.c.bf16 %v4301, %v4298
        %v4576 = vpack.c.bf16 %v4309, %v4306
        %v4577 = vpack.c.bf16 %v4317, %v4314
        %v4578 = vpack.c.bf16 %v4382, %v4379
        %v4579 = vpack.c.bf16 %v4390, %v4387
        %v4580 = vpack.c.bf16 %v4398, %v4395
        %v4581 = vpack.c.bf16 %v4406, %v4403
        %v4582 = vpack.c.bf16 %v4414, %v4411
        %v4583 = vpack.c.bf16 %v4422, %v4419
        %v4584 = vpack.c.bf16 %v4430, %v4427
        %v4585 = vpack.c.bf16 %v4438, %v4435
        %v4586 = vpack.c.bf16 %v4503, %v4500
        %v4587 = vpack.c.bf16 %v4511, %v4508
        %v4588 = vpack.c.bf16 %v4519, %v4516
        %v4589 = vpack.c.bf16 %v4527, %v4524
        %v4590 = vpack.c.bf16 %v4535, %v4532
        %v4591 = vpack.c.bf16 %v4543, %v4540
        %v4592 = vpack.c.bf16 %v4551, %v4548
        %v4593 = vpack.c.bf16 %v4559, %v4556
        %v4594 = vld [vmem:[%s6] sm:$0xf]
        %v4595 = vld [vmem:[%s6 + $0x4] sm:$0xf]
        %v4596 = vld [vmem:[%s6 + $0x8] sm:$0xf]
        %v4597 = vld [vmem:[%s6 + $0xc] sm:$0xf]
        %v4598 = vld [vmem:[%s6 + $0x10] sm:$0xf]
        %v4599 = vld [vmem:[%s6 + $0x14] sm:$0xf]
        %v4600 = vld [vmem:[%s6 + $0x18] sm:$0xf]
        %v4601 = vld [vmem:[%s6 + $0x1c] sm:$0xf]
        %v4602 = vld [vmem:[%s6 + $0x20] sm:$0xf]
        %v4603 = vld [vmem:[%s6 + $0x24] sm:$0xf]
        %v4604 = vld [vmem:[%s6 + $0x28] sm:$0xf]
        %v4605 = vld [vmem:[%s6 + $0x2c] sm:$0xf]
        %v4606 = vld [vmem:[%s6 + $0x30] sm:$0xf]
        %v4607 = vld [vmem:[%s6 + $0x34] sm:$0xf]
        %v4608 = vld [vmem:[%s6 + $0x38] sm:$0xf]
        %v4609 = vld [vmem:[%s6 + $0x3c] sm:$0xf]
        %v4614 = vunpack.c.l.b16 %v4594
        %v4615 = vunpack.c.l.b16 %v4595
        %v4616 = vunpack.c.l.b16 %v4596
        %v4617 = vunpack.c.l.b16 %v4597
        %v4618 = vpack.c.b16 %v4615, %v4614
        %v4619 = vpack.c.b16 %v4617, %v4616
        %v4623 = vsel %vm2792, %v4562, 0
        %v4626 = vsel %vm2792, %v4563, 0
        %v4629 = vsel %vm2792, %v4564, 0
        %v4632 = vsel %vm2792, %v4565, 0
        %v4635 = vsel %vm2792, %v4566, 0
        %v4638 = vsel %vm2792, %v4567, 0
        %v4641 = vsel %vm2792, %v4568, 0
        %v4644 = vsel %vm2792, %v4569, 0
        %4646 = vmatprep.subr.bf16.mxu0 0
        %4647 = vmatpush1.bf16.msra.mxu0 %v4618
        %4648 = vmatprep.subr.bf16.mxu0 0
        %4649 = vmatpush1.bf16.msra.mxu0 %v4619
        %4650 = vmatprep.subr.bf16.mxu0 0
        %4651 = vmatpush1.bf16.msra.mxu0 0
        %4652 = vmatprep.subr.bf16.mxu0 0
        %4653 = vmatpush1.bf16.msra.mxu0 0
        %4654 = vmatprep.subr.bf16.mxu0 0
        %4655 = vmatpush1.bf16.msra.mxu0 0
        %4656 = vmatprep.subr.bf16.mxu0 0
        %4657 = vmatpush1.bf16.msra.mxu0 0
        %4658 = vmatprep.subr.bf16.mxu0 0
        %4659 = vmatpush1.bf16.msra.mxu0 0
        %4660 = vmatprep.subr.bf16.mxu0 0
        %4661 = vmatpush1.bf16.msra.mxu0 0
        %4662 = vmatprep.subr.bf16.mxu0 0
        %4663 = vmatpush1.bf16.msra.mxu0 0
        %4664 = vmatprep.subr.bf16.mxu0 0
        %4665 = vmatpush1.bf16.msra.mxu0 0
        %4666 = vmatprep.subr.bf16.mxu0 0
        %4667 = vmatpush1.bf16.msra.mxu0 0
        %4668 = vmatprep.subr.bf16.mxu0 0
        %4669 = vmatpush1.bf16.msra.mxu0 0
        %4670 = vmatprep.subr.bf16.mxu0 0
        %4671 = vmatpush1.bf16.msra.mxu0 0
        %4672 = vmatprep.subr.bf16.mxu0 0
        %4673 = vmatpush1.bf16.msra.mxu0 0
        %4674 = vmatprep.subr.bf16.mxu0 0
        %4675 = vmatpush1.bf16.msra.mxu0 0
        %4676 = vmatprep.subr.bf16.mxu0 0
        %4677 = vmatpush1.bf16.msra.mxu0 0
        %4678 = vmatprep.mubr.bf16.mxu0 0
        %4679 = vmatmul.mubr.bf16.gmra.mrb[0].mxu0 %v4623
        %v4680 = vpop.f32.mrb[0].mxu0
        %v4681 = vadd.f32 0.0, %v4680
        %v4682 = vpop.f32.mrb[0].mxu0
        %v4683 = vpop.f32.mrb[0].mxu0
        %v4684 = vadd.f32 0.0, %v4683
        %v4685 = vpop.f32.mrb[0].mxu0
        %4686 = vmatprep.mubr.bf16.mxu0 0
        %4687 = vmatmul.mubr.bf16.gmra.mrb[0].mxu0 %v4626
        %v4688 = vpop.f32.mrb[0].mxu0
        %v4689 = vadd.f32 0.0, %v4688
        %v4690 = vpop.f32.mrb[0].mxu0
        %v4691 = vpop.f32.mrb[0].mxu0
        %v4692 = vadd.f32 0.0, %v4691
        %v4693 = vpop.f32.mrb[0].mxu0
        %4694 = vmatprep.mubr.bf16.mxu0 0
        %4695 = vmatmul.mubr.bf16.gmra.mrb[0].mxu0 %v4629
        %v4696 = vpop.f32.mrb[0].mxu0
        %v4697 = vadd.f32 0.0, %v4696
        %v4698 = vpop.f32.mrb[0].mxu0
        %v4699 = vpop.f32.mrb[0].mxu0
        %v4700 = vadd.f32 0.0, %v4699
        %v4701 = vpop.f32.mrb[0].mxu0
        %4702 = vmatprep.mubr.bf16.mxu0 0
        %4703 = vmatmul.mubr.bf16.gmra.mrb[0].mxu0 %v4632
        %v4704 = vpop.f32.mrb[0].mxu0
        %v4705 = vadd.f32 0.0, %v4704
        %v4706 = vpop.f32.mrb[0].mxu0
        %v4707 = vpop.f32.mrb[0].mxu0
        %v4708 = vadd.f32 0.0, %v4707
        %v4709 = vpop.f32.mrb[0].mxu0
        %4710 = vmatprep.mubr.bf16.mxu0 0
        %4711 = vmatmul.mubr.bf16.gmra.mrb[0].mxu0 %v4635
        %v4712 = vpop.f32.mrb[0].mxu0
        %v4713 = vadd.f32 0.0, %v4712
        %v4714 = vpop.f32.mrb[0].mxu0
        %v4715 = vpop.f32.mrb[0].mxu0
        %v4716 = vadd.f32 0.0, %v4715
        %v4717 = vpop.f32.mrb[0].mxu0
        %4718 = vmatprep.mubr.bf16.mxu0 0
        %4719 = vmatmul.mubr.bf16.gmra.mrb[0].mxu0 %v4638
        %v4720 = vpop.f32.mrb[0].mxu0
        %v4721 = vadd.f32 0.0, %v4720
        %v4722 = vpop.f32.mrb[0].mxu0
        %v4723 = vpop.f32.mrb[0].mxu0
        %v4724 = vadd.f32 0.0, %v4723
        %v4725 = vpop.f32.mrb[0].mxu0
        %4726 = vmatprep.mubr.bf16.mxu0 0
        %4727 = vmatmul.mubr.bf16.gmra.mrb[0].mxu0 %v4641
        %v4728 = vpop.f32.mrb[0].mxu0
        %v4729 = vadd.f32 0.0, %v4728
        %v4730 = vpop.f32.mrb[0].mxu0
        %v4731 = vpop.f32.mrb[0].mxu0
        %v4732 = vadd.f32 0.0, %v4731
        %v4733 = vpop.f32.mrb[0].mxu0
        %4734 = vmatprep.mubr.bf16.mxu0 0
        %4735 = vmatmul.mubr.bf16.gmra.mrb[0].mxu0 %v4644
        %v4736 = vpop.f32.mrb[0].mxu0
        %v4737 = vadd.f32 0.0, %v4736
        %v4738 = vpop.f32.mrb[0].mxu0
        %v4739 = vpop.f32.mrb[0].mxu0
        %v4740 = vadd.f32 0.0, %v4739
        %v4741 = vpop.f32.mrb[0].mxu0
        %4742 = vdwg.mxu0
        %v4747 = vunpack.c.l.b16 %v4598
        %v4748 = vunpack.c.l.b16 %v4599
        %v4749 = vunpack.c.l.b16 %v4600
        %v4750 = vunpack.c.l.b16 %v4601
        %v4751 = vpack.c.b16 %v4748, %v4747
        %v4752 = vpack.c.b16 %v4750, %v4749
        %v4756 = vsel %vm2792, %v4570, 0
        %v4759 = vsel %vm2792, %v4571, 0
        %v4762 = vsel %vm2792, %v4572, 0
        %v4765 = vsel %vm2792, %v4573, 0
        %v4768 = vsel %vm2792, %v4574, 0
        %v4771 = vsel %vm2792, %v4575, 0
        %v4774 = vsel %vm2792, %v4576, 0
        %v4777 = vsel %vm2792, %v4577, 0
        %4779 = vmatprep.subr.bf16.mxu0 0
        %4780 = vmatpush1.bf16.msra.mxu0 %v4751
        %4781 = vmatprep.subr.bf16.mxu0 0
        %4782 = vmatpush1.bf16.msra.mxu0 %v4752
        %4783 = vmatprep.subr.bf16.mxu0 0
        %4784 = vmatpush1.bf16.msra.mxu0 0
        %4785 = vmatprep.subr.bf16.mxu0 0
        %4786 = vmatpush1.bf16.msra.mxu0 0
        %4787 = vmatprep.subr.bf16.mxu0 0
        %4788 = vmatpush1.bf16.msra.mxu0 0
        %4789 = vmatprep.subr.bf16.mxu0 0
        %4790 = vmatpush1.bf16.msra.mxu0 0
        %4791 = vmatprep.subr.bf16.mxu0 0
        %4792 = vmatpush1.bf16.msra.mxu0 0
        %4793 = vmatprep.subr.bf16.mxu0 0
        %4794 = vmatpush1.bf16.msra.mxu0 0
        %4795 = vmatprep.subr.bf16.mxu0 0
        %4796 = vmatpush1.bf16.msra.mxu0 0
        %4797 = vmatprep.subr.bf16.mxu0 0
        %4798 = vmatpush1.bf16.msra.mxu0 0
        %4799 = vmatprep.subr.bf16.mxu0 0
        %4800 = vmatpush1.bf16.msra.mxu0 0
        %4801 = vmatprep.subr.bf16.mxu0 0
        %4802 = vmatpush1.bf16.msra.mxu0 0
        %4803 = vmatprep.subr.bf16.mxu0 0
        %4804 = vmatpush1.bf16.msra.mxu0 0
        %4805 = vmatprep.subr.bf16.mxu0 0
        %4806 = vmatpush1.bf16.msra.mxu0 0
        %4807 = vmatprep.subr.bf16.mxu0 0
        %4808 = vmatpush1.bf16.msra.mxu0 0
        %4809 = vmatprep.subr.bf16.mxu0 0
        %4810 = vmatpush1.bf16.msra.mxu0 0
        %4811 = vmatprep.mubr.bf16.mxu0 0
        %4812 = vmatmul.mubr.bf16.gmra.mrb[0].mxu0 %v4756
        %v4813 = vpop.f32.mrb[0].mxu0
        %v4814 = vadd.f32 0.0, %v4813
        %v4815 = vpop.f32.mrb[0].mxu0
        %v4816 = vpop.f32.mrb[0].mxu0
        %v4817 = vadd.f32 0.0, %v4816
        %v4818 = vpop.f32.mrb[0].mxu0
        %4819 = vmatprep.mubr.bf16.mxu0 0
        %4820 = vmatmul.mubr.bf16.gmra.mrb[0].mxu0 %v4759
        %v4821 = vpop.f32.mrb[0].mxu0
        %v4822 = vadd.f32 0.0, %v4821
        %v4823 = vpop.f32.mrb[0].mxu0
        %v4824 = vpop.f32.mrb[0].mxu0
        %v4825 = vadd.f32 0.0, %v4824
        %v4826 = vpop.f32.mrb[0].mxu0
        %4827 = vmatprep.mubr.bf16.mxu0 0
        %4828 = vmatmul.mubr.bf16.gmra.mrb[0].mxu0 %v4762
        %v4829 = vpop.f32.mrb[0].mxu0
        %v4830 = vadd.f32 0.0, %v4829
        %v4831 = vpop.f32.mrb[0].mxu0
        %v4832 = vpop.f32.mrb[0].mxu0
        %v4833 = vadd.f32 0.0, %v4832
        %v4834 = vpop.f32.mrb[0].mxu0
        %4835 = vmatprep.mubr.bf16.mxu0 0
        %4836 = vmatmul.mubr.bf16.gmra.mrb[0].mxu0 %v4765
        %v4837 = vpop.f32.mrb[0].mxu0
        %v4838 = vadd.f32 0.0, %v4837
        %v4839 = vpop.f32.mrb[0].mxu0
        %v4840 = vpop.f32.mrb[0].mxu0
        %v4841 = vadd.f32 0.0, %v4840
        %v4842 = vpop.f32.mrb[0].mxu0
        %4843 = vmatprep.mubr.bf16.mxu0 0
        %4844 = vmatmul.mubr.bf16.gmra.mrb[0].mxu0 %v4768
        %v4845 = vpop.f32.mrb[0].mxu0
        %v4846 = vadd.f32 0.0, %v4845
        %v4847 = vpop.f32.mrb[0].mxu0
        %v4848 = vpop.f32.mrb[0].mxu0
        %v4849 = vadd.f32 0.0, %v4848
        %v4850 = vpop.f32.mrb[0].mxu0
        %4851 = vmatprep.mubr.bf16.mxu0 0
        %4852 = vmatmul.mubr.bf16.gmra.mrb[0].mxu0 %v4771
        %v4853 = vpop.f32.mrb[0].mxu0
        %v4854 = vadd.f32 0.0, %v4853
        %v4855 = vpop.f32.mrb[0].mxu0
        %v4856 = vpop.f32.mrb[0].mxu0
        %v4857 = vadd.f32 0.0, %v4856
        %v4858 = vpop.f32.mrb[0].mxu0
        %4859 = vmatprep.mubr.bf16.mxu0 0
        %4860 = vmatmul.mubr.bf16.gmra.mrb[0].mxu0 %v4774
        %v4861 = vpop.f32.mrb[0].mxu0
        %v4862 = vadd.f32 0.0, %v4861
        %v4863 = vpop.f32.mrb[0].mxu0
        %v4864 = vpop.f32.mrb[0].mxu0
        %v4865 = vadd.f32 0.0, %v4864
        %v4866 = vpop.f32.mrb[0].mxu0
        %4867 = vmatprep.mubr.bf16.mxu0 0
        %4868 = vmatmul.mubr.bf16.gmra.mrb[0].mxu0 %v4777
        %v4869 = vpop.f32.mrb[0].mxu0
        %v4870 = vadd.f32 0.0, %v4869
        %v4871 = vpop.f32.mrb[0].mxu0
        %v4872 = vpop.f32.mrb[0].mxu0
        %v4873 = vadd.f32 0.0, %v4872
        %v4874 = vpop.f32.mrb[0].mxu0
        %4875 = vdwg.mxu0
        %v4880 = vunpack.c.l.b16 %v4602
        %v4881 = vunpack.c.l.b16 %v4603
        %v4882 = vunpack.c.l.b16 %v4604
        %v4883 = vunpack.c.l.b16 %v4605
        %v4884 = vpack.c.b16 %v4881, %v4880
        %v4885 = vpack.c.b16 %v4883, %v4882
        %v4889 = vsel %vm2792, %v4578, 0
        %v4892 = vsel %vm2792, %v4579, 0
        %v4895 = vsel %vm2792, %v4580, 0
        %v4898 = vsel %vm2792, %v4581, 0
        %v4901 = vsel %vm2792, %v4582, 0
        %v4904 = vsel %vm2792, %v4583, 0
        %v4907 = vsel %vm2792, %v4584, 0
        %v4910 = vsel %vm2792, %v4585, 0
        %4912 = vmatprep.subr.bf16.mxu0 0
        %4913 = vmatpush1.bf16.msra.mxu0 %v4884
        %4914 = vmatprep.subr.bf16.mxu0 0
        %4915 = vmatpush1.bf16.msra.mxu0 %v4885
        %4916 = vmatprep.subr.bf16.mxu0 0
        %4917 = vmatpush1.bf16.msra.mxu0 0
        %4918 = vmatprep.subr.bf16.mxu0 0
        %4919 = vmatpush1.bf16.msra.mxu0 0
        %4920 = vmatprep.subr.bf16.mxu0 0
        %4921 = vmatpush1.bf16.msra.mxu0 0
        %4922 = vmatprep.subr.bf16.mxu0 0
        %4923 = vmatpush1.bf16.msra.mxu0 0
        %4924 = vmatprep.subr.bf16.mxu0 0
        %4925 = vmatpush1.bf16.msra.mxu0 0
        %4926 = vmatprep.subr.bf16.mxu0 0
        %4927 = vmatpush1.bf16.msra.mxu0 0
        %4928 = vmatprep.subr.bf16.mxu0 0
        %4929 = vmatpush1.bf16.msra.mxu0 0
        %4930 = vmatprep.subr.bf16.mxu0 0
        %4931 = vmatpush1.bf16.msra.mxu0 0
        %4932 = vmatprep.subr.bf16.mxu0 0
        %4933 = vmatpush1.bf16.msra.mxu0 0
        %4934 = vmatprep.subr.bf16.mxu0 0
        %4935 = vmatpush1.bf16.msra.mxu0 0
        %4936 = vmatprep.subr.bf16.mxu0 0
        %4937 = vmatpush1.bf16.msra.mxu0 0
        %4938 = vmatprep.subr.bf16.mxu0 0
        %4939 = vmatpush1.bf16.msra.mxu0 0
        %4940 = vmatprep.subr.bf16.mxu0 0
        %4941 = vmatpush1.bf16.msra.mxu0 0
        %4942 = vmatprep.subr.bf16.mxu0 0
        %4943 = vmatpush1.bf16.msra.mxu0 0
        %4944 = vmatprep.mubr.bf16.mxu0 0
        %4945 = vmatmul.mubr.bf16.gmra.mrb[0].mxu0 %v4889
        %v4946 = vpop.f32.mrb[0].mxu0
        %v4947 = vadd.f32 0.0, %v4946
        %v4948 = vpop.f32.mrb[0].mxu0
        %v4949 = vpop.f32.mrb[0].mxu0
        %v4950 = vadd.f32 0.0, %v4949
        %v4951 = vpop.f32.mrb[0].mxu0
        %4952 = vmatprep.mubr.bf16.mxu0 0
        %4953 = vmatmul.mubr.bf16.gmra.mrb[0].mxu0 %v4892
        %v4954 = vpop.f32.mrb[0].mxu0
        %v4955 = vadd.f32 0.0, %v4954
        %v4956 = vpop.f32.mrb[0].mxu0
        %v4957 = vpop.f32.mrb[0].mxu0
        %v4958 = vadd.f32 0.0, %v4957
        %v4959 = vpop.f32.mrb[0].mxu0
        %4960 = vmatprep.mubr.bf16.mxu0 0
        %4961 = vmatmul.mubr.bf16.gmra.mrb[0].mxu0 %v4895
        %v4962 = vpop.f32.mrb[0].mxu0
        %v4963 = vadd.f32 0.0, %v4962
        %v4964 = vpop.f32.mrb[0].mxu0
        %v4965 = vpop.f32.mrb[0].mxu0
        %v4966 = vadd.f32 0.0, %v4965
        %v4967 = vpop.f32.mrb[0].mxu0
        %4968 = vmatprep.mubr.bf16.mxu0 0
        %4969 = vmatmul.mubr.bf16.gmra.mrb[0].mxu0 %v4898
        %v4970 = vpop.f32.mrb[0].mxu0
        %v4971 = vadd.f32 0.0, %v4970
        %v4972 = vpop.f32.mrb[0].mxu0
        %v4973 = vpop.f32.mrb[0].mxu0
        %v4974 = vadd.f32 0.0, %v4973
        %v4975 = vpop.f32.mrb[0].mxu0
        %4976 = vmatprep.mubr.bf16.mxu0 0
        %4977 = vmatmul.mubr.bf16.gmra.mrb[0].mxu0 %v4901
        %v4978 = vpop.f32.mrb[0].mxu0
        %v4979 = vadd.f32 0.0, %v4978
        %v4980 = vpop.f32.mrb[0].mxu0
        %v4981 = vpop.f32.mrb[0].mxu0
        %v4982 = vadd.f32 0.0, %v4981
        %v4983 = vpop.f32.mrb[0].mxu0
        %4984 = vmatprep.mubr.bf16.mxu0 0
        %4985 = vmatmul.mubr.bf16.gmra.mrb[0].mxu0 %v4904
        %v4986 = vpop.f32.mrb[0].mxu0
        %v4987 = vadd.f32 0.0, %v4986
        %v4988 = vpop.f32.mrb[0].mxu0
        %v4989 = vpop.f32.mrb[0].mxu0
        %v4990 = vadd.f32 0.0, %v4989
        %v4991 = vpop.f32.mrb[0].mxu0
        %4992 = vmatprep.mubr.bf16.mxu0 0
        %4993 = vmatmul.mubr.bf16.gmra.mrb[0].mxu0 %v4907
        %v4994 = vpop.f32.mrb[0].mxu0
        %v4995 = vadd.f32 0.0, %v4994
        %v4996 = vpop.f32.mrb[0].mxu0
        %v4997 = vpop.f32.mrb[0].mxu0
        %v4998 = vadd.f32 0.0, %v4997
        %v4999 = vpop.f32.mrb[0].mxu0
        %5000 = vmatprep.mubr.bf16.mxu0 0
        %5001 = vmatmul.mubr.bf16.gmra.mrb[0].mxu0 %v4910
        %v5002 = vpop.f32.mrb[0].mxu0
        %v5003 = vadd.f32 0.0, %v5002
        %v5004 = vpop.f32.mrb[0].mxu0
        %v5005 = vpop.f32.mrb[0].mxu0
        %v5006 = vadd.f32 0.0, %v5005
        %v5007 = vpop.f32.mrb[0].mxu0
        %5008 = vdwg.mxu0
        %v5013 = vunpack.c.l.b16 %v4606
        %v5014 = vunpack.c.l.b16 %v4607
        %v5015 = vunpack.c.l.b16 %v4608
        %v5016 = vunpack.c.l.b16 %v4609
        %v5017 = vpack.c.b16 %v5014, %v5013
        %v5018 = vpack.c.b16 %v5016, %v5015
        %v5022 = vsel %vm2792, %v4586, 0
        %v5025 = vsel %vm2792, %v4587, 0
        %v5028 = vsel %vm2792, %v4588, 0
        %v5031 = vsel %vm2792, %v4589, 0
        %v5034 = vsel %vm2792, %v4590, 0
        %v5037 = vsel %vm2792, %v4591, 0
        %v5040 = vsel %vm2792, %v4592, 0
        %v5043 = vsel %vm2792, %v4593, 0
        %5045 = vmatprep.subr.bf16.mxu0 0
        %5046 = vmatpush1.bf16.msra.mxu0 %v5017
        %5047 = vmatprep.subr.bf16.mxu0 0
        %5048 = vmatpush1.bf16.msra.mxu0 %v5018
        %5049 = vmatprep.subr.bf16.mxu0 0
        %5050 = vmatpush1.bf16.msra.mxu0 0
        %5051 = vmatprep.subr.bf16.mxu0 0
        %5052 = vmatpush1.bf16.msra.mxu0 0
        %5053 = vmatprep.subr.bf16.mxu0 0
        %5054 = vmatpush1.bf16.msra.mxu0 0
        %5055 = vmatprep.subr.bf16.mxu0 0
        %5056 = vmatpush1.bf16.msra.mxu0 0
        %5057 = vmatprep.subr.bf16.mxu0 0
        %5058 = vmatpush1.bf16.msra.mxu0 0
        %5059 = vmatprep.subr.bf16.mxu0 0
        %5060 = vmatpush1.bf16.msra.mxu0 0
        %5061 = vmatprep.subr.bf16.mxu0 0
        %5062 = vmatpush1.bf16.msra.mxu0 0
        %5063 = vmatprep.subr.bf16.mxu0 0
        %5064 = vmatpush1.bf16.msra.mxu0 0
        %5065 = vmatprep.subr.bf16.mxu0 0
        %5066 = vmatpush1.bf16.msra.mxu0 0
        %5067 = vmatprep.subr.bf16.mxu0 0
        %5068 = vmatpush1.bf16.msra.mxu0 0
        %5069 = vmatprep.subr.bf16.mxu0 0
        %5070 = vmatpush1.bf16.msra.mxu0 0
        %5071 = vmatprep.subr.bf16.mxu0 0
        %5072 = vmatpush1.bf16.msra.mxu0 0
        %5073 = vmatprep.subr.bf16.mxu0 0
        %5074 = vmatpush1.bf16.msra.mxu0 0
        %5075 = vmatprep.subr.bf16.mxu0 0
        %5076 = vmatpush1.bf16.msra.mxu0 0
        %5077 = vmatprep.mubr.bf16.mxu0 0
        %5078 = vmatmul.mubr.bf16.gmra.mrb[0].mxu0 %v5022
        %v5079 = vpop.f32.mrb[0].mxu0
        %v5080 = vadd.f32 0.0, %v5079
        %v5081 = vpop.f32.mrb[0].mxu0
        %v5082 = vpop.f32.mrb[0].mxu0
        %v5083 = vadd.f32 0.0, %v5082
        %v5084 = vpop.f32.mrb[0].mxu0
        %5085 = vmatprep.mubr.bf16.mxu0 0
        %5086 = vmatmul.mubr.bf16.gmra.mrb[0].mxu0 %v5025
        %v5087 = vpop.f32.mrb[0].mxu0
        %v5088 = vadd.f32 0.0, %v5087
        %v5089 = vpop.f32.mrb[0].mxu0
        %v5090 = vpop.f32.mrb[0].mxu0
        %v5091 = vadd.f32 0.0, %v5090
        %v5092 = vpop.f32.mrb[0].mxu0
        %5093 = vmatprep.mubr.bf16.mxu0 0
        %5094 = vmatmul.mubr.bf16.gmra.mrb[0].mxu0 %v5028
        %v5095 = vpop.f32.mrb[0].mxu0
        %v5096 = vadd.f32 0.0, %v5095
        %v5097 = vpop.f32.mrb[0].mxu0
        %v5098 = vpop.f32.mrb[0].mxu0
        %v5099 = vadd.f32 0.0, %v5098
        %v5100 = vpop.f32.mrb[0].mxu0
        %5101 = vmatprep.mubr.bf16.mxu0 0
        %5102 = vmatmul.mubr.bf16.gmra.mrb[0].mxu0 %v5031
        %v5103 = vpop.f32.mrb[0].mxu0
        %v5104 = vadd.f32 0.0, %v5103
        %v5105 = vpop.f32.mrb[0].mxu0
        %v5106 = vpop.f32.mrb[0].mxu0
        %v5107 = vadd.f32 0.0, %v5106
        %v5108 = vpop.f32.mrb[0].mxu0
        %5109 = vmatprep.mubr.bf16.mxu0 0
        %5110 = vmatmul.mubr.bf16.gmra.mrb[0].mxu0 %v5034
        %v5111 = vpop.f32.mrb[0].mxu0
        %v5112 = vadd.f32 0.0, %v5111
        %v5113 = vpop.f32.mrb[0].mxu0
        %v5114 = vpop.f32.mrb[0].mxu0
        %v5115 = vadd.f32 0.0, %v5114
        %v5116 = vpop.f32.mrb[0].mxu0
        %5117 = vmatprep.mubr.bf16.mxu0 0
        %5118 = vmatmul.mubr.bf16.gmra.mrb[0].mxu0 %v5037
        %v5119 = vpop.f32.mrb[0].mxu0
        %v5120 = vadd.f32 0.0, %v5119
        %v5121 = vpop.f32.mrb[0].mxu0
        %v5122 = vpop.f32.mrb[0].mxu0
        %v5123 = vadd.f32 0.0, %v5122
        %v5124 = vpop.f32.mrb[0].mxu0
        %5125 = vmatprep.mubr.bf16.mxu0 0
        %5126 = vmatmul.mubr.bf16.gmra.mrb[0].mxu0 %v5040
        %v5127 = vpop.f32.mrb[0].mxu0
        %v5128 = vadd.f32 0.0, %v5127
        %v5129 = vpop.f32.mrb[0].mxu0
        %v5130 = vpop.f32.mrb[0].mxu0
        %v5131 = vadd.f32 0.0, %v5130
        %v5132 = vpop.f32.mrb[0].mxu0
        %5133 = vmatprep.mubr.bf16.mxu0 0
        %5134 = vmatmul.mubr.bf16.gmra.mrb[0].mxu0 %v5043
        %v5135 = vpop.f32.mrb[0].mxu0
        %v5136 = vadd.f32 0.0, %v5135
        %v5137 = vpop.f32.mrb[0].mxu0
        %v5138 = vpop.f32.mrb[0].mxu0
        %v5139 = vadd.f32 0.0, %v5138
        %v5140 = vpop.f32.mrb[0].mxu0
        %5141 = vdwg.mxu0
        %v5142 = vadd.f32 %v4681, %v4814
        %v5143 = vadd.f32 %v5142, %v4947
        %v5144 = vadd.f32 %v5143, %v5080
        %v5145 = vadd.f32 %v4684, %v4817
        %v5146 = vadd.f32 %v5145, %v4950
        %v5147 = vadd.f32 %v5146, %v5083
        %v5148 = vadd.f32 %v4689, %v4822
        %v5149 = vadd.f32 %v5148, %v4955
        %v5150 = vadd.f32 %v5149, %v5088
        %v5151 = vadd.f32 %v4692, %v4825
        %v5152 = vadd.f32 %v5151, %v4958
        %v5153 = vadd.f32 %v5152, %v5091
        %v5154 = vadd.f32 %v4697, %v4830
        %v5155 = vadd.f32 %v5154, %v4963
        %v5156 = vadd.f32 %v5155, %v5096
        %v5157 = vadd.f32 %v4700, %v4833
        %v5158 = vadd.f32 %v5157, %v4966
        %v5159 = vadd.f32 %v5158, %v5099
        %v5160 = vadd.f32 %v4705, %v4838
        %v5161 = vadd.f32 %v5160, %v4971
        %v5162 = vadd.f32 %v5161, %v5104
        %v5163 = vadd.f32 %v4708, %v4841
        %v5164 = vadd.f32 %v5163, %v4974
        %v5165 = vadd.f32 %v5164, %v5107
        %v5166 = vadd.f32 %v4713, %v4846
        %v5167 = vadd.f32 %v5166, %v4979
        %v5168 = vadd.f32 %v5167, %v5112
        %v5169 = vadd.f32 %v4716, %v4849
        %v5170 = vadd.f32 %v5169, %v4982
        %v5171 = vadd.f32 %v5170, %v5115
        %v5172 = vadd.f32 %v4721, %v4854
        %v5173 = vadd.f32 %v5172, %v4987
        %v5174 = vadd.f32 %v5173, %v5120
        %v5175 = vadd.f32 %v4724, %v4857
        %v5176 = vadd.f32 %v5175, %v4990
        %v5177 = vadd.f32 %v5176, %v5123
        %v5178 = vadd.f32 %v4729, %v4862
        %v5179 = vadd.f32 %v5178, %v4995
        %v5180 = vadd.f32 %v5179, %v5128
        %v5181 = vadd.f32 %v4732, %v4865
        %v5182 = vadd.f32 %v5181, %v4998
        %v5183 = vadd.f32 %v5182, %v5131
        %v5184 = vadd.f32 %v4737, %v4870
        %v5185 = vadd.f32 %v5184, %v5003
        %v5186 = vadd.f32 %v5185, %v5136
        %v5187 = vadd.f32 %v4740, %v4873
        %v5188 = vadd.f32 %v5187, %v5006
        %v5189 = vadd.f32 %v5188, %v5139
        %v5190 = vlaneseq
        %v5191 = vshrl.u32 %v5190, 7
        %v5192 = vsub.s32 3, %v5191
        %v5193 = vrot.slane %v371, %v5192
        %v5194 = vadd.f32 %v5144, %v5193
        %v5195 = vadd.f32 %v5147, %v5193
        %v5196 = vadd.f32 %v5150, %v5193
        %v5197 = vadd.f32 %v5153, %v5193
        %v5198 = vadd.f32 %v5156, %v5193
        %v5199 = vadd.f32 %v5159, %v5193
        %v5200 = vadd.f32 %v5162, %v5193
        %v5201 = vadd.f32 %v5165, %v5193
        %v5202 = vadd.f32 %v5168, %v5193
        %v5203 = vadd.f32 %v5171, %v5193
        %v5204 = vadd.f32 %v5174, %v5193
        %v5205 = vadd.f32 %v5177, %v5193
        %v5206 = vadd.f32 %v5180, %v5193
        %v5207 = vadd.f32 %v5183, %v5193
        %v5208 = vadd.f32 %v5186, %v5193
        %v5209 = vadd.f32 %v5189, %v5193
        %5210 = vst [vmem:[%s353] sm:$0xff] %v5194
        %5211 = vst [vmem:[%s353 + $0x8] sm:$0xff] %v5195
        %5212 = vst [vmem:[%s353 + $0x10] sm:$0xff] %v5196
        %5213 = vst [vmem:[%s353 + $0x18] sm:$0xff] %v5197
        %5214 = vst [vmem:[%s353 + $0x20] sm:$0xff] %v5198
        %5215 = vst [vmem:[%s353 + $0x28] sm:$0xff] %v5199
        %5216 = vst [vmem:[%s353 + $0x30] sm:$0xff] %v5200
        %5217 = vst [vmem:[%s353 + $0x38] sm:$0xff] %v5201
        %5218 = vst [vmem:[%s353 + $0x40] sm:$0xff] %v5202
        %5219 = vst [vmem:[%s353 + $0x48] sm:$0xff] %v5203
        %5220 = vst [vmem:[%s353 + $0x50] sm:$0xff] %v5204
        %5221 = vst [vmem:[%s353 + $0x58] sm:$0xff] %v5205
        %5222 = vst [vmem:[%s353 + $0x60] sm:$0xff] %v5206
        %5223 = vst [vmem:[%s353 + $0x68] sm:$0xff] %v5207
        %5224 = vst [vmem:[%s353 + $0x70] sm:$0xff] %v5208
        %5225 = vst [vmem:[%s353 + $0x78] sm:$0xff] %v5209
        %s5226 = sand.u32 %s225, 1
        %s5227 = scalar_lea.sflag [#allocation6], %s5226
        %s5228 = sand.u32 %s225, 1
        %s5229 = smul.addr %s5228, 128
        %s5230 = scalar_lea.vmem [#allocation7], %s5229
        // Predicated region
        $region61: #{tpu_custom_call.1} parent=51 // pred_check
          %p5231 = pneg %p235
        $region62: #{tpu_custom_call.1} parent=51 // pred_check_branch
          %5233 = sbr.rel (%p5231) target = $region64
        $region63: #{tpu_custom_call.1} parent=51 // pred_region
          %s5234 = smul.u32 16, %s28
          %s5236 = ssub.s32 2048, 2048
          %5237 = vsyncadd %s5227, %s5236
          %s5238 = smul.addr %s27, 32
          %s5239 = sadd.s32 %s5234, %s5238
          %s5240 = smul.addr %s5239, 128
          %s5241 = scalar_lea.hbm %s8, %s5240
          %s5242 = sshll.u32 %s5230, 4
          %s5243 = int_to_ptr.vmem [resolvable:$true] %s5242
          %5248 = dma.vmem_to_hbm [thread:$0]  %s5243, 2048, %s5241, %s5227, 128, 128, 8
        $region64: #{tpu_custom_call.1} parent=51 // pred_fallthru
          _
      $region52: #{tpu_custom_call.1} parent=5 // pred_fallthru
        _
      %p5249 = scmp.le.s32.totalorder 2, %s18
      // Predicated region
      $region65: #{tpu_custom_call.1} parent=5 // pred_check
        %p5250 = pneg %p5249
      $region66: #{tpu_custom_call.1} parent=5 // pred_check_branch
        %5252 = sbr.rel (%p5250) target = $region68
      $region67: #{tpu_custom_call.1} parent=5 // pred_region
        %s5253 = ssub.s32 %s18, 2
        // Predicated region
        $region69: #{tpu_custom_call.1} parent=67 // pred_check
          %p5254 = pneg %p241
        $region70: #{tpu_custom_call.1} parent=67 // pred_check_branch
          %5256 = sbr.rel (%p5254) target = $region72
        $region71: #{tpu_custom_call.1} parent=67 // pred_region
          %s5257 = sand.u32 %s226, 1
          %s5258 = scalar_lea.sflag [#allocation6], %s5257
          %s5259 = sand.u32 %s226, 1
          %s5260 = smul.addr %s5259, 128
          %s5261 = scalar_lea.vmem [#allocation7], %s5260
          %5262 = dma.done %s5258, 2048
        $region72: #{tpu_custom_call.1} parent=67 // pred_fallthru
          _
      $region68: #{tpu_custom_call.1} parent=5 // pred_fallthru
        _
    $region6: #{tpu_custom_call.1} parent=1 // loop_footer
      %s22 = sadd.s32 1, %s18
    $region7: #{tpu_custom_call.1} parent=1 // loop_footer_branch
      %17 = sbr.rel target = $region3
    $region8: #{tpu_custom_call.1} parent=1 // loop_exit
      _
    %5263 = vsyncpa [#allocation5], 1
    %s5264 = scalar_lea.sflag [#allocation5], 1
    %5265 = vsyncpa %s5264, 1
    %5266 = vsyncpa [#allocation6], 1
    %s5267 = scalar_lea.sflag [#allocation6], 1
    %5268 = vsyncpa %s5267, 1

</llo_original>
